<compile_context>
chip_gen: v6e
topology: v6e:2x2x1
jax: 0.10.0
libtpu: 0.0.40
codegen_flags: <defaults>
</compile_context>

<pallas_src>
import jax
import jax.numpy as jnp
import numpy as np
from jax import lax
from jax.experimental import pallas as pl
from jax.experimental.pallas import tpu as pltpu

EPS = 1e-5            # nn.InstanceNorm2d default eps
_MXU_MIN_C = 16       # below this the MXU is barely utilized -> exact f32 VPU path


def _make_kernel(BB, C, H, W, use_mxu, compute_dtype):
    HW = H * W
    base = W + 1               # flat offset of pixel (0, 0) inside the padded scratch
    inv_n = 1.0 / HW

    def channel_mix(wt, tap, acc):
        """acc += wt @ tap, with wt:(C_out,C_in), tap:(C_in,HW) -> (C_out,HW) f32."""
        if use_mxu:
            d = lax.dot_general(
                wt, tap,
                dimension_numbers=(((1,), (0,)), ((), ())),
                preferred_element_type=jnp.float32)
            return d if acc is None else acc + d
        # Small C: exact f32 outer-product accumulation on the VPU.
        for ci in range(C):
            d = wt[:, ci:ci + 1] * tap[ci:ci + 1, :]      # (C,1)*(1,HW) -> (C,HW)
            acc = d if acc is None else acc + d
        return acc

    def kernel(x_ref, col_ref, w1_ref, b1_ref, w2_ref, b2_ref, o_ref, xs_ref):
        # x_ref  : (BB, C, H*W)  input block (spatial extent on the lane axis)
        # col_ref: (1, H*W) int32; col_ref[0, y*W + x] == x
        # w*_ref : (9, C, C)  conv weight, [ky*3+kx, c_out, c_in]
        # b*_ref : (C, 1) f32 conv bias
        # o_ref  : (BB, C, H*W) output block
        # xs_ref : (C, H*W + 2W + 2) scratch: reflection-padded flattened activation
        col = col_ref[...]
        first_col = col == 0
        last_col = col == (W - 1)

        def conv_in_relu(xf, w_ref, b_ref):
            # xf: (C, HW) float32 -> (C, HW) float32
            xs_ref[:, base:base + HW] = xf.astype(compute_dtype)
            # Reflected rows (row -1 <- row 1, row H <- row H-2), all channels at once.
            xs_ref[:, base - W:base] = xs_ref[:, base + W:base + 2 * W]
            xs_ref[:, base + HW:base + HW + W] = (
                xs_ref[:, base + HW - 2 * W:base + HW - W])

            acc = None
            for dy in range(3):
                off = base + (dy - 1) * W
                # Lane-offset window loads of the row-shifted padded activation.
                raw_m = xs_ref[:, off - 1:off - 1 + HW]       # x shifted by -1
                raw_c = xs_ref[:, off:off + HW]               # x shift 0
                raw_p = xs_ref[:, off + 1:off + 1 + HW]       # x shifted by +1
                taps = (
                    jnp.where(first_col, raw_p, raw_m),       # kx=0 (col -1, reflected)
                    raw_c,                                    # kx=1
                    jnp.where(last_col, raw_m, raw_p),        # kx=2 (col W, reflected)
                )
                for dx in range(3):
                    acc = channel_mix(w_ref[dy * 3 + dx], taps[dx], acc)

            acc = acc + b_ref[...]                            # (C, HW) f32
            # InstanceNorm2d (affine=False, biased variance): one-pass statistics.
            s1 = jnp.sum(acc, axis=1, keepdims=True)
            s2 = jnp.sum(acc * acc, axis=1, keepdims=True)
            mean = s1 * inv_n
            var = jnp.maximum(s2 * inv_n - mean * mean, 0.0)
            return jnp.maximum((acc - mean) * lax.rsqrt(var + EPS), 0.0)

        for b in range(BB):
            xf = x_ref[b].astype(jnp.float32)
            h = conv_in_relu(xf, w1_ref, b1_ref)
            y = conv_in_relu(h, w2_ref, b2_ref)
            o_ref[b] = (xf + y).astype(o_ref.dtype)           # lane-dense residual store

    return kernel


def _vmem_limit_bytes(BB, C, H, W, compute_dtype):
    """Generation-aware VMEM budget (v5e/v6e: 128 MiB, v7x: 64 MiB physical)."""
    HW = H * W
    cb = jnp.dtype(compute_dtype).itemsize
    blk = BB * C * HW * 4                          # one (BB,C,HW) f32 block
    scratch = C * (HW + 2 * W + 2) * cb            # padded-activation scratch
    params = 2 * 2 * (9 * C * C * cb + C * 4)      # w1,b1,w2,b2 (double-buffered)
    live = 12 * C * HW * 4                         # taps / acc / x / h in flight
    need = 4 * blk + scratch + params + live + (2 << 20)
    cap = 64 << 20                                 # conservative default (v7x)
    try:
        cap = int(getattr(pltpu.get_tpu_info(), "vmem_capacity_bytes", cap))
    except Exception:
        pass
    return int(min(max(need, 32 << 20), (cap * 9) // 10))


@jax.jit
def residual_block(x_nchw, w1_oihw, b1, w2_oihw, b2):
    """ResidualBlock.forward: x + Block2(Block1(x)); NCHW in / NCHW out."""
    B, C, H, W = x_nchw.shape
    assert H >= 2 and W >= 2, "ReflectionPad2d(1) needs H, W >= 2"
    HW = H * W

    use_mxu = C >= _MXU_MIN_C
    # bf16 MXU operands (with f32 accumulation) double MXU throughput on
    # v5e/v6e/v7x; InstanceNorm absorbs most of the loss.  Small C stays exact f32.
    compute_dtype = jnp.bfloat16 if use_mxu else jnp.float32

    # Fold batch samples into one grid step for tiny problems (amortizes per-step
    # overhead) while keeping >= 2 grid steps so both v7x TensorCores get work.
    BB = 1
    if B * C * HW * 4 <= (1 << 21):
        for cand in (8, 4, 2):
            if B % cand == 0 and B // cand >= 2:
                BB = cand
                break
    grid = (B // BB,)

    # Free contiguous reshape: the whole spatial extent goes on the lane axis.
    x_flat = x_nchw.reshape(B, C, HW)
    col = (jnp.arange(HW, dtype=jnp.int32) % W).reshape(1, HW)
    pack_w = lambda w: jnp.transpose(w, (2, 3, 0, 1)).reshape(9, C, C).astype(compute_dtype)
    pack_b = lambda bb: bb.reshape(C, 1).astype(jnp.float32)

    out_flat = pl.pallas_call(
        _make_kernel(BB, C, H, W, use_mxu, compute_dtype),
        out_shape=jax.ShapeDtypeStruct((B, C, HW), x_nchw.dtype),
        grid=grid,
        in_specs=[
            pl.BlockSpec((BB, C, HW), lambda i: (i, 0, 0)),
            pl.BlockSpec((1, HW), lambda i: (0, 0)),
            pl.BlockSpec((9, C, C), lambda i: (0, 0, 0)),
            pl.BlockSpec((C, 1), lambda i: (0, 0)),
            pl.BlockSpec((9, C, C), lambda i: (0, 0, 0)),
            pl.BlockSpec((C, 1), lambda i: (0, 0)),
        ],
        out_specs=pl.BlockSpec((BB, C, HW), lambda i: (i, 0, 0)),
        scratch_shapes=[pltpu.VMEM((C, HW + 2 * W + 2), compute_dtype)],
        compiler_params=pltpu.CompilerParams(
            dimension_semantics=("parallel",),
            vmem_limit_bytes=_vmem_limit_bytes(BB, C, H, W, compute_dtype),
        ),
    )(x_flat, col, pack_w(w1_oihw), pack_b(b1), pack_w(w2_oihw), pack_b(b2))

    return out_flat.reshape(B, C, H, W)


def _reference(x_nchw, w1, b1, w2, b2):
    """Pure-JAX reference mirroring the PyTorch module semantics."""
    def block(x, w, b):
        xp = jnp.pad(x, ((0, 0), (0, 0), (1, 1), (1, 1)), mode="reflect")
        y = lax.conv_general_dilated(
            xp, w, window_strides=(1, 1), padding="VALID",
            dimension_numbers=("NCHW", "OIHW", "NCHW"),
            precision=lax.Precision.HIGHEST,
        ) + b[None, :, None, None]
        mean = y.mean(axis=(2, 3), keepdims=True)
        var = ((y - mean) ** 2).mean(axis=(2, 3), keepdims=True)
        return jnp.maximum((y - mean) * lax.rsqrt(var + EPS), 0.0)

    return x_nchw + block(block(x_nchw, w1, b1), w2, b2)


if __name__ == "__main__":
    B, C, H, W = 2, 4, 16, 16
    key = jax.random.PRNGKey(0)
    kx, kw1, kb1, kw2, kb2 = jax.random.split(key, 5)

    x = jax.random.normal(kx, (B, C, H, W), dtype=jnp.float32)
    # Synthetic Conv2d(C, C, 3) parameters: weight (C_out, C_in, 3, 3), bias (C,)
    fan_in = C * 3 * 3
    bound = 1.0 / np.sqrt(fan_in)
    w1 = jax.random.uniform(kw1, (C, C, 3, 3), jnp.float32, -bound, bound)
    b1 = jax.random.uniform(kb1, (C,), jnp.float32, -bound, bound)
    w2 = jax.random.uniform(kw2, (C, C, 3, 3), jnp.float32, -bound, bound)
    b2 = jax.random.uniform(kb2, (C,), jnp.float32, -bound, bound)

    out = jax.block_until_ready(residual_block(x, w1, b1, w2, b2))
    ref = jax.block_until_ready(_reference(x, w1, b1, w2, b2))

    assert out.shape == (B, C, H, W) and out.dtype == jnp.float32
    np.testing.assert_allclose(np.asarray(out), np.asarray(ref), rtol=1e-4, atol=1e-4)

    print("KERNEL_OK")
</pallas_src>

<mosaic_0001>
module attributes {stable_mosaic.version = 11 : i64} {
  func.func @kernel(%arg0: i32, %arg1: memref<1x4x256xf32, #tpu.memory_space<vmem>>, %arg2: memref<1x256xi32, #tpu.memory_space<vmem>>, %arg3: memref<9x4x4xf32, #tpu.memory_space<vmem>>, %arg4: memref<4x1xf32, #tpu.memory_space<vmem>>, %arg5: memref<9x4x4xf32, #tpu.memory_space<vmem>>, %arg6: memref<4x1xf32, #tpu.memory_space<vmem>>, %arg7: memref<1x4x256xf32, #tpu.memory_space<vmem>>, %arg8: memref<4x290xf32, #tpu.memory_space<vmem>>) attributes {dimension_semantics = [#tpu.dimension_semantics<parallel>], iteration_bounds = array<i64: 2>, scalar_prefetch = 0 : i64, scratch_operands = 1 : i64, tpu.core_type = #tpu.core_type<tc>, window_params = [{transform_indices = @transform_0, window_bounds = array<i64: 1, 4, 256>}, {pipeline_mode = #tpu.pipeline_mode<synchronous>, transform_indices = @transform_1, window_bounds = array<i64: 1, 256>}, {pipeline_mode = #tpu.pipeline_mode<synchronous>, transform_indices = @transform_2, window_bounds = array<i64: 9, 4, 4>}, {pipeline_mode = #tpu.pipeline_mode<synchronous>, transform_indices = @transform_3, window_bounds = array<i64: 4, 1>}, {pipeline_mode = #tpu.pipeline_mode<synchronous>, transform_indices = @transform_4, window_bounds = array<i64: 9, 4, 4>}, {pipeline_mode = #tpu.pipeline_mode<synchronous>, transform_indices = @transform_5, window_bounds = array<i64: 4, 1>}, {transform_indices = @transform_6, window_bounds = array<i64: 1, 4, 256>}]} {
    %c0 = arith.constant 0 : index
    %c0_0 = arith.constant 0 : index
    %0 = vector.load %arg2[%c0, %c0_0] : memref<1x256xi32, #tpu.memory_space<vmem>>, vector<1x256xi32>
    %c0_i32 = arith.constant 0 : i32
    %1 = vector.broadcast %c0_i32 : i32 to vector<1x256xi32>
    %2 = arith.cmpi eq, %0, %1 : vector<1x256xi32>
    %c15_i32 = arith.constant 15 : i32
    %3 = vector.broadcast %c15_i32 : i32 to vector<1x256xi32>
    %4 = arith.cmpi eq, %0, %3 : vector<1x256xi32>
    %c0_1 = arith.constant 0 : index
    %c0_2 = arith.constant 0 : index
    %c0_3 = arith.constant 0 : index
    %5 = vector.load %arg1[%c0_1, %c0_2, %c0_3] : memref<1x4x256xf32, #tpu.memory_space<vmem>>, vector<1x4x256xf32>
    %6 = vector.shape_cast %5 : vector<1x4x256xf32> to vector<4x256xf32>
    %c0_4 = arith.constant 0 : index
    %c17 = arith.constant 17 : index
    %7 = vector.load %arg8[%c0_4, %c17] : memref<4x290xf32, #tpu.memory_space<vmem>>, vector<4x256xf32>
    tpu.vector_store %arg8[%c0_4, %c17], %6 {strides = array<i32>} : memref<4x290xf32, #tpu.memory_space<vmem>>, vector<4x256xf32>,
    %c0_5 = arith.constant 0 : index
    %c33 = arith.constant 33 : index
    %8 = vector.load %arg8[%c0_5, %c33] : memref<4x290xf32, #tpu.memory_space<vmem>>, vector<4x16xf32>
    %c0_6 = arith.constant 0 : index
    %c1 = arith.constant 1 : index
    %9 = vector.load %arg8[%c0_6, %c1] : memref<4x290xf32, #tpu.memory_space<vmem>>, vector<4x16xf32>
    tpu.vector_store %arg8[%c0_6, %c1], %8 {strides = array<i32>} : memref<4x290xf32, #tpu.memory_space<vmem>>, vector<4x16xf32>,
    %c0_7 = arith.constant 0 : index
    %c241 = arith.constant 241 : index
    %10 = vector.load %arg8[%c0_7, %c241] : memref<4x290xf32, #tpu.memory_space<vmem>>, vector<4x16xf32>
    %c0_8 = arith.constant 0 : index
    %c273 = arith.constant 273 : index
    %11 = vector.load %arg8[%c0_8, %c273] : memref<4x290xf32, #tpu.memory_space<vmem>>, vector<4x16xf32>
    tpu.vector_store %arg8[%c0_8, %c273], %10 {strides = array<i32>} : memref<4x290xf32, #tpu.memory_space<vmem>>, vector<4x16xf32>,
    %c0_9 = arith.constant 0 : index
    %c0_10 = arith.constant 0 : index
    %12 = vector.load %arg8[%c0_9, %c0_10] : memref<4x290xf32, #tpu.memory_space<vmem>>, vector<4x256xf32>
    %c0_11 = arith.constant 0 : index
    %c1_12 = arith.constant 1 : index
    %13 = vector.load %arg8[%c0_11, %c1_12] : memref<4x290xf32, #tpu.memory_space<vmem>>, vector<4x256xf32>
    %c0_13 = arith.constant 0 : index
    %c2 = arith.constant 2 : index
    %14 = vector.load %arg8[%c0_13, %c2] : memref<4x290xf32, #tpu.memory_space<vmem>>, vector<4x256xf32>
    %15 = vector.shape_cast %2 : vector<1x256xi1> to vector<1x256xi1>
    %16 = vector.broadcast %15 : vector<1x256xi1> to vector<4x256xi1>
    %17 = arith.select %16, %14, %12 : vector<4x256xi1>, vector<4x256xf32>
    %18 = vector.shape_cast %4 : vector<1x256xi1> to vector<1x256xi1>
    %19 = vector.broadcast %18 : vector<1x256xi1> to vector<4x256xi1>
    %20 = arith.select %19, %12, %14 : vector<4x256xi1>, vector<4x256xf32>
    %c0_14 = arith.constant 0 : index
    %c0_15 = arith.constant 0 : index
    %c0_16 = arith.constant 0 : index
    %21 = vector.load %arg3[%c0_14, %c0_15, %c0_16] : memref<9x4x4xf32, #tpu.memory_space<vmem>>, vector<1x4x4xf32>
    %22 = vector.shape_cast %21 : vector<1x4x4xf32> to vector<4x4xf32>
    %23 = vector.extract_strided_slice %22 {offsets = [0, 0], sizes = [4, 1], strides = [1, 1]} : vector<4x4xf32> to vector<4x1xf32>
    %24 = vector.extract_strided_slice %17 {offsets = [0, 0], sizes = [1, 256], strides = [1, 1]} : vector<4x256xf32> to vector<1x256xf32>
    %25 = vector.broadcast %23 : vector<4x1xf32> to vector<4x256xf32>
    %26 = vector.broadcast %24 : vector<1x256xf32> to vector<4x256xf32>
    %27 = arith.mulf %25, %26 : vector<4x256xf32>
    %28 = vector.extract_strided_slice %22 {offsets = [0, 1], sizes = [4, 1], strides = [1, 1]} : vector<4x4xf32> to vector<4x1xf32>
    %29 = vector.extract_strided_slice %17 {offsets = [1, 0], sizes = [1, 256], strides = [1, 1]} : vector<4x256xf32> to vector<1x256xf32>
    %30 = vector.broadcast %28 : vector<4x1xf32> to vector<4x256xf32>
    %31 = vector.broadcast %29 : vector<1x256xf32> to vector<4x256xf32>
    %32 = arith.mulf %30, %31 : vector<4x256xf32>
    %33 = arith.addf %27, %32 : vector<4x256xf32>
    %34 = vector.extract_strided_slice %22 {offsets = [0, 2], sizes = [4, 1], strides = [1, 1]} : vector<4x4xf32> to vector<4x1xf32>
    %35 = vector.extract_strided_slice %17 {offsets = [2, 0], sizes = [1, 256], strides = [1, 1]} : vector<4x256xf32> to vector<1x256xf32>
    %36 = vector.broadcast %34 : vector<4x1xf32> to vector<4x256xf32>
    %37 = vector.broadcast %35 : vector<1x256xf32> to vector<4x256xf32>
    %38 = arith.mulf %36, %37 : vector<4x256xf32>
    %39 = arith.addf %33, %38 : vector<4x256xf32>
    %40 = vector.extract_strided_slice %22 {offsets = [0, 3], sizes = [4, 1], strides = [1, 1]} : vector<4x4xf32> to vector<4x1xf32>
    %41 = vector.extract_strided_slice %17 {offsets = [3, 0], sizes = [1, 256], strides = [1, 1]} : vector<4x256xf32> to vector<1x256xf32>
    %42 = vector.broadcast %40 : vector<4x1xf32> to vector<4x256xf32>
    %43 = vector.broadcast %41 : vector<1x256xf32> to vector<4x256xf32>
    %44 = arith.mulf %42, %43 : vector<4x256xf32>
    %45 = arith.addf %39, %44 : vector<4x256xf32>
    %c1_17 = arith.constant 1 : index
    %c0_18 = arith.constant 0 : index
    %c0_19 = arith.constant 0 : index
    %46 = vector.load %arg3[%c1_17, %c0_18, %c0_19] : memref<9x4x4xf32, #tpu.memory_space<vmem>>, vector<1x4x4xf32>
    %47 = vector.shape_cast %46 : vector<1x4x4xf32> to vector<4x4xf32>
    %48 = vector.extract_strided_slice %47 {offsets = [0, 0], sizes = [4, 1], strides = [1, 1]} : vector<4x4xf32> to vector<4x1xf32>
    %49 = vector.extract_strided_slice %13 {offsets = [0, 0], sizes = [1, 256], strides = [1, 1]} : vector<4x256xf32> to vector<1x256xf32>
    %50 = vector.broadcast %48 : vector<4x1xf32> to vector<4x256xf32>
    %51 = vector.broadcast %49 : vector<1x256xf32> to vector<4x256xf32>
    %52 = arith.mulf %50, %51 : vector<4x256xf32>
    %53 = arith.addf %45, %52 : vector<4x256xf32>
    %54 = vector.extract_strided_slice %47 {offsets = [0, 1], sizes = [4, 1], strides = [1, 1]} : vector<4x4xf32> to vector<4x1xf32>
    %55 = vector.extract_strided_slice %13 {offsets = [1, 0], sizes = [1, 256], strides = [1, 1]} : vector<4x256xf32> to vector<1x256xf32>
    %56 = vector.broadcast %54 : vector<4x1xf32> to vector<4x256xf32>
    %57 = vector.broadcast %55 : vector<1x256xf32> to vector<4x256xf32>
    %58 = arith.mulf %56, %57 : vector<4x256xf32>
    %59 = arith.addf %53, %58 : vector<4x256xf32>
    %60 = vector.extract_strided_slice %47 {offsets = [0, 2], sizes = [4, 1], strides = [1, 1]} : vector<4x4xf32> to vector<4x1xf32>
    %61 = vector.extract_strided_slice %13 {offsets = [2, 0], sizes = [1, 256], strides = [1, 1]} : vector<4x256xf32> to vector<1x256xf32>
    %62 = vector.broadcast %60 : vector<4x1xf32> to vector<4x256xf32>
    %63 = vector.broadcast %61 : vector<1x256xf32> to vector<4x256xf32>
    %64 = arith.mulf %62, %63 : vector<4x256xf32>
    %65 = arith.addf %59, %64 : vector<4x256xf32>
    %66 = vector.extract_strided_slice %47 {offsets = [0, 3], sizes = [4, 1], strides = [1, 1]} : vector<4x4xf32> to vector<4x1xf32>
    %67 = vector.extract_strided_slice %13 {offsets = [3, 0], sizes = [1, 256], strides = [1, 1]} : vector<4x256xf32> to vector<1x256xf32>
    %68 = vector.broadcast %66 : vector<4x1xf32> to vector<4x256xf32>
    %69 = vector.broadcast %67 : vector<1x256xf32> to vector<4x256xf32>
    %70 = arith.mulf %68, %69 : vector<4x256xf32>
    %71 = arith.addf %65, %70 : vector<4x256xf32>
    %c2_20 = arith.constant 2 : index
    %c0_21 = arith.constant 0 : index
    %c0_22 = arith.constant 0 : index
    %72 = vector.load %arg3[%c2_20, %c0_21, %c0_22] : memref<9x4x4xf32, #tpu.memory_space<vmem>>, vector<1x4x4xf32>
    %73 = vector.shape_cast %72 : vector<1x4x4xf32> to vector<4x4xf32>
    %74 = vector.extract_strided_slice %73 {offsets = [0, 0], sizes = [4, 1], strides = [1, 1]} : vector<4x4xf32> to vector<4x1xf32>
    %75 = vector.extract_strided_slice %20 {offsets = [0, 0], sizes = [1, 256], strides = [1, 1]} : vector<4x256xf32> to vector<1x256xf32>
    %76 = vector.broadcast %74 : vector<4x1xf32> to vector<4x256xf32>
    %77 = vector.broadcast %75 : vector<1x256xf32> to vector<4x256xf32>
    %78 = arith.mulf %76, %77 : vector<4x256xf32>
    %79 = arith.addf %71, %78 : vector<4x256xf32>
    %80 = vector.extract_strided_slice %73 {offsets = [0, 1], sizes = [4, 1], strides = [1, 1]} : vector<4x4xf32> to vector<4x1xf32>
    %81 = vector.extract_strided_slice %20 {offsets = [1, 0], sizes = [1, 256], strides = [1, 1]} : vector<4x256xf32> to vector<1x256xf32>
    %82 = vector.broadcast %80 : vector<4x1xf32> to vector<4x256xf32>
    %83 = vector.broadcast %81 : vector<1x256xf32> to vector<4x256xf32>
    %84 = arith.mulf %82, %83 : vector<4x256xf32>
    %85 = arith.addf %79, %84 : vector<4x256xf32>
    %86 = vector.extract_strided_slice %73 {offsets = [0, 2], sizes = [4, 1], strides = [1, 1]} : vector<4x4xf32> to vector<4x1xf32>
    %87 = vector.extract_strided_slice %20 {offsets = [2, 0], sizes = [1, 256], strides = [1, 1]} : vector<4x256xf32> to vector<1x256xf32>
    %88 = vector.broadcast %86 : vector<4x1xf32> to vector<4x256xf32>
    %89 = vector.broadcast %87 : vector<1x256xf32> to vector<4x256xf32>
    %90 = arith.mulf %88, %89 : vector<4x256xf32>
    %91 = arith.addf %85, %90 : vector<4x256xf32>
    %92 = vector.extract_strided_slice %73 {offsets = [0, 3], sizes = [4, 1], strides = [1, 1]} : vector<4x4xf32> to vector<4x1xf32>
    %93 = vector.extract_strided_slice %20 {offsets = [3, 0], sizes = [1, 256], strides = [1, 1]} : vector<4x256xf32> to vector<1x256xf32>
    %94 = vector.broadcast %92 : vector<4x1xf32> to vector<4x256xf32>
    %95 = vector.broadcast %93 : vector<1x256xf32> to vector<4x256xf32>
    %96 = arith.mulf %94, %95 : vector<4x256xf32>
    %97 = arith.addf %91, %96 : vector<4x256xf32>
    %c0_23 = arith.constant 0 : index
    %c16 = arith.constant 16 : index
    %98 = vector.load %arg8[%c0_23, %c16] : memref<4x290xf32, #tpu.memory_space<vmem>>, vector<4x256xf32>
    %c0_24 = arith.constant 0 : index
    %c17_25 = arith.constant 17 : index
    %99 = vector.load %arg8[%c0_24, %c17_25] : memref<4x290xf32, #tpu.memory_space<vmem>>, vector<4x256xf32>
    %c0_26 = arith.constant 0 : index
    %c18 = arith.constant 18 : index
    %100 = vector.load %arg8[%c0_26, %c18] : memref<4x290xf32, #tpu.memory_space<vmem>>, vector<4x256xf32>
    %101 = vector.shape_cast %2 : vector<1x256xi1> to vector<1x256xi1>
    %102 = vector.broadcast %101 : vector<1x256xi1> to vector<4x256xi1>
    %103 = arith.select %102, %100, %98 : vector<4x256xi1>, vector<4x256xf32>
    %104 = vector.shape_cast %4 : vector<1x256xi1> to vector<1x256xi1>
    %105 = vector.broadcast %104 : vector<1x256xi1> to vector<4x256xi1>
    %106 = arith.select %105, %98, %100 : vector<4x256xi1>, vector<4x256xf32>
    %c3 = arith.constant 3 : index
    %c0_27 = arith.constant 0 : index
    %c0_28 = arith.constant 0 : index
    %107 = vector.load %arg3[%c3, %c0_27, %c0_28] : memref<9x4x4xf32, #tpu.memory_space<vmem>>, vector<1x4x4xf32>
    %108 = vector.shape_cast %107 : vector<1x4x4xf32> to vector<4x4xf32>
    %109 = vector.extract_strided_slice %108 {offsets = [0, 0], sizes = [4, 1], strides = [1, 1]} : vector<4x4xf32> to vector<4x1xf32>
    %110 = vector.extract_strided_slice %103 {offsets = [0, 0], sizes = [1, 256], strides = [1, 1]} : vector<4x256xf32> to vector<1x256xf32>
    %111 = vector.broadcast %109 : vector<4x1xf32> to vector<4x256xf32>
    %112 = vector.broadcast %110 : vector<1x256xf32> to vector<4x256xf32>
    %113 = arith.mulf %111, %112 : vector<4x256xf32>
    %114 = arith.addf %97, %113 : vector<4x256xf32>
    %115 = vector.extract_strided_slice %108 {offsets = [0, 1], sizes = [4, 1], strides = [1, 1]} : vector<4x4xf32> to vector<4x1xf32>
    %116 = vector.extract_strided_slice %103 {offsets = [1, 0], sizes = [1, 256], strides = [1, 1]} : vector<4x256xf32> to vector<1x256xf32>
    %117 = vector.broadcast %115 : vector<4x1xf32> to vector<4x256xf32>
    %118 = vector.broadcast %116 : vector<1x256xf32> to vector<4x256xf32>
    %119 = arith.mulf %117, %118 : vector<4x256xf32>
    %120 = arith.addf %114, %119 : vector<4x256xf32>
    %121 = vector.extract_strided_slice %108 {offsets = [0, 2], sizes = [4, 1], strides = [1, 1]} : vector<4x4xf32> to vector<4x1xf32>
    %122 = vector.extract_strided_slice %103 {offsets = [2, 0], sizes = [1, 256], strides = [1, 1]} : vector<4x256xf32> to vector<1x256xf32>
    %123 = vector.broadcast %121 : vector<4x1xf32> to vector<4x256xf32>
    %124 = vector.broadcast %122 : vector<1x256xf32> to vector<4x256xf32>
    %125 = arith.mulf %123, %124 : vector<4x256xf32>
    %126 = arith.addf %120, %125 : vector<4x256xf32>
    %127 = vector.extract_strided_slice %108 {offsets = [0, 3], sizes = [4, 1], strides = [1, 1]} : vector<4x4xf32> to vector<4x1xf32>
    %128 = vector.extract_strided_slice %103 {offsets = [3, 0], sizes = [1, 256], strides = [1, 1]} : vector<4x256xf32> to vector<1x256xf32>
    %129 = vector.broadcast %127 : vector<4x1xf32> to vector<4x256xf32>
    %130 = vector.broadcast %128 : vector<1x256xf32> to vector<4x256xf32>
    %131 = arith.mulf %129, %130 : vector<4x256xf32>
    %132 = arith.addf %126, %131 : vector<4x256xf32>
    %c4 = arith.constant 4 : index
    %c0_29 = arith.constant 0 : index
    %c0_30 = arith.constant 0 : index
    %133 = vector.load %arg3[%c4, %c0_29, %c0_30] : memref<9x4x4xf32, #tpu.memory_space<vmem>>, vector<1x4x4xf32>
    %134 = vector.shape_cast %133 : vector<1x4x4xf32> to vector<4x4xf32>
    %135 = vector.extract_strided_slice %134 {offsets = [0, 0], sizes = [4, 1], strides = [1, 1]} : vector<4x4xf32> to vector<4x1xf32>
    %136 = vector.extract_strided_slice %99 {offsets = [0, 0], sizes = [1, 256], strides = [1, 1]} : vector<4x256xf32> to vector<1x256xf32>
    %137 = vector.broadcast %135 : vector<4x1xf32> to vector<4x256xf32>
    %138 = vector.broadcast %136 : vector<1x256xf32> to vector<4x256xf32>
    %139 = arith.mulf %137, %138 : vector<4x256xf32>
    %140 = arith.addf %132, %139 : vector<4x256xf32>
    %141 = vector.extract_strided_slice %134 {offsets = [0, 1], sizes = [4, 1], strides = [1, 1]} : vector<4x4xf32> to vector<4x1xf32>
    %142 = vector.extract_strided_slice %99 {offsets = [1, 0], sizes = [1, 256], strides = [1, 1]} : vector<4x256xf32> to vector<1x256xf32>
    %143 = vector.broadcast %141 : vector<4x1xf32> to vector<4x256xf32>
    %144 = vector.broadcast %142 : vector<1x256xf32> to vector<4x256xf32>
    %145 = arith.mulf %143, %144 : vector<4x256xf32>
    %146 = arith.addf %140, %145 : vector<4x256xf32>
    %147 = vector.extract_strided_slice %134 {offsets = [0, 2], sizes = [4, 1], strides = [1, 1]} : vector<4x4xf32> to vector<4x1xf32>
    %148 = vector.extract_strided_slice %99 {offsets = [2, 0], sizes = [1, 256], strides = [1, 1]} : vector<4x256xf32> to vector<1x256xf32>
    %149 = vector.broadcast %147 : vector<4x1xf32> to vector<4x256xf32>
    %150 = vector.broadcast %148 : vector<1x256xf32> to vector<4x256xf32>
    %151 = arith.mulf %149, %150 : vector<4x256xf32>
    %152 = arith.addf %146, %151 : vector<4x256xf32>
    %153 = vector.extract_strided_slice %134 {offsets = [0, 3], sizes = [4, 1], strides = [1, 1]} : vector<4x4xf32> to vector<4x1xf32>
    %154 = vector.extract_strided_slice %99 {offsets = [3, 0], sizes = [1, 256], strides = [1, 1]} : vector<4x256xf32> to vector<1x256xf32>
    %155 = vector.broadcast %153 : vector<4x1xf32> to vector<4x256xf32>
    %156 = vector.broadcast %154 : vector<1x256xf32> to vector<4x256xf32>
    %157 = arith.mulf %155, %156 : vector<4x256xf32>
    %158 = arith.addf %152, %157 : vector<4x256xf32>
    %c5 = arith.constant 5 : index
    %c0_31 = arith.constant 0 : index
    %c0_32 = arith.constant 0 : index
    %159 = vector.load %arg3[%c5, %c0_31, %c0_32] : memref<9x4x4xf32, #tpu.memory_space<vmem>>, vector<1x4x4xf32>
    %160 = vector.shape_cast %159 : vector<1x4x4xf32> to vector<4x4xf32>
    %161 = vector.extract_strided_slice %160 {offsets = [0, 0], sizes = [4, 1], strides = [1, 1]} : vector<4x4xf32> to vector<4x1xf32>
    %162 = vector.extract_strided_slice %106 {offsets = [0, 0], sizes = [1, 256], strides = [1, 1]} : vector<4x256xf32> to vector<1x256xf32>
    %163 = vector.broadcast %161 : vector<4x1xf32> to vector<4x256xf32>
    %164 = vector.broadcast %162 : vector<1x256xf32> to vector<4x256xf32>
    %165 = arith.mulf %163, %164 : vector<4x256xf32>
    %166 = arith.addf %158, %165 : vector<4x256xf32>
    %167 = vector.extract_strided_slice %160 {offsets = [0, 1], sizes = [4, 1], strides = [1, 1]} : vector<4x4xf32> to vector<4x1xf32>
    %168 = vector.extract_strided_slice %106 {offsets = [1, 0], sizes = [1, 256], strides = [1, 1]} : vector<4x256xf32> to vector<1x256xf32>
    %169 = vector.broadcast %167 : vector<4x1xf32> to vector<4x256xf32>
    %170 = vector.broadcast %168 : vector<1x256xf32> to vector<4x256xf32>
    %171 = arith.mulf %169, %170 : vector<4x256xf32>
    %172 = arith.addf %166, %171 : vector<4x256xf32>
    %173 = vector.extract_strided_slice %160 {offsets = [0, 2], sizes = [4, 1], strides = [1, 1]} : vector<4x4xf32> to vector<4x1xf32>
    %174 = vector.extract_strided_slice %106 {offsets = [2, 0], sizes = [1, 256], strides = [1, 1]} : vector<4x256xf32> to vector<1x256xf32>
    %175 = vector.broadcast %173 : vector<4x1xf32> to vector<4x256xf32>
    %176 = vector.broadcast %174 : vector<1x256xf32> to vector<4x256xf32>
    %177 = arith.mulf %175, %176 : vector<4x256xf32>
    %178 = arith.addf %172, %177 : vector<4x256xf32>
    %179 = vector.extract_strided_slice %160 {offsets = [0, 3], sizes = [4, 1], strides = [1, 1]} : vector<4x4xf32> to vector<4x1xf32>
    %180 = vector.extract_strided_slice %106 {offsets = [3, 0], sizes = [1, 256], strides = [1, 1]} : vector<4x256xf32> to vector<1x256xf32>
    %181 = vector.broadcast %179 : vector<4x1xf32> to vector<4x256xf32>
    %182 = vector.broadcast %180 : vector<1x256xf32> to vector<4x256xf32>
    %183 = arith.mulf %181, %182 : vector<4x256xf32>
    %184 = arith.addf %178, %183 : vector<4x256xf32>
    %c0_33 = arith.constant 0 : index
    %c32 = arith.constant 32 : index
    %185 = vector.load %arg8[%c0_33, %c32] : memref<4x290xf32, #tpu.memory_space<vmem>>, vector<4x256xf32>
    %c0_34 = arith.constant 0 : index
    %c33_35 = arith.constant 33 : index
    %186 = vector.load %arg8[%c0_34, %c33_35] : memref<4x290xf32, #tpu.memory_space<vmem>>, vector<4x256xf32>
    %c0_36 = arith.constant 0 : index
    %c34 = arith.constant 34 : index
    %187 = vector.load %arg8[%c0_36, %c34] : memref<4x290xf32, #tpu.memory_space<vmem>>, vector<4x256xf32>
    %188 = vector.shape_cast %2 : vector<1x256xi1> to vector<1x256xi1>
    %189 = vector.broadcast %188 : vector<1x256xi1> to vector<4x256xi1>
    %190 = arith.select %189, %187, %185 : vector<4x256xi1>, vector<4x256xf32>
    %191 = vector.shape_cast %4 : vector<1x256xi1> to vector<1x256xi1>
    %192 = vector.broadcast %191 : vector<1x256xi1> to vector<4x256xi1>
    %193 = arith.select %192, %185, %187 : vector<4x256xi1>, vector<4x256xf32>
    %c6 = arith.constant 6 : index
    %c0_37 = arith.constant 0 : index
    %c0_38 = arith.constant 0 : index
    %194 = vector.load %arg3[%c6, %c0_37, %c0_38] : memref<9x4x4xf32, #tpu.memory_space<vmem>>, vector<1x4x4xf32>
    %195 = vector.shape_cast %194 : vector<1x4x4xf32> to vector<4x4xf32>
    %196 = vector.extract_strided_slice %195 {offsets = [0, 0], sizes = [4, 1], strides = [1, 1]} : vector<4x4xf32> to vector<4x1xf32>
    %197 = vector.extract_strided_slice %190 {offsets = [0, 0], sizes = [1, 256], strides = [1, 1]} : vector<4x256xf32> to vector<1x256xf32>
    %198 = vector.broadcast %196 : vector<4x1xf32> to vector<4x256xf32>
    %199 = vector.broadcast %197 : vector<1x256xf32> to vector<4x256xf32>
    %200 = arith.mulf %198, %199 : vector<4x256xf32>
    %201 = arith.addf %184, %200 : vector<4x256xf32>
    %202 = vector.extract_strided_slice %195 {offsets = [0, 1], sizes = [4, 1], strides = [1, 1]} : vector<4x4xf32> to vector<4x1xf32>
    %203 = vector.extract_strided_slice %190 {offsets = [1, 0], sizes = [1, 256], strides = [1, 1]} : vector<4x256xf32> to vector<1x256xf32>
    %204 = vector.broadcast %202 : vector<4x1xf32> to vector<4x256xf32>
    %205 = vector.broadcast %203 : vector<1x256xf32> to vector<4x256xf32>
    %206 = arith.mulf %204, %205 : vector<4x256xf32>
    %207 = arith.addf %201, %206 : vector<4x256xf32>
    %208 = vector.extract_strided_slice %195 {offsets = [0, 2], sizes = [4, 1], strides = [1, 1]} : vector<4x4xf32> to vector<4x1xf32>
    %209 = vector.extract_strided_slice %190 {offsets = [2, 0], sizes = [1, 256], strides = [1, 1]} : vector<4x256xf32> to vector<1x256xf32>
    %210 = vector.broadcast %208 : vector<4x1xf32> to vector<4x256xf32>
    %211 = vector.broadcast %209 : vector<1x256xf32> to vector<4x256xf32>
    %212 = arith.mulf %210, %211 : vector<4x256xf32>
    %213 = arith.addf %207, %212 : vector<4x256xf32>
    %214 = vector.extract_strided_slice %195 {offsets = [0, 3], sizes = [4, 1], strides = [1, 1]} : vector<4x4xf32> to vector<4x1xf32>
    %215 = vector.extract_strided_slice %190 {offsets = [3, 0], sizes = [1, 256], strides = [1, 1]} : vector<4x256xf32> to vector<1x256xf32>
    %216 = vector.broadcast %214 : vector<4x1xf32> to vector<4x256xf32>
    %217 = vector.broadcast %215 : vector<1x256xf32> to vector<4x256xf32>
    %218 = arith.mulf %216, %217 : vector<4x256xf32>
    %219 = arith.addf %213, %218 : vector<4x256xf32>
    %c7 = arith.constant 7 : index
    %c0_39 = arith.constant 0 : index
    %c0_40 = arith.constant 0 : index
    %220 = vector.load %arg3[%c7, %c0_39, %c0_40] : memref<9x4x4xf32, #tpu.memory_space<vmem>>, vector<1x4x4xf32>
    %221 = vector.shape_cast %220 : vector<1x4x4xf32> to vector<4x4xf32>
    %222 = vector.extract_strided_slice %221 {offsets = [0, 0], sizes = [4, 1], strides = [1, 1]} : vector<4x4xf32> to vector<4x1xf32>
    %223 = vector.extract_strided_slice %186 {offsets = [0, 0], sizes = [1, 256], strides = [1, 1]} : vector<4x256xf32> to vector<1x256xf32>
    %224 = vector.broadcast %222 : vector<4x1xf32> to vector<4x256xf32>
    %225 = vector.broadcast %223 : vector<1x256xf32> to vector<4x256xf32>
    %226 = arith.mulf %224, %225 : vector<4x256xf32>
    %227 = arith.addf %219, %226 : vector<4x256xf32>
    %228 = vector.extract_strided_slice %221 {offsets = [0, 1], sizes = [4, 1], strides = [1, 1]} : vector<4x4xf32> to vector<4x1xf32>
    %229 = vector.extract_strided_slice %186 {offsets = [1, 0], sizes = [1, 256], strides = [1, 1]} : vector<4x256xf32> to vector<1x256xf32>
    %230 = vector.broadcast %228 : vector<4x1xf32> to vector<4x256xf32>
    %231 = vector.broadcast %229 : vector<1x256xf32> to vector<4x256xf32>
    %232 = arith.mulf %230, %231 : vector<4x256xf32>
    %233 = arith.addf %227, %232 : vector<4x256xf32>
    %234 = vector.extract_strided_slice %221 {offsets = [0, 2], sizes = [4, 1], strides = [1, 1]} : vector<4x4xf32> to vector<4x1xf32>
    %235 = vector.extract_strided_slice %186 {offsets = [2, 0], sizes = [1, 256], strides = [1, 1]} : vector<4x256xf32> to vector<1x256xf32>
    %236 = vector.broadcast %234 : vector<4x1xf32> to vector<4x256xf32>
    %237 = vector.broadcast %235 : vector<1x256xf32> to vector<4x256xf32>
    %238 = arith.mulf %236, %237 : vector<4x256xf32>
    %239 = arith.addf %233, %238 : vector<4x256xf32>
    %240 = vector.extract_strided_slice %221 {offsets = [0, 3], sizes = [4, 1], strides = [1, 1]} : vector<4x4xf32> to vector<4x1xf32>
    %241 = vector.extract_strided_slice %186 {offsets = [3, 0], sizes = [1, 256], strides = [1, 1]} : vector<4x256xf32> to vector<1x256xf32>
    %242 = vector.broadcast %240 : vector<4x1xf32> to vector<4x256xf32>
    %243 = vector.broadcast %241 : vector<1x256xf32> to vector<4x256xf32>
    %244 = arith.mulf %242, %243 : vector<4x256xf32>
    %245 = arith.addf %239, %244 : vector<4x256xf32>
    %c8 = arith.constant 8 : index
    %c0_41 = arith.constant 0 : index
    %c0_42 = arith.constant 0 : index
    %246 = vector.load %arg3[%c8, %c0_41, %c0_42] : memref<9x4x4xf32, #tpu.memory_space<vmem>>, vector<1x4x4xf32>
    %247 = vector.shape_cast %246 : vector<1x4x4xf32> to vector<4x4xf32>
    %248 = vector.extract_strided_slice %247 {offsets = [0, 0], sizes = [4, 1], strides = [1, 1]} : vector<4x4xf32> to vector<4x1xf32>
    %249 = vector.extract_strided_slice %193 {offsets = [0, 0], sizes = [1, 256], strides = [1, 1]} : vector<4x256xf32> to vector<1x256xf32>
    %250 = vector.broadcast %248 : vector<4x1xf32> to vector<4x256xf32>
    %251 = vector.broadcast %249 : vector<1x256xf32> to vector<4x256xf32>
    %252 = arith.mulf %250, %251 : vector<4x256xf32>
    %253 = arith.addf %245, %252 : vector<4x256xf32>
    %254 = vector.extract_strided_slice %247 {offsets = [0, 1], sizes = [4, 1], strides = [1, 1]} : vector<4x4xf32> to vector<4x1xf32>
    %255 = vector.extract_strided_slice %193 {offsets = [1, 0], sizes = [1, 256], strides = [1, 1]} : vector<4x256xf32> to vector<1x256xf32>
    %256 = vector.broadcast %254 : vector<4x1xf32> to vector<4x256xf32>
    %257 = vector.broadcast %255 : vector<1x256xf32> to vector<4x256xf32>
    %258 = arith.mulf %256, %257 : vector<4x256xf32>
    %259 = arith.addf %253, %258 : vector<4x256xf32>
    %260 = vector.extract_strided_slice %247 {offsets = [0, 2], sizes = [4, 1], strides = [1, 1]} : vector<4x4xf32> to vector<4x1xf32>
    %261 = vector.extract_strided_slice %193 {offsets = [2, 0], sizes = [1, 256], strides = [1, 1]} : vector<4x256xf32> to vector<1x256xf32>
    %262 = vector.broadcast %260 : vector<4x1xf32> to vector<4x256xf32>
    %263 = vector.broadcast %261 : vector<1x256xf32> to vector<4x256xf32>
    %264 = arith.mulf %262, %263 : vector<4x256xf32>
    %265 = arith.addf %259, %264 : vector<4x256xf32>
    %266 = vector.extract_strided_slice %247 {offsets = [0, 3], sizes = [4, 1], strides = [1, 1]} : vector<4x4xf32> to vector<4x1xf32>
    %267 = vector.extract_strided_slice %193 {offsets = [3, 0], sizes = [1, 256], strides = [1, 1]} : vector<4x256xf32> to vector<1x256xf32>
    %268 = vector.broadcast %266 : vector<4x1xf32> to vector<4x256xf32>
    %269 = vector.broadcast %267 : vector<1x256xf32> to vector<4x256xf32>
    %270 = arith.mulf %268, %269 : vector<4x256xf32>
    %271 = arith.addf %265, %270 : vector<4x256xf32>
    %c0_43 = arith.constant 0 : index
    %c0_44 = arith.constant 0 : index
    %272 = vector.load %arg4[%c0_43, %c0_44] : memref<4x1xf32, #tpu.memory_space<vmem>>, vector<4x1xf32>
    %273 = vector.broadcast %272 : vector<4x1xf32> to vector<4x256xf32>
    %274 = arith.addf %271, %273 : vector<4x256xf32>
    %cst = arith.constant dense<0.000000e+00> : vector<4xf32>
    %275 = vector.multi_reduction <add>, %274, %cst [1] : vector<4x256xf32> to vector<4xf32>
    %276 = vector.shape_cast %275 : vector<4xf32> to vector<4x1xf32>
    %277 = arith.mulf %274, %274 : vector<4x256xf32>
    %cst_45 = arith.constant dense<0.000000e+00> : vector<4xf32>
    %278 = vector.multi_reduction <add>, %277, %cst_45 [1] : vector<4x256xf32> to vector<4xf32>
    %279 = vector.shape_cast %278 : vector<4xf32> to vector<4x1xf32>
    %cst_46 = arith.constant 3.906250e-03 : f32
    %280 = vector.broadcast %cst_46 : f32 to vector<4x1xf32>
    %281 = arith.mulf %276, %280 : vector<4x1xf32>
    %cst_47 = arith.constant 3.906250e-03 : f32
    %282 = vector.broadcast %cst_47 : f32 to vector<4x1xf32>
    %283 = arith.mulf %279, %282 : vector<4x1xf32>
    %284 = arith.mulf %281, %281 : vector<4x1xf32>
    %285 = arith.subf %283, %284 : vector<4x1xf32>
    %cst_48 = arith.constant 0.000000e+00 : f32
    %286 = vector.broadcast %cst_48 : f32 to vector<4x1xf32>
    %287 = arith.maximumf %285, %286 : vector<4x1xf32>
    %288 = vector.broadcast %281 : vector<4x1xf32> to vector<4x256xf32>
    %289 = arith.subf %274, %288 : vector<4x256xf32>
    %cst_49 = arith.constant 9.99999974E-6 : f32
    %290 = vector.broadcast %cst_49 : f32 to vector<4x1xf32>
    %291 = arith.addf %287, %290 : vector<4x1xf32>
    %292 = math.rsqrt %291 : vector<4x1xf32>
    %293 = vector.broadcast %292 : vector<4x1xf32> to vector<4x256xf32>
    %294 = arith.mulf %289, %293 : vector<4x256xf32>
    %cst_50 = arith.constant 0.000000e+00 : f32
    %295 = vector.broadcast %cst_50 : f32 to vector<4x256xf32>
    %296 = arith.maximumf %294, %295 : vector<4x256xf32>
    %c0_51 = arith.constant 0 : index
    %c17_52 = arith.constant 17 : index
    %297 = vector.load %arg8[%c0_51, %c17_52] : memref<4x290xf32, #tpu.memory_space<vmem>>, vector<4x256xf32>
    tpu.vector_store %arg8[%c0_51, %c17_52], %296 {strides = array<i32>} : memref<4x290xf32, #tpu.memory_space<vmem>>, vector<4x256xf32>,
    %c0_53 = arith.constant 0 : index
    %c33_54 = arith.constant 33 : index
    %298 = vector.load %arg8[%c0_53, %c33_54] : memref<4x290xf32, #tpu.memory_space<vmem>>, vector<4x16xf32>
    %c0_55 = arith.constant 0 : index
    %c1_56 = arith.constant 1 : index
    %299 = vector.load %arg8[%c0_55, %c1_56] : memref<4x290xf32, #tpu.memory_space<vmem>>, vector<4x16xf32>
    tpu.vector_store %arg8[%c0_55, %c1_56], %298 {strides = array<i32>} : memref<4x290xf32, #tpu.memory_space<vmem>>, vector<4x16xf32>,
    %c0_57 = arith.constant 0 : index
    %c241_58 = arith.constant 241 : index
    %300 = vector.load %arg8[%c0_57, %c241_58] : memref<4x290xf32, #tpu.memory_space<vmem>>, vector<4x16xf32>
    %c0_59 = arith.constant 0 : index
    %c273_60 = arith.constant 273 : index
    %301 = vector.load %arg8[%c0_59, %c273_60] : memref<4x290xf32, #tpu.memory_space<vmem>>, vector<4x16xf32>
    tpu.vector_store %arg8[%c0_59, %c273_60], %300 {strides = array<i32>} : memref<4x290xf32, #tpu.memory_space<vmem>>, vector<4x16xf32>,
    %c0_61 = arith.constant 0 : index
    %c0_62 = arith.constant 0 : index
    %302 = vector.load %arg8[%c0_61, %c0_62] : memref<4x290xf32, #tpu.memory_space<vmem>>, vector<4x256xf32>
    %c0_63 = arith.constant 0 : index
    %c1_64 = arith.constant 1 : index
    %303 = vector.load %arg8[%c0_63, %c1_64] : memref<4x290xf32, #tpu.memory_space<vmem>>, vector<4x256xf32>
    %c0_65 = arith.constant 0 : index
    %c2_66 = arith.constant 2 : index
    %304 = vector.load %arg8[%c0_65, %c2_66] : memref<4x290xf32, #tpu.memory_space<vmem>>, vector<4x256xf32>
    %305 = vector.shape_cast %2 : vector<1x256xi1> to vector<1x256xi1>
    %306 = vector.broadcast %305 : vector<1x256xi1> to vector<4x256xi1>
    %307 = arith.select %306, %304, %302 : vector<4x256xi1>, vector<4x256xf32>
    %308 = vector.shape_cast %4 : vector<1x256xi1> to vector<1x256xi1>
    %309 = vector.broadcast %308 : vector<1x256xi1> to vector<4x256xi1>
    %310 = arith.select %309, %302, %304 : vector<4x256xi1>, vector<4x256xf32>
    %c0_67 = arith.constant 0 : index
    %c0_68 = arith.constant 0 : index
    %c0_69 = arith.constant 0 : index
    %311 = vector.load %arg5[%c0_67, %c0_68, %c0_69] : memref<9x4x4xf32, #tpu.memory_space<vmem>>, vector<1x4x4xf32>
    %312 = vector.shape_cast %311 : vector<1x4x4xf32> to vector<4x4xf32>
    %313 = vector.extract_strided_slice %312 {offsets = [0, 0], sizes = [4, 1], strides = [1, 1]} : vector<4x4xf32> to vector<4x1xf32>
    %314 = vector.extract_strided_slice %307 {offsets = [0, 0], sizes = [1, 256], strides = [1, 1]} : vector<4x256xf32> to vector<1x256xf32>
    %315 = vector.broadcast %313 : vector<4x1xf32> to vector<4x256xf32>
    %316 = vector.broadcast %314 : vector<1x256xf32> to vector<4x256xf32>
    %317 = arith.mulf %315, %316 : vector<4x256xf32>
    %318 = vector.extract_strided_slice %312 {offsets = [0, 1], sizes = [4, 1], strides = [1, 1]} : vector<4x4xf32> to vector<4x1xf32>
    %319 = vector.extract_strided_slice %307 {offsets = [1, 0], sizes = [1, 256], strides = [1, 1]} : vector<4x256xf32> to vector<1x256xf32>
    %320 = vector.broadcast %318 : vector<4x1xf32> to vector<4x256xf32>
    %321 = vector.broadcast %319 : vector<1x256xf32> to vector<4x256xf32>
    %322 = arith.mulf %320, %321 : vector<4x256xf32>
    %323 = arith.addf %317, %322 : vector<4x256xf32>
    %324 = vector.extract_strided_slice %312 {offsets = [0, 2], sizes = [4, 1], strides = [1, 1]} : vector<4x4xf32> to vector<4x1xf32>
    %325 = vector.extract_strided_slice %307 {offsets = [2, 0], sizes = [1, 256], strides = [1, 1]} : vector<4x256xf32> to vector<1x256xf32>
    %326 = vector.broadcast %324 : vector<4x1xf32> to vector<4x256xf32>
    %327 = vector.broadcast %325 : vector<1x256xf32> to vector<4x256xf32>
    %328 = arith.mulf %326, %327 : vector<4x256xf32>
    %329 = arith.addf %323, %328 : vector<4x256xf32>
    %330 = vector.extract_strided_slice %312 {offsets = [0, 3], sizes = [4, 1], strides = [1, 1]} : vector<4x4xf32> to vector<4x1xf32>
    %331 = vector.extract_strided_slice %307 {offsets = [3, 0], sizes = [1, 256], strides = [1, 1]} : vector<4x256xf32> to vector<1x256xf32>
    %332 = vector.broadcast %330 : vector<4x1xf32> to vector<4x256xf32>
    %333 = vector.broadcast %331 : vector<1x256xf32> to vector<4x256xf32>
    %334 = arith.mulf %332, %333 : vector<4x256xf32>
    %335 = arith.addf %329, %334 : vector<4x256xf32>
    %c1_70 = arith.constant 1 : index
    %c0_71 = arith.constant 0 : index
    %c0_72 = arith.constant 0 : index
    %336 = vector.load %arg5[%c1_70, %c0_71, %c0_72] : memref<9x4x4xf32, #tpu.memory_space<vmem>>, vector<1x4x4xf32>
    %337 = vector.shape_cast %336 : vector<1x4x4xf32> to vector<4x4xf32>
    %338 = vector.extract_strided_slice %337 {offsets = [0, 0], sizes = [4, 1], strides = [1, 1]} : vector<4x4xf32> to vector<4x1xf32>
    %339 = vector.extract_strided_slice %303 {offsets = [0, 0], sizes = [1, 256], strides = [1, 1]} : vector<4x256xf32> to vector<1x256xf32>
    %340 = vector.broadcast %338 : vector<4x1xf32> to vector<4x256xf32>
    %341 = vector.broadcast %339 : vector<1x256xf32> to vector<4x256xf32>
    %342 = arith.mulf %340, %341 : vector<4x256xf32>
    %343 = arith.addf %335, %342 : vector<4x256xf32>
    %344 = vector.extract_strided_slice %337 {offsets = [0, 1], sizes = [4, 1], strides = [1, 1]} : vector<4x4xf32> to vector<4x1xf32>
    %345 = vector.extract_strided_slice %303 {offsets = [1, 0], sizes = [1, 256], strides = [1, 1]} : vector<4x256xf32> to vector<1x256xf32>
    %346 = vector.broadcast %344 : vector<4x1xf32> to vector<4x256xf32>
    %347 = vector.broadcast %345 : vector<1x256xf32> to vector<4x256xf32>
    %348 = arith.mulf %346, %347 : vector<4x256xf32>
    %349 = arith.addf %343, %348 : vector<4x256xf32>
    %350 = vector.extract_strided_slice %337 {offsets = [0, 2], sizes = [4, 1], strides = [1, 1]} : vector<4x4xf32> to vector<4x1xf32>
    %351 = vector.extract_strided_slice %303 {offsets = [2, 0], sizes = [1, 256], strides = [1, 1]} : vector<4x256xf32> to vector<1x256xf32>
    %352 = vector.broadcast %350 : vector<4x1xf32> to vector<4x256xf32>
    %353 = vector.broadcast %351 : vector<1x256xf32> to vector<4x256xf32>
    %354 = arith.mulf %352, %353 : vector<4x256xf32>
    %355 = arith.addf %349, %354 : vector<4x256xf32>
    %356 = vector.extract_strided_slice %337 {offsets = [0, 3], sizes = [4, 1], strides = [1, 1]} : vector<4x4xf32> to vector<4x1xf32>
    %357 = vector.extract_strided_slice %303 {offsets = [3, 0], sizes = [1, 256], strides = [1, 1]} : vector<4x256xf32> to vector<1x256xf32>
    %358 = vector.broadcast %356 : vector<4x1xf32> to vector<4x256xf32>
    %359 = vector.broadcast %357 : vector<1x256xf32> to vector<4x256xf32>
    %360 = arith.mulf %358, %359 : vector<4x256xf32>
    %361 = arith.addf %355, %360 : vector<4x256xf32>
    %c2_73 = arith.constant 2 : index
    %c0_74 = arith.constant 0 : index
    %c0_75 = arith.constant 0 : index
    %362 = vector.load %arg5[%c2_73, %c0_74, %c0_75] : memref<9x4x4xf32, #tpu.memory_space<vmem>>, vector<1x4x4xf32>
    %363 = vector.shape_cast %362 : vector<1x4x4xf32> to vector<4x4xf32>
    %364 = vector.extract_strided_slice %363 {offsets = [0, 0], sizes = [4, 1], strides = [1, 1]} : vector<4x4xf32> to vector<4x1xf32>
    %365 = vector.extract_strided_slice %310 {offsets = [0, 0], sizes = [1, 256], strides = [1, 1]} : vector<4x256xf32> to vector<1x256xf32>
    %366 = vector.broadcast %364 : vector<4x1xf32> to vector<4x256xf32>
    %367 = vector.broadcast %365 : vector<1x256xf32> to vector<4x256xf32>
    %368 = arith.mulf %366, %367 : vector<4x256xf32>
    %369 = arith.addf %361, %368 : vector<4x256xf32>
    %370 = vector.extract_strided_slice %363 {offsets = [0, 1], sizes = [4, 1], strides = [1, 1]} : vector<4x4xf32> to vector<4x1xf32>
    %371 = vector.extract_strided_slice %310 {offsets = [1, 0], sizes = [1, 256], strides = [1, 1]} : vector<4x256xf32> to vector<1x256xf32>
    %372 = vector.broadcast %370 : vector<4x1xf32> to vector<4x256xf32>
    %373 = vector.broadcast %371 : vector<1x256xf32> to vector<4x256xf32>
    %374 = arith.mulf %372, %373 : vector<4x256xf32>
    %375 = arith.addf %369, %374 : vector<4x256xf32>
    %376 = vector.extract_strided_slice %363 {offsets = [0, 2], sizes = [4, 1], strides = [1, 1]} : vector<4x4xf32> to vector<4x1xf32>
    %377 = vector.extract_strided_slice %310 {offsets = [2, 0], sizes = [1, 256], strides = [1, 1]} : vector<4x256xf32> to vector<1x256xf32>
    %378 = vector.broadcast %376 : vector<4x1xf32> to vector<4x256xf32>
    %379 = vector.broadcast %377 : vector<1x256xf32> to vector<4x256xf32>
    %380 = arith.mulf %378, %379 : vector<4x256xf32>
    %381 = arith.addf %375, %380 : vector<4x256xf32>
    %382 = vector.extract_strided_slice %363 {offsets = [0, 3], sizes = [4, 1], strides = [1, 1]} : vector<4x4xf32> to vector<4x1xf32>
    %383 = vector.extract_strided_slice %310 {offsets = [3, 0], sizes = [1, 256], strides = [1, 1]} : vector<4x256xf32> to vector<1x256xf32>
    %384 = vector.broadcast %382 : vector<4x1xf32> to vector<4x256xf32>
    %385 = vector.broadcast %383 : vector<1x256xf32> to vector<4x256xf32>
    %386 = arith.mulf %384, %385 : vector<4x256xf32>
    %387 = arith.addf %381, %386 : vector<4x256xf32>
    %c0_76 = arith.constant 0 : index
    %c16_77 = arith.constant 16 : index
    %388 = vector.load %arg8[%c0_76, %c16_77] : memref<4x290xf32, #tpu.memory_space<vmem>>, vector<4x256xf32>
    %c0_78 = arith.constant 0 : index
    %c17_79 = arith.constant 17 : index
    %389 = vector.load %arg8[%c0_78, %c17_79] : memref<4x290xf32, #tpu.memory_space<vmem>>, vector<4x256xf32>
    %c0_80 = arith.constant 0 : index
    %c18_81 = arith.constant 18 : index
    %390 = vector.load %arg8[%c0_80, %c18_81] : memref<4x290xf32, #tpu.memory_space<vmem>>, vector<4x256xf32>
    %391 = vector.shape_cast %2 : vector<1x256xi1> to vector<1x256xi1>
    %392 = vector.broadcast %391 : vector<1x256xi1> to vector<4x256xi1>
    %393 = arith.select %392, %390, %388 : vector<4x256xi1>, vector<4x256xf32>
    %394 = vector.shape_cast %4 : vector<1x256xi1> to vector<1x256xi1>
    %395 = vector.broadcast %394 : vector<1x256xi1> to vector<4x256xi1>
    %396 = arith.select %395, %388, %390 : vector<4x256xi1>, vector<4x256xf32>
    %c3_82 = arith.constant 3 : index
    %c0_83 = arith.constant 0 : index
    %c0_84 = arith.constant 0 : index
    %397 = vector.load %arg5[%c3_82, %c0_83, %c0_84] : memref<9x4x4xf32, #tpu.memory_space<vmem>>, vector<1x4x4xf32>
    %398 = vector.shape_cast %397 : vector<1x4x4xf32> to vector<4x4xf32>
    %399 = vector.extract_strided_slice %398 {offsets = [0, 0], sizes = [4, 1], strides = [1, 1]} : vector<4x4xf32> to vector<4x1xf32>
    %400 = vector.extract_strided_slice %393 {offsets = [0, 0], sizes = [1, 256], strides = [1, 1]} : vector<4x256xf32> to vector<1x256xf32>
    %401 = vector.broadcast %399 : vector<4x1xf32> to vector<4x256xf32>
    %402 = vector.broadcast %400 : vector<1x256xf32> to vector<4x256xf32>
    %403 = arith.mulf %401, %402 : vector<4x256xf32>
    %404 = arith.addf %387, %403 : vector<4x256xf32>
    %405 = vector.extract_strided_slice %398 {offsets = [0, 1], sizes = [4, 1], strides = [1, 1]} : vector<4x4xf32> to vector<4x1xf32>
    %406 = vector.extract_strided_slice %393 {offsets = [1, 0], sizes = [1, 256], strides = [1, 1]} : vector<4x256xf32> to vector<1x256xf32>
    %407 = vector.broadcast %405 : vector<4x1xf32> to vector<4x256xf32>
    %408 = vector.broadcast %406 : vector<1x256xf32> to vector<4x256xf32>
    %409 = arith.mulf %407, %408 : vector<4x256xf32>
    %410 = arith.addf %404, %409 : vector<4x256xf32>
    %411 = vector.extract_strided_slice %398 {offsets = [0, 2], sizes = [4, 1], strides = [1, 1]} : vector<4x4xf32> to vector<4x1xf32>
    %412 = vector.extract_strided_slice %393 {offsets = [2, 0], sizes = [1, 256], strides = [1, 1]} : vector<4x256xf32> to vector<1x256xf32>
    %413 = vector.broadcast %411 : vector<4x1xf32> to vector<4x256xf32>
    %414 = vector.broadcast %412 : vector<1x256xf32> to vector<4x256xf32>
    %415 = arith.mulf %413, %414 : vector<4x256xf32>
    %416 = arith.addf %410, %415 : vector<4x256xf32>
    %417 = vector.extract_strided_slice %398 {offsets = [0, 3], sizes = [4, 1], strides = [1, 1]} : vector<4x4xf32> to vector<4x1xf32>
    %418 = vector.extract_strided_slice %393 {offsets = [3, 0], sizes = [1, 256], strides = [1, 1]} : vector<4x256xf32> to vector<1x256xf32>
    %419 = vector.broadcast %417 : vector<4x1xf32> to vector<4x256xf32>
    %420 = vector.broadcast %418 : vector<1x256xf32> to vector<4x256xf32>
    %421 = arith.mulf %419, %420 : vector<4x256xf32>
    %422 = arith.addf %416, %421 : vector<4x256xf32>
    %c4_85 = arith.constant 4 : index
    %c0_86 = arith.constant 0 : index
    %c0_87 = arith.constant 0 : index
    %423 = vector.load %arg5[%c4_85, %c0_86, %c0_87] : memref<9x4x4xf32, #tpu.memory_space<vmem>>, vector<1x4x4xf32>
    %424 = vector.shape_cast %423 : vector<1x4x4xf32> to vector<4x4xf32>
    %425 = vector.extract_strided_slice %424 {offsets = [0, 0], sizes = [4, 1], strides = [1, 1]} : vector<4x4xf32> to vector<4x1xf32>
    %426 = vector.extract_strided_slice %389 {offsets = [0, 0], sizes = [1, 256], strides = [1, 1]} : vector<4x256xf32> to vector<1x256xf32>
    %427 = vector.broadcast %425 : vector<4x1xf32> to vector<4x256xf32>
    %428 = vector.broadcast %426 : vector<1x256xf32> to vector<4x256xf32>
    %429 = arith.mulf %427, %428 : vector<4x256xf32>
    %430 = arith.addf %422, %429 : vector<4x256xf32>
    %431 = vector.extract_strided_slice %424 {offsets = [0, 1], sizes = [4, 1], strides = [1, 1]} : vector<4x4xf32> to vector<4x1xf32>
    %432 = vector.extract_strided_slice %389 {offsets = [1, 0], sizes = [1, 256], strides = [1, 1]} : vector<4x256xf32> to vector<1x256xf32>
    %433 = vector.broadcast %431 : vector<4x1xf32> to vector<4x256xf32>
    %434 = vector.broadcast %432 : vector<1x256xf32> to vector<4x256xf32>
    %435 = arith.mulf %433, %434 : vector<4x256xf32>
    %436 = arith.addf %430, %435 : vector<4x256xf32>
    %437 = vector.extract_strided_slice %424 {offsets = [0, 2], sizes = [4, 1], strides = [1, 1]} : vector<4x4xf32> to vector<4x1xf32>
    %438 = vector.extract_strided_slice %389 {offsets = [2, 0], sizes = [1, 256], strides = [1, 1]} : vector<4x256xf32> to vector<1x256xf32>
    %439 = vector.broadcast %437 : vector<4x1xf32> to vector<4x256xf32>
    %440 = vector.broadcast %438 : vector<1x256xf32> to vector<4x256xf32>
    %441 = arith.mulf %439, %440 : vector<4x256xf32>
    %442 = arith.addf %436, %441 : vector<4x256xf32>
    %443 = vector.extract_strided_slice %424 {offsets = [0, 3], sizes = [4, 1], strides = [1, 1]} : vector<4x4xf32> to vector<4x1xf32>
    %444 = vector.extract_strided_slice %389 {offsets = [3, 0], sizes = [1, 256], strides = [1, 1]} : vector<4x256xf32> to vector<1x256xf32>
    %445 = vector.broadcast %443 : vector<4x1xf32> to vector<4x256xf32>
    %446 = vector.broadcast %444 : vector<1x256xf32> to vector<4x256xf32>
    %447 = arith.mulf %445, %446 : vector<4x256xf32>
    %448 = arith.addf %442, %447 : vector<4x256xf32>
    %c5_88 = arith.constant 5 : index
    %c0_89 = arith.constant 0 : index
    %c0_90 = arith.constant 0 : index
    %449 = vector.load %arg5[%c5_88, %c0_89, %c0_90] : memref<9x4x4xf32, #tpu.memory_space<vmem>>, vector<1x4x4xf32>
    %450 = vector.shape_cast %449 : vector<1x4x4xf32> to vector<4x4xf32>
    %451 = vector.extract_strided_slice %450 {offsets = [0, 0], sizes = [4, 1], strides = [1, 1]} : vector<4x4xf32> to vector<4x1xf32>
    %452 = vector.extract_strided_slice %396 {offsets = [0, 0], sizes = [1, 256], strides = [1, 1]} : vector<4x256xf32> to vector<1x256xf32>
    %453 = vector.broadcast %451 : vector<4x1xf32> to vector<4x256xf32>
    %454 = vector.broadcast %452 : vector<1x256xf32> to vector<4x256xf32>
    %455 = arith.mulf %453, %454 : vector<4x256xf32>
    %456 = arith.addf %448, %455 : vector<4x256xf32>
    %457 = vector.extract_strided_slice %450 {offsets = [0, 1], sizes = [4, 1], strides = [1, 1]} : vector<4x4xf32> to vector<4x1xf32>
    %458 = vector.extract_strided_slice %396 {offsets = [1, 0], sizes = [1, 256], strides = [1, 1]} : vector<4x256xf32> to vector<1x256xf32>
    %459 = vector.broadcast %457 : vector<4x1xf32> to vector<4x256xf32>
    %460 = vector.broadcast %458 : vector<1x256xf32> to vector<4x256xf32>
    %461 = arith.mulf %459, %460 : vector<4x256xf32>
    %462 = arith.addf %456, %461 : vector<4x256xf32>
    %463 = vector.extract_strided_slice %450 {offsets = [0, 2], sizes = [4, 1], strides = [1, 1]} : vector<4x4xf32> to vector<4x1xf32>
    %464 = vector.extract_strided_slice %396 {offsets = [2, 0], sizes = [1, 256], strides = [1, 1]} : vector<4x256xf32> to vector<1x256xf32>
    %465 = vector.broadcast %463 : vector<4x1xf32> to vector<4x256xf32>
    %466 = vector.broadcast %464 : vector<1x256xf32> to vector<4x256xf32>
    %467 = arith.mulf %465, %466 : vector<4x256xf32>
    %468 = arith.addf %462, %467 : vector<4x256xf32>
    %469 = vector.extract_strided_slice %450 {offsets = [0, 3], sizes = [4, 1], strides = [1, 1]} : vector<4x4xf32> to vector<4x1xf32>
    %470 = vector.extract_strided_slice %396 {offsets = [3, 0], sizes = [1, 256], strides = [1, 1]} : vector<4x256xf32> to vector<1x256xf32>
    %471 = vector.broadcast %469 : vector<4x1xf32> to vector<4x256xf32>
    %472 = vector.broadcast %470 : vector<1x256xf32> to vector<4x256xf32>
    %473 = arith.mulf %471, %472 : vector<4x256xf32>
    %474 = arith.addf %468, %473 : vector<4x256xf32>
    %c0_91 = arith.constant 0 : index
    %c32_92 = arith.constant 32 : index
    %475 = vector.load %arg8[%c0_91, %c32_92] : memref<4x290xf32, #tpu.memory_space<vmem>>, vector<4x256xf32>
    %c0_93 = arith.constant 0 : index
    %c33_94 = arith.constant 33 : index
    %476 = vector.load %arg8[%c0_93, %c33_94] : memref<4x290xf32, #tpu.memory_space<vmem>>, vector<4x256xf32>
    %c0_95 = arith.constant 0 : index
    %c34_96 = arith.constant 34 : index
    %477 = vector.load %arg8[%c0_95, %c34_96] : memref<4x290xf32, #tpu.memory_space<vmem>>, vector<4x256xf32>
    %478 = vector.shape_cast %2 : vector<1x256xi1> to vector<1x256xi1>
    %479 = vector.broadcast %478 : vector<1x256xi1> to vector<4x256xi1>
    %480 = arith.select %479, %477, %475 : vector<4x256xi1>, vector<4x256xf32>
    %481 = vector.shape_cast %4 : vector<1x256xi1> to vector<1x256xi1>
    %482 = vector.broadcast %481 : vector<1x256xi1> to vector<4x256xi1>
    %483 = arith.select %482, %475, %477 : vector<4x256xi1>, vector<4x256xf32>
    %c6_97 = arith.constant 6 : index
    %c0_98 = arith.constant 0 : index
    %c0_99 = arith.constant 0 : index
    %484 = vector.load %arg5[%c6_97, %c0_98, %c0_99] : memref<9x4x4xf32, #tpu.memory_space<vmem>>, vector<1x4x4xf32>
    %485 = vector.shape_cast %484 : vector<1x4x4xf32> to vector<4x4xf32>
    %486 = vector.extract_strided_slice %485 {offsets = [0, 0], sizes = [4, 1], strides = [1, 1]} : vector<4x4xf32> to vector<4x1xf32>
    %487 = vector.extract_strided_slice %480 {offsets = [0, 0], sizes = [1, 256], strides = [1, 1]} : vector<4x256xf32> to vector<1x256xf32>
    %488 = vector.broadcast %486 : vector<4x1xf32> to vector<4x256xf32>
    %489 = vector.broadcast %487 : vector<1x256xf32> to vector<4x256xf32>
    %490 = arith.mulf %488, %489 : vector<4x256xf32>
    %491 = arith.addf %474, %490 : vector<4x256xf32>
    %492 = vector.extract_strided_slice %485 {offsets = [0, 1], sizes = [4, 1], strides = [1, 1]} : vector<4x4xf32> to vector<4x1xf32>
    %493 = vector.extract_strided_slice %480 {offsets = [1, 0], sizes = [1, 256], strides = [1, 1]} : vector<4x256xf32> to vector<1x256xf32>
    %494 = vector.broadcast %492 : vector<4x1xf32> to vector<4x256xf32>
    %495 = vector.broadcast %493 : vector<1x256xf32> to vector<4x256xf32>
    %496 = arith.mulf %494, %495 : vector<4x256xf32>
    %497 = arith.addf %491, %496 : vector<4x256xf32>
    %498 = vector.extract_strided_slice %485 {offsets = [0, 2], sizes = [4, 1], strides = [1, 1]} : vector<4x4xf32> to vector<4x1xf32>
    %499 = vector.extract_strided_slice %480 {offsets = [2, 0], sizes = [1, 256], strides = [1, 1]} : vector<4x256xf32> to vector<1x256xf32>
    %500 = vector.broadcast %498 : vector<4x1xf32> to vector<4x256xf32>
    %501 = vector.broadcast %499 : vector<1x256xf32> to vector<4x256xf32>
    %502 = arith.mulf %500, %501 : vector<4x256xf32>
    %503 = arith.addf %497, %502 : vector<4x256xf32>
    %504 = vector.extract_strided_slice %485 {offsets = [0, 3], sizes = [4, 1], strides = [1, 1]} : vector<4x4xf32> to vector<4x1xf32>
    %505 = vector.extract_strided_slice %480 {offsets = [3, 0], sizes = [1, 256], strides = [1, 1]} : vector<4x256xf32> to vector<1x256xf32>
    %506 = vector.broadcast %504 : vector<4x1xf32> to vector<4x256xf32>
    %507 = vector.broadcast %505 : vector<1x256xf32> to vector<4x256xf32>
    %508 = arith.mulf %506, %507 : vector<4x256xf32>
    %509 = arith.addf %503, %508 : vector<4x256xf32>
    %c7_100 = arith.constant 7 : index
    %c0_101 = arith.constant 0 : index
    %c0_102 = arith.constant 0 : index
    %510 = vector.load %arg5[%c7_100, %c0_101, %c0_102] : memref<9x4x4xf32, #tpu.memory_space<vmem>>, vector<1x4x4xf32>
    %511 = vector.shape_cast %510 : vector<1x4x4xf32> to vector<4x4xf32>
    %512 = vector.extract_strided_slice %511 {offsets = [0, 0], sizes = [4, 1], strides = [1, 1]} : vector<4x4xf32> to vector<4x1xf32>
    %513 = vector.extract_strided_slice %476 {offsets = [0, 0], sizes = [1, 256], strides = [1, 1]} : vector<4x256xf32> to vector<1x256xf32>
    %514 = vector.broadcast %512 : vector<4x1xf32> to vector<4x256xf32>
    %515 = vector.broadcast %513 : vector<1x256xf32> to vector<4x256xf32>
    %516 = arith.mulf %514, %515 : vector<4x256xf32>
    %517 = arith.addf %509, %516 : vector<4x256xf32>
    %518 = vector.extract_strided_slice %511 {offsets = [0, 1], sizes = [4, 1], strides = [1, 1]} : vector<4x4xf32> to vector<4x1xf32>
    %519 = vector.extract_strided_slice %476 {offsets = [1, 0], sizes = [1, 256], strides = [1, 1]} : vector<4x256xf32> to vector<1x256xf32>
    %520 = vector.broadcast %518 : vector<4x1xf32> to vector<4x256xf32>
    %521 = vector.broadcast %519 : vector<1x256xf32> to vector<4x256xf32>
    %522 = arith.mulf %520, %521 : vector<4x256xf32>
    %523 = arith.addf %517, %522 : vector<4x256xf32>
    %524 = vector.extract_strided_slice %511 {offsets = [0, 2], sizes = [4, 1], strides = [1, 1]} : vector<4x4xf32> to vector<4x1xf32>
    %525 = vector.extract_strided_slice %476 {offsets = [2, 0], sizes = [1, 256], strides = [1, 1]} : vector<4x256xf32> to vector<1x256xf32>
    %526 = vector.broadcast %524 : vector<4x1xf32> to vector<4x256xf32>
    %527 = vector.broadcast %525 : vector<1x256xf32> to vector<4x256xf32>
    %528 = arith.mulf %526, %527 : vector<4x256xf32>
    %529 = arith.addf %523, %528 : vector<4x256xf32>
    %530 = vector.extract_strided_slice %511 {offsets = [0, 3], sizes = [4, 1], strides = [1, 1]} : vector<4x4xf32> to vector<4x1xf32>
    %531 = vector.extract_strided_slice %476 {offsets = [3, 0], sizes = [1, 256], strides = [1, 1]} : vector<4x256xf32> to vector<1x256xf32>
    %532 = vector.broadcast %530 : vector<4x1xf32> to vector<4x256xf32>
    %533 = vector.broadcast %531 : vector<1x256xf32> to vector<4x256xf32>
    %534 = arith.mulf %532, %533 : vector<4x256xf32>
    %535 = arith.addf %529, %534 : vector<4x256xf32>
    %c8_103 = arith.constant 8 : index
    %c0_104 = arith.constant 0 : index
    %c0_105 = arith.constant 0 : index
    %536 = vector.load %arg5[%c8_103, %c0_104, %c0_105] : memref<9x4x4xf32, #tpu.memory_space<vmem>>, vector<1x4x4xf32>
    %537 = vector.shape_cast %536 : vector<1x4x4xf32> to vector<4x4xf32>
    %538 = vector.extract_strided_slice %537 {offsets = [0, 0], sizes = [4, 1], strides = [1, 1]} : vector<4x4xf32> to vector<4x1xf32>
    %539 = vector.extract_strided_slice %483 {offsets = [0, 0], sizes = [1, 256], strides = [1, 1]} : vector<4x256xf32> to vector<1x256xf32>
    %540 = vector.broadcast %538 : vector<4x1xf32> to vector<4x256xf32>
    %541 = vector.broadcast %539 : vector<1x256xf32> to vector<4x256xf32>
    %542 = arith.mulf %540, %541 : vector<4x256xf32>
    %543 = arith.addf %535, %542 : vector<4x256xf32>
    %544 = vector.extract_strided_slice %537 {offsets = [0, 1], sizes = [4, 1], strides = [1, 1]} : vector<4x4xf32> to vector<4x1xf32>
    %545 = vector.extract_strided_slice %483 {offsets = [1, 0], sizes = [1, 256], strides = [1, 1]} : vector<4x256xf32> to vector<1x256xf32>
    %546 = vector.broadcast %544 : vector<4x1xf32> to vector<4x256xf32>
    %547 = vector.broadcast %545 : vector<1x256xf32> to vector<4x256xf32>
    %548 = arith.mulf %546, %547 : vector<4x256xf32>
    %549 = arith.addf %543, %548 : vector<4x256xf32>
    %550 = vector.extract_strided_slice %537 {offsets = [0, 2], sizes = [4, 1], strides = [1, 1]} : vector<4x4xf32> to vector<4x1xf32>
    %551 = vector.extract_strided_slice %483 {offsets = [2, 0], sizes = [1, 256], strides = [1, 1]} : vector<4x256xf32> to vector<1x256xf32>
    %552 = vector.broadcast %550 : vector<4x1xf32> to vector<4x256xf32>
    %553 = vector.broadcast %551 : vector<1x256xf32> to vector<4x256xf32>
    %554 = arith.mulf %552, %553 : vector<4x256xf32>
    %555 = arith.addf %549, %554 : vector<4x256xf32>
    %556 = vector.extract_strided_slice %537 {offsets = [0, 3], sizes = [4, 1], strides = [1, 1]} : vector<4x4xf32> to vector<4x1xf32>
    %557 = vector.extract_strided_slice %483 {offsets = [3, 0], sizes = [1, 256], strides = [1, 1]} : vector<4x256xf32> to vector<1x256xf32>
    %558 = vector.broadcast %556 : vector<4x1xf32> to vector<4x256xf32>
    %559 = vector.broadcast %557 : vector<1x256xf32> to vector<4x256xf32>
    %560 = arith.mulf %558, %559 : vector<4x256xf32>
    %561 = arith.addf %555, %560 : vector<4x256xf32>
    %c0_106 = arith.constant 0 : index
    %c0_107 = arith.constant 0 : index
    %562 = vector.load %arg6[%c0_106, %c0_107] : memref<4x1xf32, #tpu.memory_space<vmem>>, vector<4x1xf32>
    %563 = vector.broadcast %562 : vector<4x1xf32> to vector<4x256xf32>
    %564 = arith.addf %561, %563 : vector<4x256xf32>
    %cst_108 = arith.constant dense<0.000000e+00> : vector<4xf32>
    %565 = vector.multi_reduction <add>, %564, %cst_108 [1] : vector<4x256xf32> to vector<4xf32>
    %566 = vector.shape_cast %565 : vector<4xf32> to vector<4x1xf32>
    %567 = arith.mulf %564, %564 : vector<4x256xf32>
    %cst_109 = arith.constant dense<0.000000e+00> : vector<4xf32>
    %568 = vector.multi_reduction <add>, %567, %cst_109 [1] : vector<4x256xf32> to vector<4xf32>
    %569 = vector.shape_cast %568 : vector<4xf32> to vector<4x1xf32>
    %cst_110 = arith.constant 3.906250e-03 : f32
    %570 = vector.broadcast %cst_110 : f32 to vector<4x1xf32>
    %571 = arith.mulf %566, %570 : vector<4x1xf32>
    %cst_111 = arith.constant 3.906250e-03 : f32
    %572 = vector.broadcast %cst_111 : f32 to vector<4x1xf32>
    %573 = arith.mulf %569, %572 : vector<4x1xf32>
    %574 = arith.mulf %571, %571 : vector<4x1xf32>
    %575 = arith.subf %573, %574 : vector<4x1xf32>
    %cst_112 = arith.constant 0.000000e+00 : f32
    %576 = vector.broadcast %cst_112 : f32 to vector<4x1xf32>
    %577 = arith.maximumf %575, %576 : vector<4x1xf32>
    %578 = vector.broadcast %571 : vector<4x1xf32> to vector<4x256xf32>
    %579 = arith.subf %564, %578 : vector<4x256xf32>
    %cst_113 = arith.constant 9.99999974E-6 : f32
    %580 = vector.broadcast %cst_113 : f32 to vector<4x1xf32>
    %581 = arith.addf %577, %580 : vector<4x1xf32>
    %582 = math.rsqrt %581 : vector<4x1xf32>
    %583 = vector.broadcast %582 : vector<4x1xf32> to vector<4x256xf32>
    %584 = arith.mulf %579, %583 : vector<4x256xf32>
    %cst_114 = arith.constant 0.000000e+00 : f32
    %585 = vector.broadcast %cst_114 : f32 to vector<4x256xf32>
    %586 = arith.maximumf %584, %585 : vector<4x256xf32>
    %587 = arith.addf %6, %586 : vector<4x256xf32>
    %c0_115 = arith.constant 0 : index
    %c0_116 = arith.constant 0 : index
    %c0_117 = arith.constant 0 : index
    %588 = vector.load %arg7[%c0_115, %c0_116, %c0_117] : memref<1x4x256xf32, #tpu.memory_space<vmem>>, vector<1x4x256xf32>
    %589 = vector.shape_cast %588 : vector<1x4x256xf32> to vector<4x256xf32>
    %590 = vector.shape_cast %587 : vector<4x256xf32> to vector<1x4x256xf32>
    tpu.vector_store %arg7[%c0_115, %c0_116, %c0_117], %590 {strides = array<i32>} : memref<1x4x256xf32, #tpu.memory_space<vmem>>, vector<1x4x256xf32>,
    return
  }
  func.func @transform_0(%arg0: i32) -> (i32, i32, i32) {
    %c0_i32 = arith.constant 0 : i32
    %c0_i32_0 = arith.constant 0 : i32
    %c0_i32_1 = arith.constant 0 : i32
    return %arg0, %c0_i32, %c0_i32_0 : i32, i32, i32
  }
  func.func @transform_1(%arg0: i32) -> (i32, i32) {
    %c0_i32 = arith.constant 0 : i32
    %c0_i32_0 = arith.constant 0 : i32
    %c0_i32_1 = arith.constant 0 : i32
    return %c0_i32, %c0_i32_0 : i32, i32
  }
  func.func @transform_2(%arg0: i32) -> (i32, i32, i32) {
    %c0_i32 = arith.constant 0 : i32
    %c0_i32_0 = arith.constant 0 : i32
    %c0_i32_1 = arith.constant 0 : i32
    %c0_i32_2 = arith.constant 0 : i32
    return %c0_i32, %c0_i32_0, %c0_i32_1 : i32, i32, i32
  }
  func.func @transform_3(%arg0: i32) -> (i32, i32) {
    %c0_i32 = arith.constant 0 : i32
    %c0_i32_0 = arith.constant 0 : i32
    %c0_i32_1 = arith.constant 0 : i32
    return %c0_i32, %c0_i32_0 : i32, i32
  }
  func.func @transform_4(%arg0: i32) -> (i32, i32, i32) {
    %c0_i32 = arith.constant 0 : i32
    %c0_i32_0 = arith.constant 0 : i32
    %c0_i32_1 = arith.constant 0 : i32
    %c0_i32_2 = arith.constant 0 : i32
    return %c0_i32, %c0_i32_0, %c0_i32_1 : i32, i32, i32
  }
  func.func @transform_5(%arg0: i32) -> (i32, i32) {
    %c0_i32 = arith.constant 0 : i32
    %c0_i32_0 = arith.constant 0 : i32
    %c0_i32_1 = arith.constant 0 : i32
    return %c0_i32, %c0_i32_0 : i32, i32
  }
  func.func @transform_6(%arg0: i32) -> (i32, i32, i32) {
    %c0_i32 = arith.constant 0 : i32
    %c0_i32_0 = arith.constant 0 : i32
    %c0_i32_1 = arith.constant 0 : i32
    return %arg0, %c0_i32, %c0_i32_0 : i32, i32, i32
  }
}

</mosaic_0001>

<llo_original>
// kernel: residual_block.1
$region0: #{residual_block.1}
  #allocation0 [shape = 'u32[]', space=smem, size = 0x4, offset = 0x4, fixed_abs, tag = 'smem constant byte address 0x4 - core index']
  #allocation1 [shape = 'u32[144,128]{1,0:T(1,128)}', space=vmem, size = 0x12000, scoped, tag = 'internal scratch']
  #allocation2 [shape = 'f32[4,290]{1,0:T(4,128)}', space=vmem, size = 0x1800, scoped, tag = 'scratch operand']
  %s0 = inlined_call_operand.vmem [shape: f32[2,4,256], index: 0, kind: input, shape index: {}]
  %s1 = inlined_call_operand.vmem [shape: s32[1,256], index: 1, kind: input, shape index: {}]
  %s2 = inlined_call_operand.vmem [shape: f32[9,4,4], index: 2, kind: input, shape index: {}]
  %s3 = inlined_call_operand.vmem [shape: f32[4,1], index: 3, kind: input, shape index: {}]
  %s4 = inlined_call_operand.vmem [shape: f32[9,4,4], index: 4, kind: input, shape index: {}]
  %s5 = inlined_call_operand.vmem [shape: f32[4,1], index: 5, kind: input, shape index: {}]
  %s6 = inlined_call_operand.vmem [shape: f32[2,4,256], index: 6, kind: output, shape index: {}]
  %s7 = sld [smem:[#allocation0]]
  $region57: #{residual_block.1} parent=0
    _
  %s9 = ssub.s32 1, %s7
  %s10 = scalar_select 0, %s9, %s7
  loop: start=0, step=1, limit=4
  $region2: #{residual_block.1} parent=0 // loop_pre_header
    _
  $region3: #{residual_block.1} parent=0 // loop_header
    %s12 = sphi 0, %s16
    %p13 = scmp.ge.s32.totalorder %s12, 4
    %s22 = sphi 0, %s24
    %s25 = sphi 0, %s22
    %s26 = sphi 0, %s25
    %s42 = sphi 0, %s26
    %s46 = sphi 0, %s46
    %s48 = sphi 0, %s46
    %s49 = sphi 0, %s48
    %s63 = sphi 0, %s49
    %s67 = sphi 0, %s67
    %s69 = sphi 0, %s67
    %s70 = sphi 0, %s69
    %s84 = sphi 0, %s70
    %s88 = sphi 0, %s88
    %s90 = sphi 0, %s88
    %s91 = sphi 0, %s90
    %s105 = sphi 0, %s91
    %s109 = sphi 0, %s109
    %s111 = sphi 0, %s109
    %s112 = sphi 0, %s111
    %s126 = sphi 0, %s112
    %s130 = sphi 0, %s130
    %s132 = sphi 0, %s130
    %s133 = sphi 0, %s132
    %s147 = sphi 0, %s133
    %s153 = sphi 0, %s155
    %s156 = sphi 0, %s153
    %s157 = sphi 0, %s156
    %s173 = sphi 0, %s157
  $region4: #{residual_block.1} parent=0 // loop_header_branch
    %15 = sbr.rel (%p13) target = $region8
  $region5: #{residual_block.1} parent=0 // loop_body
    %s17 = ssub.s32 %s12, 1
    %s18 = ssub.s32 %s12, 2
    %s19 = sadd.s32 %s12, 1
    %s20 = ssub.s32 %s12, %s19
    %p21 = scmp.eq.s32.totalorder %s20, 0
    %s23 = sadd.s32 %s22, 1
    %s24 = scalar_select %p21, %s22, %s23
    %p27 = pneg %p21
    %p28 = scmp.eq.s32.totalorder %s12, 1
    %p29 = por %p27, %p28
    %p30 = scmp.ne.s32.totalorder %s22, %s25
    %p31 = scmp.eq.s32.totalorder %s12, 0
    %p32 = por %p30, %p31
    %p33 = scmp.ne.s32.totalorder %s22, %s25
    %p34 = scmp.eq.s32.totalorder %s17, 1
    %p35 = por %p33, %p34
    %p36 = scmp.ne.s32.totalorder %s25, %s26
    %p37 = scmp.eq.s32.totalorder %s17, 0
    %p38 = por %p36, %p37
    %p39 = scmp.ne.s32.totalorder %s25, %s26
    %p40 = scmp.eq.s32.totalorder %s18, 1
    %p41 = por %p39, %p40
    %p43 = scmp.ne.s32.totalorder %s26, %s42
    %p44 = scmp.eq.s32.totalorder %s18, 0
    %p45 = por %p43, %p44
    %s47 = sadd.s32 %s46, 1
    %p50 = scmp.eq.s32.totalorder %s12, 1
    %p51 = scmp.ne.s32.totalorder %s46, %s48
    %p52 = scmp.eq.s32.totalorder %s12, 0
    %p53 = por %p51, %p52
    %p54 = scmp.ne.s32.totalorder %s46, %s48
    %p55 = scmp.eq.s32.totalorder %s17, 1
    %p56 = por %p54, %p55
    %p57 = scmp.ne.s32.totalorder %s48, %s49
    %p58 = scmp.eq.s32.totalorder %s17, 0
    %p59 = por %p57, %p58
    %p60 = scmp.ne.s32.totalorder %s48, %s49
    %p61 = scmp.eq.s32.totalorder %s18, 1
    %p62 = por %p60, %p61
    %p64 = scmp.ne.s32.totalorder %s49, %s63
    %p65 = scmp.eq.s32.totalorder %s18, 0
    %p66 = por %p64, %p65
    %s68 = sadd.s32 %s67, 1
    %p71 = scmp.eq.s32.totalorder %s12, 1
    %p72 = scmp.ne.s32.totalorder %s67, %s69
    %p73 = scmp.eq.s32.totalorder %s12, 0
    %p74 = por %p72, %p73
    %p75 = scmp.ne.s32.totalorder %s67, %s69
    %p76 = scmp.eq.s32.totalorder %s17, 1
    %p77 = por %p75, %p76
    %p78 = scmp.ne.s32.totalorder %s69, %s70
    %p79 = scmp.eq.s32.totalorder %s17, 0
    %p80 = por %p78, %p79
    %p81 = scmp.ne.s32.totalorder %s69, %s70
    %p82 = scmp.eq.s32.totalorder %s18, 1
    %p83 = por %p81, %p82
    %p85 = scmp.ne.s32.totalorder %s70, %s84
    %p86 = scmp.eq.s32.totalorder %s18, 0
    %p87 = por %p85, %p86
    %s89 = sadd.s32 %s88, 1
    %p92 = scmp.eq.s32.totalorder %s12, 1
    %p93 = scmp.ne.s32.totalorder %s88, %s90
    %p94 = scmp.eq.s32.totalorder %s12, 0
    %p95 = por %p93, %p94
    %p96 = scmp.ne.s32.totalorder %s88, %s90
    %p97 = scmp.eq.s32.totalorder %s17, 1
    %p98 = por %p96, %p97
    %p99 = scmp.ne.s32.totalorder %s90, %s91
    %p100 = scmp.eq.s32.totalorder %s17, 0
    %p101 = por %p99, %p100
    %p102 = scmp.ne.s32.totalorder %s90, %s91
    %p103 = scmp.eq.s32.totalorder %s18, 1
    %p104 = por %p102, %p103
    %p106 = scmp.ne.s32.totalorder %s91, %s105
    %p107 = scmp.eq.s32.totalorder %s18, 0
    %p108 = por %p106, %p107
    %s110 = sadd.s32 %s109, 1
    %p113 = scmp.eq.s32.totalorder %s12, 1
    %p114 = scmp.ne.s32.totalorder %s109, %s111
    %p115 = scmp.eq.s32.totalorder %s12, 0
    %p116 = por %p114, %p115
    %p117 = scmp.ne.s32.totalorder %s109, %s111
    %p118 = scmp.eq.s32.totalorder %s17, 1
    %p119 = por %p117, %p118
    %p120 = scmp.ne.s32.totalorder %s111, %s112
    %p121 = scmp.eq.s32.totalorder %s17, 0
    %p122 = por %p120, %p121
    %p123 = scmp.ne.s32.totalorder %s111, %s112
    %p124 = scmp.eq.s32.totalorder %s18, 1
    %p125 = por %p123, %p124
    %p127 = scmp.ne.s32.totalorder %s112, %s126
    %p128 = scmp.eq.s32.totalorder %s18, 0
    %p129 = por %p127, %p128
    %s131 = sadd.s32 %s130, 1
    %p134 = scmp.eq.s32.totalorder %s12, 1
    %p135 = scmp.ne.s32.totalorder %s130, %s132
    %p136 = scmp.eq.s32.totalorder %s12, 0
    %p137 = por %p135, %p136
    %p138 = scmp.ne.s32.totalorder %s130, %s132
    %p139 = scmp.eq.s32.totalorder %s17, 1
    %p140 = por %p138, %p139
    %p141 = scmp.ne.s32.totalorder %s132, %s133
    %p142 = scmp.eq.s32.totalorder %s17, 0
    %p143 = por %p141, %p142
    %p144 = scmp.ne.s32.totalorder %s132, %s133
    %p145 = scmp.eq.s32.totalorder %s18, 1
    %p146 = por %p144, %p145
    %p148 = scmp.ne.s32.totalorder %s133, %s147
    %p149 = scmp.eq.s32.totalorder %s18, 0
    %p150 = por %p148, %p149
    %s151 = ssub.s32 %s12, %s19
    %p152 = scmp.eq.s32.totalorder %s151, 0
    %s154 = sadd.s32 %s153, 1
    %s155 = scalar_select %p152, %s153, %s154
    %p158 = pneg %p152
    %p159 = scmp.eq.s32.totalorder %s12, 1
    %p160 = por %p158, %p159
    %p161 = scmp.ne.s32.totalorder %s153, %s156
    %p162 = scmp.eq.s32.totalorder %s12, 0
    %p163 = por %p161, %p162
    %p164 = scmp.ne.s32.totalorder %s153, %s156
    %p165 = scmp.eq.s32.totalorder %s17, 1
    %p166 = por %p164, %p165
    %p167 = scmp.ne.s32.totalorder %s156, %s157
    %p168 = scmp.eq.s32.totalorder %s17, 0
    %p169 = por %p167, %p168
    %p170 = scmp.ne.s32.totalorder %s156, %s157
    %p171 = scmp.eq.s32.totalorder %s18, 1
    %p172 = por %p170, %p171
    %p174 = scmp.ne.s32.totalorder %s157, %s173
    %p175 = scmp.eq.s32.totalorder %s18, 0
    %p176 = por %p174, %p175
    %p177 = scmp.le.s32.totalorder 1, %s12
    %p178 = scmp.lt.s32.totalorder %s12, 3
    %p179 = pnand %p177, %p178
    %p180 = pneg %p179
    // Predicated region
    $region9: #{residual_block.1} parent=5 // pred_check
      _
    $region10: #{residual_block.1} parent=5 // pred_check_branch
      %182 = sbr.rel (%p179) target = $region12
    $region11: #{residual_block.1} parent=5 // pred_region
      %s183 = ssub.s32 %s12, 1
      // Predicated region
      $region13: #{residual_block.1} parent=11 // pred_check
        %p184 = pneg %p59
      $region14: #{residual_block.1} parent=11 // pred_check_branch
        %186 = sbr.rel (%p184) target = $region16
      $region15: #{residual_block.1} parent=11 // pred_region
        _
      $region16: #{residual_block.1} parent=11 // pred_fallthru
        _
      // Predicated region
      $region17: #{residual_block.1} parent=11 // pred_check
        %p187 = pneg %p80
      $region18: #{residual_block.1} parent=11 // pred_check_branch
        %189 = sbr.rel (%p187) target = $region20
      $region19: #{residual_block.1} parent=11 // pred_region
        _
      $region20: #{residual_block.1} parent=11 // pred_fallthru
        _
      // Predicated region
      $region21: #{residual_block.1} parent=11 // pred_check
        %p190 = pneg %p101
      $region22: #{residual_block.1} parent=11 // pred_check_branch
        %192 = sbr.rel (%p190) target = $region24
      $region23: #{residual_block.1} parent=11 // pred_region
        _
      $region24: #{residual_block.1} parent=11 // pred_fallthru
        _
      // Predicated region
      $region25: #{residual_block.1} parent=11 // pred_check
        %p193 = pneg %p122
      $region26: #{residual_block.1} parent=11 // pred_check_branch
        %195 = sbr.rel (%p193) target = $region28
      $region27: #{residual_block.1} parent=11 // pred_region
        _
      $region28: #{residual_block.1} parent=11 // pred_fallthru
        _
      // Predicated region
      $region29: #{residual_block.1} parent=11 // pred_check
        %p196 = pneg %p143
      $region30: #{residual_block.1} parent=11 // pred_check_branch
        %198 = sbr.rel (%p196) target = $region32
      $region31: #{residual_block.1} parent=11 // pred_region
        _
      $region32: #{residual_block.1} parent=11 // pred_fallthru
        _
    $region12: #{residual_block.1} parent=5 // pred_fallthru
      _
    %p199 = scmp.lt.s32.totalorder %s12, 2
    // Predicated region
    $region33: #{residual_block.1} parent=5 // pred_check
      %p200 = pneg %p199
    $region34: #{residual_block.1} parent=5 // pred_check_branch
      %202 = sbr.rel (%p200) target = $region36
    $region35: #{residual_block.1} parent=5 // pred_region
      // Predicated region
      $region37: #{residual_block.1} parent=35 // pred_check
        %p203 = pneg %p32
      $region38: #{residual_block.1} parent=35 // pred_check_branch
        %205 = sbr.rel (%p203) target = $region40
      $region39: #{residual_block.1} parent=35 // pred_region
        %p206 = scmp.lt.s32.totalorder %s12, 1
        %s207 = scalar_select %p206, %s12, 1
        %s208 = smul.addr %s207, 2
        %s209 = smul.addr %s208, 4
        %s210 = scalar_lea.vmem %s0, %s209
      $region40: #{residual_block.1} parent=35 // pred_fallthru
        _
    $region36: #{residual_block.1} parent=5 // pred_fallthru
      _
    %p211 = scmp.le.s32.totalorder 1, %s12
    %p212 = scmp.lt.s32.totalorder %s12, 3
    %p213 = pnand %p211, %p212
    %p214 = pneg %p213
    // Predicated region
    $region41: #{residual_block.1} parent=5 // pred_check
      _
    $region42: #{residual_block.1} parent=5 // pred_check_branch
      %216 = sbr.rel (%p213) target = $region44
    $region43: #{residual_block.1} parent=5 // pred_region
      %s217 = ssub.s32 %s12, 1
      %p218 = scmp.lt.s32.totalorder %s17, 1
      %s219 = scalar_select %p218, %s17, 1
      %s220 = smul.addr %s219, 2
      %s221 = smul.addr %s220, 4
      %s222 = scalar_lea.vmem %s0, %s221
      %p223 = pneg %p38
      %p224 = pneg %p35
      %p225 = pneg %p59
      %p226 = pneg %p56
      %p227 = pneg %p80
      %p228 = pneg %p77
      %p229 = pneg %p101
      %p230 = pneg %p98
      %p231 = pneg %p122
      %p232 = pneg %p119
      %p233 = pneg %p143
      %p234 = pneg %p140
      %p235 = pneg %p169
      %p236 = pneg %p166
      %p237 = scmp.lt.s32.totalorder %s17, 1
      %s238 = scalar_select %p237, %s17, 1
      %s239 = smul.addr %s238, 2
      %s240 = smul.addr %s239, 4
      %s241 = scalar_lea.vmem %s6, %s240
      %p242 = scmp.lt.s32.totalorder %s17, 1
      %s243 = scalar_select %p242, %s17, 1
      %s244 = smul.addr %s243, 2
      %s245 = smul.addr %s244, 4
      %s246 = scalar_lea.vmem %s0, %s245
      %p247 = scmp.lt.s32.totalorder %s17, 1
      %s248 = scalar_select %p247, %s17, 1
      %s249 = smul.addr %s248, 2
      %s250 = smul.addr %s249, 4
      %s251 = scalar_lea.vmem %s6, %s250
      %v252 = vld [vmem:[%s1] sm:$0x3]
      %vm253 = vcmp.eq.s32.totalorder %v252, 0
      %vm254 = vcmp.eq.s32.totalorder %v252, 15
      %v255 = vld [vmem:[%s246] sm:$0xff]
      %257 = vrot.lane.b32.xlu0 %v255, 17
      %v258 = vpop.permute.xlu0 %257
      %v259 = vrot.slane %v258, 4
      %vm260 = vcmask 138240
      %v261 = vsel %vm260, %v259, %v258
      %vm264 = vcmask 1043592
      %vm265 = vcmask 1047556
      %vm266 = vmor %vm265, %vm264
      %267 = vst.msk [vmem:[#allocation2] sm:$0xff] %vm266, %v261
      %vm268 = vcmask 134144
      %269 = vst.msk [vmem:[#allocation2 + $0x8] sm:$0xf] %vm268, %v259
      %v270 = vld [vmem:[#allocation2] sm:$0xf]
      %272 = vrot.lane.b32.xlu0 %v270, 96
      %v273 = vpop.permute.xlu0 %272
      %vm275 = vcmask 134152
      %276 = vst.msk [vmem:[#allocation2] sm:$0xf] %vm275, %v273
      %v277 = vld [vmem:[#allocation2 + $0x4] sm:$0xff]
      %279 = vrot.lane.b32.xlu0 %v277, 32
      %v280 = vpop.permute.xlu0 %279
      %v281 = vrot.slane %v280, 4
      %vm282 = vcmask 261120
      %v283 = vsel %vm282, %v280, %v281
      %vm285 = vcmask 265352
      %286 = vst.msk [vmem:[#allocation2 + $0x8] sm:$0xf] %vm285, %v283
      %v287 = vld [vmem:[#allocation2] sm:$0xff]
      %v288 = vld [vmem:[#allocation2 + $0x8] sm:$0xf]
      %v289 = vsel %vm253, 1, 0
      %v290 = vlaneseq
      %v291 = vshrl.u32 %v290, 7
      %v292 = vsub.s32 0, %v291
      %v293 = vrot.slane %v289, %v292
      %v294 = vlaneseq
      %v295 = vshrl.u32 %v294, 7
      %v296 = vsub.s32 1, %v295
      %v297 = vrot.slane %v289, %v296
      %vm298 = vcmp.eq.s32.totalorder %v293, 1
      %vm299 = vcmp.eq.s32.totalorder %v297, 1
      %v302 = vcombine.high %v287, %v287
      %303 = vrot.lane.b32.xlu0 %v287, 126
      %v304 = vpop.permute.xlu0 %303
      %305 = vrot.lane.b32.xlu0 %v302, 126
      %v306 = vpop.permute.xlu0 %305
      %307 = vrot.lane.b32.xlu0 %v288, 126
      %v308 = vpop.permute.xlu0 %307
      %vm309 = vcmask 1031168
      %v310 = vsel %vm309, %v304, %v306
      %v311 = vsel %vm309, %v306, %v308
      %v315 = vsel %vm298, %v310, %v287
      %v316 = vsel %vm299, %v311, %v302
      %v317 = vsel %vm254, 1, 0
      %v318 = vlaneseq
      %v319 = vshrl.u32 %v318, 7
      %v320 = vsub.s32 0, %v319
      %v321 = vrot.slane %v317, %v320
      %v322 = vlaneseq
      %v323 = vshrl.u32 %v322, 7
      %v324 = vsub.s32 1, %v323
      %v325 = vrot.slane %v317, %v324
      %vm326 = vcmp.eq.s32.totalorder %v321, 1
      %vm327 = vcmp.eq.s32.totalorder %v325, 1
      %v328 = vsel %vm326, %v287, %v310
      %v329 = vsel %vm327, %v302, %v311
      %v330 = vld [vmem:[%s2] sm:$0xf]
      %332 = vset.pattern.permute.xlu0 0
      %333 = vperm.xlu0 %332, %v330
      %v334 = vpop.permute.xlu0 %333
      %v336 = vlaneseq
      %v337 = vshrl.u32 %v336, 7
      %v338 = vsub.s32 0, %v337
      %v339 = vrot.slane %v315, %v338
      %v340 = vlaneseq
      %v341 = vshrl.u32 %v340, 7
      %v342 = vsub.s32 0, %v341
      %v343 = vrot.slane %v316, %v342
      %v344 = vmul.f32 %v334, %v339
      %v345 = vmul.f32 %v334, %v343
      %346 = vset.pattern.permute.xlu0 1
      %347 = vperm.xlu0 %346, %v330
      %v348 = vpop.permute.xlu0 %347
      %v350 = vlaneseq
      %v351 = vshrl.u32 %v350, 7
      %v352 = vsub.s32 1, %v351
      %v353 = vrot.slane %v315, %v352
      %v354 = vlaneseq
      %v355 = vshrl.u32 %v354, 7
      %v356 = vsub.s32 1, %v355
      %v357 = vrot.slane %v316, %v356
      %v358 = vmul.f32 %v348, %v353
      %v359 = vmul.f32 %v348, %v357
      %v360 = vadd.f32 %v344, %v358
      %v361 = vadd.f32 %v345, %v359
      %362 = vset.pattern.permute.xlu0 2
      %363 = vperm.xlu0 %362, %v330
      %v364 = vpop.permute.xlu0 %363
      %v366 = vlaneseq
      %v367 = vshrl.u32 %v366, 7
      %v368 = vsub.s32 2, %v367
      %v369 = vrot.slane %v315, %v368
      %v370 = vlaneseq
      %v371 = vshrl.u32 %v370, 7
      %v372 = vsub.s32 2, %v371
      %v373 = vrot.slane %v316, %v372
      %v374 = vmul.f32 %v364, %v369
      %v375 = vmul.f32 %v364, %v373
      %v376 = vadd.f32 %v360, %v374
      %v377 = vadd.f32 %v361, %v375
      %378 = vset.pattern.permute.xlu0 3
      %379 = vperm.xlu0 %378, %v330
      %v380 = vpop.permute.xlu0 %379
      %v382 = vlaneseq
      %v383 = vshrl.u32 %v382, 7
      %v384 = vsub.s32 3, %v383
      %v385 = vrot.slane %v315, %v384
      %v386 = vlaneseq
      %v387 = vshrl.u32 %v386, 7
      %v388 = vsub.s32 3, %v387
      %v389 = vrot.slane %v316, %v388
      %v390 = vmul.f32 %v380, %v385
      %v391 = vmul.f32 %v380, %v389
      %v392 = vadd.f32 %v376, %v390
      %v393 = vadd.f32 %v377, %v391
      %s394 = scalar_lea.vmem %s2, 4
      %v395 = vld [vmem:[%s394] sm:$0xf]
      %397 = vset.pattern.permute.xlu0 0
      %398 = vperm.xlu0 %397, %v395
      %v399 = vpop.permute.xlu0 %398
      %v401 = vlaneseq
      %v402 = vshrl.u32 %v401, 7
      %v403 = vsub.s32 0, %v402
      %v404 = vrot.slane %v287, %v403
      %v405 = vlaneseq
      %v406 = vshrl.u32 %v405, 7
      %v407 = vsub.s32 4, %v406
      %v408 = vrot.slane %v287, %v407
      %v409 = vlaneseq
      %v410 = vshrl.u32 %v409, 7
      %v411 = vsub.s32 0, %v410
      %v412 = vrot.slane %v288, %v411
      %v416 = vlaneseq
      %v417 = vshrl.u32 %v416, 7
      %v418 = vsub.s32 0, %v417
      %v419 = vrot.slane %v404, %v418
      %v420 = vlaneseq
      %v421 = vshrl.u32 %v420, 7
      %v422 = vsub.s32 0, %v421
      %v423 = vrot.slane %v408, %v422
      %v424 = vlaneseq
      %v425 = vshrl.u32 %v424, 7
      %v426 = vsub.s32 0, %v425
      %v427 = vrot.slane %v412, %v426
      %v428 = vmul.f32 %v399, %v419
      %v429 = vmul.f32 %v399, %v423
      %v430 = vmul.f32 %v399, %v427
      %434 = vrot.lane.b32.xlu0 %v428, 127
      %v435 = vpop.permute.xlu0 %434
      %436 = vrot.lane.b32.xlu0 %v429, 127
      %v437 = vpop.permute.xlu0 %436
      %438 = vrot.lane.b32.xlu0 %v430, 127
      %v439 = vpop.permute.xlu0 %438
      %vm440 = vcmask 1039360
      %v441 = vsel %vm440, %v435, %v437
      %v442 = vsel %vm440, %v437, %v439
      %v445 = vadd.f32 %v392, %v441
      %v446 = vadd.f32 %v393, %v442
      %447 = vset.pattern.permute.xlu0 1
      %448 = vperm.xlu0 %447, %v395
      %v449 = vpop.permute.xlu0 %448
      %v451 = vlaneseq
      %v452 = vshrl.u32 %v451, 7
      %v453 = vsub.s32 1, %v452
      %v454 = vrot.slane %v287, %v453
      %v455 = vlaneseq
      %v456 = vshrl.u32 %v455, 7
      %v457 = vsub.s32 5, %v456
      %v458 = vrot.slane %v287, %v457
      %v459 = vlaneseq
      %v460 = vshrl.u32 %v459, 7
      %v461 = vsub.s32 1, %v460
      %v462 = vrot.slane %v288, %v461
      %v466 = vlaneseq
      %v467 = vshrl.u32 %v466, 7
      %v468 = vsub.s32 1, %v467
      %v469 = vrot.slane %v454, %v468
      %v470 = vlaneseq
      %v471 = vshrl.u32 %v470, 7
      %v472 = vsub.s32 1, %v471
      %v473 = vrot.slane %v458, %v472
      %v474 = vlaneseq
      %v475 = vshrl.u32 %v474, 7
      %v476 = vsub.s32 1, %v475
      %v477 = vrot.slane %v462, %v476
      %v478 = vmul.f32 %v449, %v469
      %v479 = vmul.f32 %v449, %v473
      %v480 = vmul.f32 %v449, %v477
      %484 = vrot.lane.b32.xlu0 %v478, 127
      %v485 = vpop.permute.xlu0 %484
      %486 = vrot.lane.b32.xlu0 %v479, 127
      %v487 = vpop.permute.xlu0 %486
      %488 = vrot.lane.b32.xlu0 %v480, 127
      %v489 = vpop.permute.xlu0 %488
      %v490 = vsel %vm440, %v485, %v487
      %v491 = vsel %vm440, %v487, %v489
      %v494 = vadd.f32 %v445, %v490
      %v495 = vadd.f32 %v446, %v491
      %496 = vset.pattern.permute.xlu0 2
      %497 = vperm.xlu0 %496, %v395
      %v498 = vpop.permute.xlu0 %497
      %v500 = vlaneseq
      %v501 = vshrl.u32 %v500, 7
      %v502 = vsub.s32 2, %v501
      %v503 = vrot.slane %v287, %v502
      %v504 = vlaneseq
      %v505 = vshrl.u32 %v504, 7
      %v506 = vsub.s32 6, %v505
      %v507 = vrot.slane %v287, %v506
      %v508 = vlaneseq
      %v509 = vshrl.u32 %v508, 7
      %v510 = vsub.s32 2, %v509
      %v511 = vrot.slane %v288, %v510
      %v515 = vlaneseq
      %v516 = vshrl.u32 %v515, 7
      %v517 = vsub.s32 2, %v516
      %v518 = vrot.slane %v503, %v517
      %v519 = vlaneseq
      %v520 = vshrl.u32 %v519, 7
      %v521 = vsub.s32 2, %v520
      %v522 = vrot.slane %v507, %v521
      %v523 = vlaneseq
      %v524 = vshrl.u32 %v523, 7
      %v525 = vsub.s32 2, %v524
      %v526 = vrot.slane %v511, %v525
      %v527 = vmul.f32 %v498, %v518
      %v528 = vmul.f32 %v498, %v522
      %v529 = vmul.f32 %v498, %v526
      %533 = vrot.lane.b32.xlu0 %v527, 127
      %v534 = vpop.permute.xlu0 %533
      %535 = vrot.lane.b32.xlu0 %v528, 127
      %v536 = vpop.permute.xlu0 %535
      %537 = vrot.lane.b32.xlu0 %v529, 127
      %v538 = vpop.permute.xlu0 %537
      %v539 = vsel %vm440, %v534, %v536
      %v540 = vsel %vm440, %v536, %v538
      %v543 = vadd.f32 %v494, %v539
      %v544 = vadd.f32 %v495, %v540
      %545 = vset.pattern.permute.xlu0 3
      %546 = vperm.xlu0 %545, %v395
      %v547 = vpop.permute.xlu0 %546
      %v549 = vlaneseq
      %v550 = vshrl.u32 %v549, 7
      %v551 = vsub.s32 3, %v550
      %v552 = vrot.slane %v287, %v551
      %v553 = vlaneseq
      %v554 = vshrl.u32 %v553, 7
      %v555 = vsub.s32 7, %v554
      %v556 = vrot.slane %v287, %v555
      %v557 = vlaneseq
      %v558 = vshrl.u32 %v557, 7
      %v559 = vsub.s32 3, %v558
      %v560 = vrot.slane %v288, %v559
      %v564 = vlaneseq
      %v565 = vshrl.u32 %v564, 7
      %v566 = vsub.s32 3, %v565
      %v567 = vrot.slane %v552, %v566
      %v568 = vlaneseq
      %v569 = vshrl.u32 %v568, 7
      %v570 = vsub.s32 3, %v569
      %v571 = vrot.slane %v556, %v570
      %v572 = vlaneseq
      %v573 = vshrl.u32 %v572, 7
      %v574 = vsub.s32 3, %v573
      %v575 = vrot.slane %v560, %v574
      %v576 = vmul.f32 %v547, %v567
      %v577 = vmul.f32 %v547, %v571
      %v578 = vmul.f32 %v547, %v575
      %582 = vrot.lane.b32.xlu0 %v576, 127
      %v583 = vpop.permute.xlu0 %582
      %584 = vrot.lane.b32.xlu0 %v577, 127
      %v585 = vpop.permute.xlu0 %584
      %586 = vrot.lane.b32.xlu0 %v578, 127
      %v587 = vpop.permute.xlu0 %586
      %v588 = vsel %vm440, %v583, %v585
      %v589 = vsel %vm440, %v585, %v587
      %v592 = vadd.f32 %v543, %v588
      %v593 = vadd.f32 %v544, %v589
      %s594 = scalar_lea.vmem %s2, 8
      %v595 = vld [vmem:[%s594] sm:$0xf]
      %597 = vset.pattern.permute.xlu0 0
      %598 = vperm.xlu0 %597, %v595
      %v599 = vpop.permute.xlu0 %598
      %v601 = vlaneseq
      %v602 = vshrl.u32 %v601, 7
      %v603 = vsub.s32 0, %v602
      %v604 = vrot.slane %v328, %v603
      %v605 = vlaneseq
      %v606 = vshrl.u32 %v605, 7
      %v607 = vsub.s32 0, %v606
      %v608 = vrot.slane %v329, %v607
      %v609 = vmul.f32 %v599, %v604
      %v610 = vmul.f32 %v599, %v608
      %v611 = vadd.f32 %v592, %v609
      %v612 = vadd.f32 %v593, %v610
      %613 = vset.pattern.permute.xlu0 1
      %614 = vperm.xlu0 %613, %v595
      %v615 = vpop.permute.xlu0 %614
      %v617 = vlaneseq
      %v618 = vshrl.u32 %v617, 7
      %v619 = vsub.s32 1, %v618
      %v620 = vrot.slane %v328, %v619
      %v621 = vlaneseq
      %v622 = vshrl.u32 %v621, 7
      %v623 = vsub.s32 1, %v622
      %v624 = vrot.slane %v329, %v623
      %v625 = vmul.f32 %v615, %v620
      %v626 = vmul.f32 %v615, %v624
      %v627 = vadd.f32 %v611, %v625
      %v628 = vadd.f32 %v612, %v626
      %629 = vset.pattern.permute.xlu0 2
      %630 = vperm.xlu0 %629, %v595
      %v631 = vpop.permute.xlu0 %630
      %v633 = vlaneseq
      %v634 = vshrl.u32 %v633, 7
      %v635 = vsub.s32 2, %v634
      %v636 = vrot.slane %v328, %v635
      %v637 = vlaneseq
      %v638 = vshrl.u32 %v637, 7
      %v639 = vsub.s32 2, %v638
      %v640 = vrot.slane %v329, %v639
      %v641 = vmul.f32 %v631, %v636
      %v642 = vmul.f32 %v631, %v640
      %v643 = vadd.f32 %v627, %v641
      %v644 = vadd.f32 %v628, %v642
      %645 = vset.pattern.permute.xlu0 3
      %646 = vperm.xlu0 %645, %v595
      %v647 = vpop.permute.xlu0 %646
      %v649 = vlaneseq
      %v650 = vshrl.u32 %v649, 7
      %v651 = vsub.s32 3, %v650
      %v652 = vrot.slane %v328, %v651
      %v653 = vlaneseq
      %v654 = vshrl.u32 %v653, 7
      %v655 = vsub.s32 3, %v654
      %v656 = vrot.slane %v329, %v655
      %v657 = vmul.f32 %v647, %v652
      %v658 = vmul.f32 %v647, %v656
      %v659 = vadd.f32 %v643, %v657
      %v660 = vadd.f32 %v644, %v658
      %v661 = vld [vmem:[#allocation2] sm:$0xff]
      %v662 = vld [vmem:[#allocation2 + $0x8] sm:$0xf]
      %v665 = vcombine.high %v661, %v661
      %666 = vrot.lane.b32.xlu0 %v661, 110
      %v667 = vpop.permute.xlu0 %666
      %668 = vrot.lane.b32.xlu0 %v665, 110
      %v669 = vpop.permute.xlu0 %668
      %670 = vrot.lane.b32.xlu0 %v662, 110
      %v671 = vpop.permute.xlu0 %670
      %vm672 = vcmask 900096
      %v673 = vsel %vm672, %v667, %v669
      %v674 = vsel %vm672, %v669, %v671
      %677 = vrot.lane.b32.xlu0 %v661, 112
      %v678 = vpop.permute.xlu0 %677
      %679 = vrot.lane.b32.xlu0 %v665, 112
      %v680 = vpop.permute.xlu0 %679
      %681 = vrot.lane.b32.xlu0 %v662, 112
      %v682 = vpop.permute.xlu0 %681
      %vm683 = vcmask 916480
      %v684 = vsel %vm683, %v678, %v680
      %v685 = vsel %vm683, %v680, %v682
      %v688 = vsel %vm298, %v673, %v684
      %v689 = vsel %vm299, %v674, %v685
      %v690 = vsel %vm326, %v684, %v673
      %v691 = vsel %vm327, %v685, %v674
      %s692 = scalar_lea.vmem %s2, 12
      %v693 = vld [vmem:[%s692] sm:$0xf]
      %695 = vset.pattern.permute.xlu0 0
      %696 = vperm.xlu0 %695, %v693
      %v697 = vpop.permute.xlu0 %696
      %v699 = vlaneseq
      %v700 = vshrl.u32 %v699, 7
      %v701 = vsub.s32 0, %v700
      %v702 = vrot.slane %v688, %v701
      %v703 = vlaneseq
      %v704 = vshrl.u32 %v703, 7
      %v705 = vsub.s32 0, %v704
      %v706 = vrot.slane %v689, %v705
      %v707 = vmul.f32 %v697, %v702
      %v708 = vmul.f32 %v697, %v706
      %v709 = vadd.f32 %v659, %v707
      %v710 = vadd.f32 %v660, %v708
      %711 = vset.pattern.permute.xlu0 1
      %712 = vperm.xlu0 %711, %v693
      %v713 = vpop.permute.xlu0 %712
      %v715 = vlaneseq
      %v716 = vshrl.u32 %v715, 7
      %v717 = vsub.s32 1, %v716
      %v718 = vrot.slane %v688, %v717
      %v719 = vlaneseq
      %v720 = vshrl.u32 %v719, 7
      %v721 = vsub.s32 1, %v720
      %v722 = vrot.slane %v689, %v721
      %v723 = vmul.f32 %v713, %v718
      %v724 = vmul.f32 %v713, %v722
      %v725 = vadd.f32 %v709, %v723
      %v726 = vadd.f32 %v710, %v724
      %727 = vset.pattern.permute.xlu0 2
      %728 = vperm.xlu0 %727, %v693
      %v729 = vpop.permute.xlu0 %728
      %v731 = vlaneseq
      %v732 = vshrl.u32 %v731, 7
      %v733 = vsub.s32 2, %v732
      %v734 = vrot.slane %v688, %v733
      %v735 = vlaneseq
      %v736 = vshrl.u32 %v735, 7
      %v737 = vsub.s32 2, %v736
      %v738 = vrot.slane %v689, %v737
      %v739 = vmul.f32 %v729, %v734
      %v740 = vmul.f32 %v729, %v738
      %v741 = vadd.f32 %v725, %v739
      %v742 = vadd.f32 %v726, %v740
      %743 = vset.pattern.permute.xlu0 3
      %744 = vperm.xlu0 %743, %v693
      %v745 = vpop.permute.xlu0 %744
      %v747 = vlaneseq
      %v748 = vshrl.u32 %v747, 7
      %v749 = vsub.s32 3, %v748
      %v750 = vrot.slane %v688, %v749
      %v751 = vlaneseq
      %v752 = vshrl.u32 %v751, 7
      %v753 = vsub.s32 3, %v752
      %v754 = vrot.slane %v689, %v753
      %v755 = vmul.f32 %v745, %v750
      %v756 = vmul.f32 %v745, %v754
      %v757 = vadd.f32 %v741, %v755
      %v758 = vadd.f32 %v742, %v756
      %s759 = scalar_lea.vmem %s2, 16
      %v760 = vld [vmem:[%s759] sm:$0xf]
      %762 = vset.pattern.permute.xlu0 0
      %763 = vperm.xlu0 %762, %v760
      %v764 = vpop.permute.xlu0 %763
      %v766 = vlaneseq
      %v767 = vshrl.u32 %v766, 7
      %v768 = vsub.s32 0, %v767
      %v769 = vrot.slane %v661, %v768
      %v770 = vlaneseq
      %v771 = vshrl.u32 %v770, 7
      %v772 = vsub.s32 4, %v771
      %v773 = vrot.slane %v661, %v772
      %v774 = vlaneseq
      %v775 = vshrl.u32 %v774, 7
      %v776 = vsub.s32 0, %v775
      %v777 = vrot.slane %v662, %v776
      %v781 = vlaneseq
      %v782 = vshrl.u32 %v781, 7
      %v783 = vsub.s32 0, %v782
      %v784 = vrot.slane %v769, %v783
      %v785 = vlaneseq
      %v786 = vshrl.u32 %v785, 7
      %v787 = vsub.s32 0, %v786
      %v788 = vrot.slane %v773, %v787
      %v789 = vlaneseq
      %v790 = vshrl.u32 %v789, 7
      %v791 = vsub.s32 0, %v790
      %v792 = vrot.slane %v777, %v791
      %v793 = vmul.f32 %v764, %v784
      %v794 = vmul.f32 %v764, %v788
      %v795 = vmul.f32 %v764, %v792
      %799 = vrot.lane.b32.xlu0 %v793, 111
      %v800 = vpop.permute.xlu0 %799
      %801 = vrot.lane.b32.xlu0 %v794, 111
      %v802 = vpop.permute.xlu0 %801
      %803 = vrot.lane.b32.xlu0 %v795, 111
      %v804 = vpop.permute.xlu0 %803
      %vm805 = vcmask 908288
      %v806 = vsel %vm805, %v800, %v802
      %v807 = vsel %vm805, %v802, %v804
      %v810 = vadd.f32 %v757, %v806
      %v811 = vadd.f32 %v758, %v807
      %812 = vset.pattern.permute.xlu0 1
      %813 = vperm.xlu0 %812, %v760
      %v814 = vpop.permute.xlu0 %813
      %v816 = vlaneseq
      %v817 = vshrl.u32 %v816, 7
      %v818 = vsub.s32 1, %v817
      %v819 = vrot.slane %v661, %v818
      %v820 = vlaneseq
      %v821 = vshrl.u32 %v820, 7
      %v822 = vsub.s32 5, %v821
      %v823 = vrot.slane %v661, %v822
      %v824 = vlaneseq
      %v825 = vshrl.u32 %v824, 7
      %v826 = vsub.s32 1, %v825
      %v827 = vrot.slane %v662, %v826
      %v831 = vlaneseq
      %v832 = vshrl.u32 %v831, 7
      %v833 = vsub.s32 1, %v832
      %v834 = vrot.slane %v819, %v833
      %v835 = vlaneseq
      %v836 = vshrl.u32 %v835, 7
      %v837 = vsub.s32 1, %v836
      %v838 = vrot.slane %v823, %v837
      %v839 = vlaneseq
      %v840 = vshrl.u32 %v839, 7
      %v841 = vsub.s32 1, %v840
      %v842 = vrot.slane %v827, %v841
      %v843 = vmul.f32 %v814, %v834
      %v844 = vmul.f32 %v814, %v838
      %v845 = vmul.f32 %v814, %v842
      %849 = vrot.lane.b32.xlu0 %v843, 111
      %v850 = vpop.permute.xlu0 %849
      %851 = vrot.lane.b32.xlu0 %v844, 111
      %v852 = vpop.permute.xlu0 %851
      %853 = vrot.lane.b32.xlu0 %v845, 111
      %v854 = vpop.permute.xlu0 %853
      %v855 = vsel %vm805, %v850, %v852
      %v856 = vsel %vm805, %v852, %v854
      %v859 = vadd.f32 %v810, %v855
      %v860 = vadd.f32 %v811, %v856
      %861 = vset.pattern.permute.xlu0 2
      %862 = vperm.xlu0 %861, %v760
      %v863 = vpop.permute.xlu0 %862
      %v865 = vlaneseq
      %v866 = vshrl.u32 %v865, 7
      %v867 = vsub.s32 2, %v866
      %v868 = vrot.slane %v661, %v867
      %v869 = vlaneseq
      %v870 = vshrl.u32 %v869, 7
      %v871 = vsub.s32 6, %v870
      %v872 = vrot.slane %v661, %v871
      %v873 = vlaneseq
      %v874 = vshrl.u32 %v873, 7
      %v875 = vsub.s32 2, %v874
      %v876 = vrot.slane %v662, %v875
      %v880 = vlaneseq
      %v881 = vshrl.u32 %v880, 7
      %v882 = vsub.s32 2, %v881
      %v883 = vrot.slane %v868, %v882
      %v884 = vlaneseq
      %v885 = vshrl.u32 %v884, 7
      %v886 = vsub.s32 2, %v885
      %v887 = vrot.slane %v872, %v886
      %v888 = vlaneseq
      %v889 = vshrl.u32 %v888, 7
      %v890 = vsub.s32 2, %v889
      %v891 = vrot.slane %v876, %v890
      %v892 = vmul.f32 %v863, %v883
      %v893 = vmul.f32 %v863, %v887
      %v894 = vmul.f32 %v863, %v891
      %898 = vrot.lane.b32.xlu0 %v892, 111
      %v899 = vpop.permute.xlu0 %898
      %900 = vrot.lane.b32.xlu0 %v893, 111
      %v901 = vpop.permute.xlu0 %900
      %902 = vrot.lane.b32.xlu0 %v894, 111
      %v903 = vpop.permute.xlu0 %902
      %v904 = vsel %vm805, %v899, %v901
      %v905 = vsel %vm805, %v901, %v903
      %v908 = vadd.f32 %v859, %v904
      %v909 = vadd.f32 %v860, %v905
      %910 = vset.pattern.permute.xlu0 3
      %911 = vperm.xlu0 %910, %v760
      %v912 = vpop.permute.xlu0 %911
      %v914 = vlaneseq
      %v915 = vshrl.u32 %v914, 7
      %v916 = vsub.s32 3, %v915
      %v917 = vrot.slane %v661, %v916
      %v918 = vlaneseq
      %v919 = vshrl.u32 %v918, 7
      %v920 = vsub.s32 7, %v919
      %v921 = vrot.slane %v661, %v920
      %v922 = vlaneseq
      %v923 = vshrl.u32 %v922, 7
      %v924 = vsub.s32 3, %v923
      %v925 = vrot.slane %v662, %v924
      %v929 = vlaneseq
      %v930 = vshrl.u32 %v929, 7
      %v931 = vsub.s32 3, %v930
      %v932 = vrot.slane %v917, %v931
      %v933 = vlaneseq
      %v934 = vshrl.u32 %v933, 7
      %v935 = vsub.s32 3, %v934
      %v936 = vrot.slane %v921, %v935
      %v937 = vlaneseq
      %v938 = vshrl.u32 %v937, 7
      %v939 = vsub.s32 3, %v938
      %v940 = vrot.slane %v925, %v939
      %v941 = vmul.f32 %v912, %v932
      %v942 = vmul.f32 %v912, %v936
      %v943 = vmul.f32 %v912, %v940
      %947 = vrot.lane.b32.xlu0 %v941, 111
      %v948 = vpop.permute.xlu0 %947
      %949 = vrot.lane.b32.xlu0 %v942, 111
      %v950 = vpop.permute.xlu0 %949
      %951 = vrot.lane.b32.xlu0 %v943, 111
      %v952 = vpop.permute.xlu0 %951
      %v953 = vsel %vm805, %v948, %v950
      %v954 = vsel %vm805, %v950, %v952
      %v957 = vadd.f32 %v908, %v953
      %v958 = vadd.f32 %v909, %v954
      %s959 = scalar_lea.vmem %s2, 20
      %v960 = vld [vmem:[%s959] sm:$0xf]
      %962 = vset.pattern.permute.xlu0 0
      %963 = vperm.xlu0 %962, %v960
      %v964 = vpop.permute.xlu0 %963
      %v966 = vlaneseq
      %v967 = vshrl.u32 %v966, 7
      %v968 = vsub.s32 0, %v967
      %v969 = vrot.slane %v690, %v968
      %v970 = vlaneseq
      %v971 = vshrl.u32 %v970, 7
      %v972 = vsub.s32 0, %v971
      %v973 = vrot.slane %v691, %v972
      %v974 = vmul.f32 %v964, %v969
      %v975 = vmul.f32 %v964, %v973
      %v976 = vadd.f32 %v957, %v974
      %v977 = vadd.f32 %v958, %v975
      %978 = vset.pattern.permute.xlu0 1
      %979 = vperm.xlu0 %978, %v960
      %v980 = vpop.permute.xlu0 %979
      %v982 = vlaneseq
      %v983 = vshrl.u32 %v982, 7
      %v984 = vsub.s32 1, %v983
      %v985 = vrot.slane %v690, %v984
      %v986 = vlaneseq
      %v987 = vshrl.u32 %v986, 7
      %v988 = vsub.s32 1, %v987
      %v989 = vrot.slane %v691, %v988
      %v990 = vmul.f32 %v980, %v985
      %v991 = vmul.f32 %v980, %v989
      %v992 = vadd.f32 %v976, %v990
      %v993 = vadd.f32 %v977, %v991
      %994 = vset.pattern.permute.xlu0 2
      %995 = vperm.xlu0 %994, %v960
      %v996 = vpop.permute.xlu0 %995
      %v998 = vlaneseq
      %v999 = vshrl.u32 %v998, 7
      %v1000 = vsub.s32 2, %v999
      %v1001 = vrot.slane %v690, %v1000
      %v1002 = vlaneseq
      %v1003 = vshrl.u32 %v1002, 7
      %v1004 = vsub.s32 2, %v1003
      %v1005 = vrot.slane %v691, %v1004
      %v1006 = vmul.f32 %v996, %v1001
      %v1007 = vmul.f32 %v996, %v1005
      %v1008 = vadd.f32 %v992, %v1006
      %v1009 = vadd.f32 %v993, %v1007
      %1010 = vset.pattern.permute.xlu0 3
      %1011 = vperm.xlu0 %1010, %v960
      %v1012 = vpop.permute.xlu0 %1011
      %v1014 = vlaneseq
      %v1015 = vshrl.u32 %v1014, 7
      %v1016 = vsub.s32 3, %v1015
      %v1017 = vrot.slane %v690, %v1016
      %v1018 = vlaneseq
      %v1019 = vshrl.u32 %v1018, 7
      %v1020 = vsub.s32 3, %v1019
      %v1021 = vrot.slane %v691, %v1020
      %v1022 = vmul.f32 %v1012, %v1017
      %v1023 = vmul.f32 %v1012, %v1021
      %v1024 = vadd.f32 %v1008, %v1022
      %v1025 = vadd.f32 %v1009, %v1023
      %v1026 = vld [vmem:[#allocation2] sm:$0xff]
      %v1027 = vld [vmem:[#allocation2 + $0x8] sm:$0xf]
      %v1030 = vcombine.high %v1026, %v1026
      %1031 = vrot.lane.b32.xlu0 %v1026, 94
      %v1032 = vpop.permute.xlu0 %1031
      %1033 = vrot.lane.b32.xlu0 %v1030, 94
      %v1034 = vpop.permute.xlu0 %1033
      %1035 = vrot.lane.b32.xlu0 %v1027, 94
      %v1036 = vpop.permute.xlu0 %1035
      %vm1037 = vcmask 769024
      %v1038 = vsel %vm1037, %v1032, %v1034
      %v1039 = vsel %vm1037, %v1034, %v1036
      %1042 = vrot.lane.b32.xlu0 %v1026, 96
      %v1043 = vpop.permute.xlu0 %1042
      %1044 = vrot.lane.b32.xlu0 %v1030, 96
      %v1045 = vpop.permute.xlu0 %1044
      %1046 = vrot.lane.b32.xlu0 %v1027, 96
      %v1047 = vpop.permute.xlu0 %1046
      %vm1048 = vcmask 785408
      %v1049 = vsel %vm1048, %v1043, %v1045
      %v1050 = vsel %vm1048, %v1045, %v1047
      %v1053 = vsel %vm298, %v1038, %v1049
      %v1054 = vsel %vm299, %v1039, %v1050
      %v1055 = vsel %vm326, %v1049, %v1038
      %v1056 = vsel %vm327, %v1050, %v1039
      %s1057 = scalar_lea.vmem %s2, 24
      %v1058 = vld [vmem:[%s1057] sm:$0xf]
      %1060 = vset.pattern.permute.xlu0 0
      %1061 = vperm.xlu0 %1060, %v1058
      %v1062 = vpop.permute.xlu0 %1061
      %v1064 = vlaneseq
      %v1065 = vshrl.u32 %v1064, 7
      %v1066 = vsub.s32 0, %v1065
      %v1067 = vrot.slane %v1053, %v1066
      %v1068 = vlaneseq
      %v1069 = vshrl.u32 %v1068, 7
      %v1070 = vsub.s32 0, %v1069
      %v1071 = vrot.slane %v1054, %v1070
      %v1072 = vmul.f32 %v1062, %v1067
      %v1073 = vmul.f32 %v1062, %v1071
      %v1074 = vadd.f32 %v1024, %v1072
      %v1075 = vadd.f32 %v1025, %v1073
      %1076 = vset.pattern.permute.xlu0 1
      %1077 = vperm.xlu0 %1076, %v1058
      %v1078 = vpop.permute.xlu0 %1077
      %v1080 = vlaneseq
      %v1081 = vshrl.u32 %v1080, 7
      %v1082 = vsub.s32 1, %v1081
      %v1083 = vrot.slane %v1053, %v1082
      %v1084 = vlaneseq
      %v1085 = vshrl.u32 %v1084, 7
      %v1086 = vsub.s32 1, %v1085
      %v1087 = vrot.slane %v1054, %v1086
      %v1088 = vmul.f32 %v1078, %v1083
      %v1089 = vmul.f32 %v1078, %v1087
      %v1090 = vadd.f32 %v1074, %v1088
      %v1091 = vadd.f32 %v1075, %v1089
      %1092 = vset.pattern.permute.xlu0 2
      %1093 = vperm.xlu0 %1092, %v1058
      %v1094 = vpop.permute.xlu0 %1093
      %v1096 = vlaneseq
      %v1097 = vshrl.u32 %v1096, 7
      %v1098 = vsub.s32 2, %v1097
      %v1099 = vrot.slane %v1053, %v1098
      %v1100 = vlaneseq
      %v1101 = vshrl.u32 %v1100, 7
      %v1102 = vsub.s32 2, %v1101
      %v1103 = vrot.slane %v1054, %v1102
      %v1104 = vmul.f32 %v1094, %v1099
      %v1105 = vmul.f32 %v1094, %v1103
      %v1106 = vadd.f32 %v1090, %v1104
      %v1107 = vadd.f32 %v1091, %v1105
      %1108 = vset.pattern.permute.xlu0 3
      %1109 = vperm.xlu0 %1108, %v1058
      %v1110 = vpop.permute.xlu0 %1109
      %v1112 = vlaneseq
      %v1113 = vshrl.u32 %v1112, 7
      %v1114 = vsub.s32 3, %v1113
      %v1115 = vrot.slane %v1053, %v1114
      %v1116 = vlaneseq
      %v1117 = vshrl.u32 %v1116, 7
      %v1118 = vsub.s32 3, %v1117
      %v1119 = vrot.slane %v1054, %v1118
      %v1120 = vmul.f32 %v1110, %v1115
      %v1121 = vmul.f32 %v1110, %v1119
      %v1122 = vadd.f32 %v1106, %v1120
      %v1123 = vadd.f32 %v1107, %v1121
      %s1124 = scalar_lea.vmem %s2, 28
      %v1125 = vld [vmem:[%s1124] sm:$0xf]
      %1127 = vset.pattern.permute.xlu0 0
      %1128 = vperm.xlu0 %1127, %v1125
      %v1129 = vpop.permute.xlu0 %1128
      %v1131 = vlaneseq
      %v1132 = vshrl.u32 %v1131, 7
      %v1133 = vsub.s32 0, %v1132
      %v1134 = vrot.slane %v1026, %v1133
      %v1135 = vlaneseq
      %v1136 = vshrl.u32 %v1135, 7
      %v1137 = vsub.s32 4, %v1136
      %v1138 = vrot.slane %v1026, %v1137
      %v1139 = vlaneseq
      %v1140 = vshrl.u32 %v1139, 7
      %v1141 = vsub.s32 0, %v1140
      %v1142 = vrot.slane %v1027, %v1141
      %v1146 = vlaneseq
      %v1147 = vshrl.u32 %v1146, 7
      %v1148 = vsub.s32 0, %v1147
      %v1149 = vrot.slane %v1134, %v1148
      %v1150 = vlaneseq
      %v1151 = vshrl.u32 %v1150, 7
      %v1152 = vsub.s32 0, %v1151
      %v1153 = vrot.slane %v1138, %v1152
      %v1154 = vlaneseq
      %v1155 = vshrl.u32 %v1154, 7
      %v1156 = vsub.s32 0, %v1155
      %v1157 = vrot.slane %v1142, %v1156
      %v1158 = vmul.f32 %v1129, %v1149
      %v1159 = vmul.f32 %v1129, %v1153
      %v1160 = vmul.f32 %v1129, %v1157
      %1164 = vrot.lane.b32.xlu0 %v1158, 95
      %v1165 = vpop.permute.xlu0 %1164
      %1166 = vrot.lane.b32.xlu0 %v1159, 95
      %v1167 = vpop.permute.xlu0 %1166
      %1168 = vrot.lane.b32.xlu0 %v1160, 95
      %v1169 = vpop.permute.xlu0 %1168
      %vm1170 = vcmask 777216
      %v1171 = vsel %vm1170, %v1165, %v1167
      %v1172 = vsel %vm1170, %v1167, %v1169
      %v1175 = vadd.f32 %v1122, %v1171
      %v1176 = vadd.f32 %v1123, %v1172
      %1177 = vset.pattern.permute.xlu0 1
      %1178 = vperm.xlu0 %1177, %v1125
      %v1179 = vpop.permute.xlu0 %1178
      %v1181 = vlaneseq
      %v1182 = vshrl.u32 %v1181, 7
      %v1183 = vsub.s32 1, %v1182
      %v1184 = vrot.slane %v1026, %v1183
      %v1185 = vlaneseq
      %v1186 = vshrl.u32 %v1185, 7
      %v1187 = vsub.s32 5, %v1186
      %v1188 = vrot.slane %v1026, %v1187
      %v1189 = vlaneseq
      %v1190 = vshrl.u32 %v1189, 7
      %v1191 = vsub.s32 1, %v1190
      %v1192 = vrot.slane %v1027, %v1191
      %v1196 = vlaneseq
      %v1197 = vshrl.u32 %v1196, 7
      %v1198 = vsub.s32 1, %v1197
      %v1199 = vrot.slane %v1184, %v1198
      %v1200 = vlaneseq
      %v1201 = vshrl.u32 %v1200, 7
      %v1202 = vsub.s32 1, %v1201
      %v1203 = vrot.slane %v1188, %v1202
      %v1204 = vlaneseq
      %v1205 = vshrl.u32 %v1204, 7
      %v1206 = vsub.s32 1, %v1205
      %v1207 = vrot.slane %v1192, %v1206
      %v1208 = vmul.f32 %v1179, %v1199
      %v1209 = vmul.f32 %v1179, %v1203
      %v1210 = vmul.f32 %v1179, %v1207
      %1214 = vrot.lane.b32.xlu0 %v1208, 95
      %v1215 = vpop.permute.xlu0 %1214
      %1216 = vrot.lane.b32.xlu0 %v1209, 95
      %v1217 = vpop.permute.xlu0 %1216
      %1218 = vrot.lane.b32.xlu0 %v1210, 95
      %v1219 = vpop.permute.xlu0 %1218
      %v1220 = vsel %vm1170, %v1215, %v1217
      %v1221 = vsel %vm1170, %v1217, %v1219
      %v1224 = vadd.f32 %v1175, %v1220
      %v1225 = vadd.f32 %v1176, %v1221
      %1226 = vset.pattern.permute.xlu0 2
      %1227 = vperm.xlu0 %1226, %v1125
      %v1228 = vpop.permute.xlu0 %1227
      %v1230 = vlaneseq
      %v1231 = vshrl.u32 %v1230, 7
      %v1232 = vsub.s32 2, %v1231
      %v1233 = vrot.slane %v1026, %v1232
      %v1234 = vlaneseq
      %v1235 = vshrl.u32 %v1234, 7
      %v1236 = vsub.s32 6, %v1235
      %v1237 = vrot.slane %v1026, %v1236
      %v1238 = vlaneseq
      %v1239 = vshrl.u32 %v1238, 7
      %v1240 = vsub.s32 2, %v1239
      %v1241 = vrot.slane %v1027, %v1240
      %v1245 = vlaneseq
      %v1246 = vshrl.u32 %v1245, 7
      %v1247 = vsub.s32 2, %v1246
      %v1248 = vrot.slane %v1233, %v1247
      %v1249 = vlaneseq
      %v1250 = vshrl.u32 %v1249, 7
      %v1251 = vsub.s32 2, %v1250
      %v1252 = vrot.slane %v1237, %v1251
      %v1253 = vlaneseq
      %v1254 = vshrl.u32 %v1253, 7
      %v1255 = vsub.s32 2, %v1254
      %v1256 = vrot.slane %v1241, %v1255
      %v1257 = vmul.f32 %v1228, %v1248
      %v1258 = vmul.f32 %v1228, %v1252
      %v1259 = vmul.f32 %v1228, %v1256
      %1263 = vrot.lane.b32.xlu0 %v1257, 95
      %v1264 = vpop.permute.xlu0 %1263
      %1265 = vrot.lane.b32.xlu0 %v1258, 95
      %v1266 = vpop.permute.xlu0 %1265
      %1267 = vrot.lane.b32.xlu0 %v1259, 95
      %v1268 = vpop.permute.xlu0 %1267
      %v1269 = vsel %vm1170, %v1264, %v1266
      %v1270 = vsel %vm1170, %v1266, %v1268
      %v1273 = vadd.f32 %v1224, %v1269
      %v1274 = vadd.f32 %v1225, %v1270
      %1275 = vset.pattern.permute.xlu0 3
      %1276 = vperm.xlu0 %1275, %v1125
      %v1277 = vpop.permute.xlu0 %1276
      %v1279 = vlaneseq
      %v1280 = vshrl.u32 %v1279, 7
      %v1281 = vsub.s32 3, %v1280
      %v1282 = vrot.slane %v1026, %v1281
      %v1283 = vlaneseq
      %v1284 = vshrl.u32 %v1283, 7
      %v1285 = vsub.s32 7, %v1284
      %v1286 = vrot.slane %v1026, %v1285
      %v1287 = vlaneseq
      %v1288 = vshrl.u32 %v1287, 7
      %v1289 = vsub.s32 3, %v1288
      %v1290 = vrot.slane %v1027, %v1289
      %v1294 = vlaneseq
      %v1295 = vshrl.u32 %v1294, 7
      %v1296 = vsub.s32 3, %v1295
      %v1297 = vrot.slane %v1282, %v1296
      %v1298 = vlaneseq
      %v1299 = vshrl.u32 %v1298, 7
      %v1300 = vsub.s32 3, %v1299
      %v1301 = vrot.slane %v1286, %v1300
      %v1302 = vlaneseq
      %v1303 = vshrl.u32 %v1302, 7
      %v1304 = vsub.s32 3, %v1303
      %v1305 = vrot.slane %v1290, %v1304
      %v1306 = vmul.f32 %v1277, %v1297
      %v1307 = vmul.f32 %v1277, %v1301
      %v1308 = vmul.f32 %v1277, %v1305
      %1312 = vrot.lane.b32.xlu0 %v1306, 95
      %v1313 = vpop.permute.xlu0 %1312
      %1314 = vrot.lane.b32.xlu0 %v1307, 95
      %v1315 = vpop.permute.xlu0 %1314
      %1316 = vrot.lane.b32.xlu0 %v1308, 95
      %v1317 = vpop.permute.xlu0 %1316
      %v1318 = vsel %vm1170, %v1313, %v1315
      %v1319 = vsel %vm1170, %v1315, %v1317
      %v1322 = vadd.f32 %v1273, %v1318
      %v1323 = vadd.f32 %v1274, %v1319
      %s1324 = scalar_lea.vmem %s2, 32
      %v1325 = vld [vmem:[%s1324] sm:$0xf]
      %1327 = vset.pattern.permute.xlu0 0
      %1328 = vperm.xlu0 %1327, %v1325
      %v1329 = vpop.permute.xlu0 %1328
      %v1331 = vlaneseq
      %v1332 = vshrl.u32 %v1331, 7
      %v1333 = vsub.s32 0, %v1332
      %v1334 = vrot.slane %v1055, %v1333
      %v1335 = vlaneseq
      %v1336 = vshrl.u32 %v1335, 7
      %v1337 = vsub.s32 0, %v1336
      %v1338 = vrot.slane %v1056, %v1337
      %v1339 = vmul.f32 %v1329, %v1334
      %v1340 = vmul.f32 %v1329, %v1338
      %v1341 = vadd.f32 %v1322, %v1339
      %v1342 = vadd.f32 %v1323, %v1340
      %1343 = vset.pattern.permute.xlu0 1
      %1344 = vperm.xlu0 %1343, %v1325
      %v1345 = vpop.permute.xlu0 %1344
      %v1347 = vlaneseq
      %v1348 = vshrl.u32 %v1347, 7
      %v1349 = vsub.s32 1, %v1348
      %v1350 = vrot.slane %v1055, %v1349
      %v1351 = vlaneseq
      %v1352 = vshrl.u32 %v1351, 7
      %v1353 = vsub.s32 1, %v1352
      %v1354 = vrot.slane %v1056, %v1353
      %v1355 = vmul.f32 %v1345, %v1350
      %v1356 = vmul.f32 %v1345, %v1354
      %v1357 = vadd.f32 %v1341, %v1355
      %v1358 = vadd.f32 %v1342, %v1356
      %1359 = vset.pattern.permute.xlu0 2
      %1360 = vperm.xlu0 %1359, %v1325
      %v1361 = vpop.permute.xlu0 %1360
      %v1363 = vlaneseq
      %v1364 = vshrl.u32 %v1363, 7
      %v1365 = vsub.s32 2, %v1364
      %v1366 = vrot.slane %v1055, %v1365
      %v1367 = vlaneseq
      %v1368 = vshrl.u32 %v1367, 7
      %v1369 = vsub.s32 2, %v1368
      %v1370 = vrot.slane %v1056, %v1369
      %v1371 = vmul.f32 %v1361, %v1366
      %v1372 = vmul.f32 %v1361, %v1370
      %v1373 = vadd.f32 %v1357, %v1371
      %v1374 = vadd.f32 %v1358, %v1372
      %1375 = vset.pattern.permute.xlu0 3
      %1376 = vperm.xlu0 %1375, %v1325
      %v1377 = vpop.permute.xlu0 %1376
      %v1379 = vlaneseq
      %v1380 = vshrl.u32 %v1379, 7
      %v1381 = vsub.s32 3, %v1380
      %v1382 = vrot.slane %v1055, %v1381
      %v1383 = vlaneseq
      %v1384 = vshrl.u32 %v1383, 7
      %v1385 = vsub.s32 3, %v1384
      %v1386 = vrot.slane %v1056, %v1385
      %v1387 = vmul.f32 %v1377, %v1382
      %v1388 = vmul.f32 %v1377, %v1386
      %v1389 = vadd.f32 %v1373, %v1387
      %v1390 = vadd.f32 %v1374, %v1388
      %v1391 = vld [vmem:[%s3] sm:$0xf]
      %1393 = vset.pattern.permute.xlu0 0
      %1394 = vperm.xlu0 %1393, %v1391
      %v1395 = vpop.permute.xlu0 %1394
      %v1397 = vadd.f32 %v1389, %v1395
      %v1398 = vadd.f32 %v1390, %v1395
      %vm1399 = vcmask 1043456
      %v1400 = vsel %vm1399, %v1397, 0.0
      %v1401 = vsel %vm1399, %v1398, 0.0
      %v1402 = vadd.f32 %v1400, %v1401
      %1403 = vadd.xlane.f32.xlu0 %v1402
      %v1404 = vpop.xlane.xlu0 %1403
      %v1405 = vmul.f32 %v1397, %v1397
      %v1406 = vmul.f32 %v1398, %v1398
      %v1407 = vsel %vm1399, %v1405, 0.0
      %v1408 = vsel %vm1399, %v1406, 0.0
      %v1409 = vadd.f32 %v1407, %v1408
      %1410 = vadd.xlane.f32.xlu0 %v1409
      %v1411 = vpop.xlane.xlu0 %1410
      %v1412 = vmul.f32 %v1404, 0.00390625
      %v1413 = vmul.f32 %v1411, 0.00390625
      %v1414 = vmul.f32 %v1412, %v1412
      %v1415 = vsub.f32 %v1413, %v1414
      %v1416 = vmax.f32 %v1415, 0.0
      %v1417 = vsub.f32 %v1397, %v1412
      %v1418 = vsub.f32 %v1398, %v1412
      %v1419 = vadd.f32 %v1416, 1e-05
      %v1420 = vrsqrt.pop %v1419
      %v1421 = vmul.f32 %v1417, %v1420
      %v1422 = vmul.f32 %v1418, %v1420
      %v1423 = vmax.f32 %v1421, 0.0
      %v1424 = vmax.f32 %v1422, 0.0
      %v1427 = vcombine.low %v1423, %v1424
      %1428 = vrot.lane.b32.xlu0 %v1427, 17
      %v1429 = vpop.permute.xlu0 %1428
      %v1430 = vrot.slane %v1429, 4
      %v1431 = vsel %vm260, %v1430, %v1429
      %1434 = vst.msk [vmem:[#allocation2] sm:$0xff] %vm266, %v1431
      %1435 = vst.msk [vmem:[#allocation2 + $0x8] sm:$0xf] %vm268, %v1430
      %v1436 = vld [vmem:[#allocation2] sm:$0xf]
      %1438 = vrot.lane.b32.xlu0 %v1436, 96
      %v1439 = vpop.permute.xlu0 %1438
      %1441 = vst.msk [vmem:[#allocation2] sm:$0xf] %vm275, %v1439
      %v1442 = vld [vmem:[#allocation2 + $0x4] sm:$0xff]
      %1444 = vrot.lane.b32.xlu0 %v1442, 32
      %v1445 = vpop.permute.xlu0 %1444
      %v1446 = vrot.slane %v1445, 4
      %v1447 = vsel %vm282, %v1445, %v1446
      %1449 = vst.msk [vmem:[#allocation2 + $0x8] sm:$0xf] %vm285, %v1447
      %v1450 = vld [vmem:[#allocation2] sm:$0xff]
      %v1451 = vld [vmem:[#allocation2 + $0x8] sm:$0xf]
      %v1454 = vcombine.high %v1450, %v1450
      %1455 = vrot.lane.b32.xlu0 %v1450, 126
      %v1456 = vpop.permute.xlu0 %1455
      %1457 = vrot.lane.b32.xlu0 %v1454, 126
      %v1458 = vpop.permute.xlu0 %1457
      %1459 = vrot.lane.b32.xlu0 %v1451, 126
      %v1460 = vpop.permute.xlu0 %1459
      %v1461 = vsel %vm309, %v1456, %v1458
      %v1462 = vsel %vm309, %v1458, %v1460
      %v1466 = vsel %vm298, %v1461, %v1450
      %v1467 = vsel %vm299, %v1462, %v1454
      %v1468 = vsel %vm326, %v1450, %v1461
      %v1469 = vsel %vm327, %v1454, %v1462
      %v1470 = vld [vmem:[%s4] sm:$0xf]
      %1472 = vset.pattern.permute.xlu0 0
      %1473 = vperm.xlu0 %1472, %v1470
      %v1474 = vpop.permute.xlu0 %1473
      %v1476 = vlaneseq
      %v1477 = vshrl.u32 %v1476, 7
      %v1478 = vsub.s32 0, %v1477
      %v1479 = vrot.slane %v1466, %v1478
      %v1480 = vlaneseq
      %v1481 = vshrl.u32 %v1480, 7
      %v1482 = vsub.s32 0, %v1481
      %v1483 = vrot.slane %v1467, %v1482
      %v1484 = vmul.f32 %v1474, %v1479
      %v1485 = vmul.f32 %v1474, %v1483
      %1486 = vset.pattern.permute.xlu0 1
      %1487 = vperm.xlu0 %1486, %v1470
      %v1488 = vpop.permute.xlu0 %1487
      %v1490 = vlaneseq
      %v1491 = vshrl.u32 %v1490, 7
      %v1492 = vsub.s32 1, %v1491
      %v1493 = vrot.slane %v1466, %v1492
      %v1494 = vlaneseq
      %v1495 = vshrl.u32 %v1494, 7
      %v1496 = vsub.s32 1, %v1495
      %v1497 = vrot.slane %v1467, %v1496
      %v1498 = vmul.f32 %v1488, %v1493
      %v1499 = vmul.f32 %v1488, %v1497
      %v1500 = vadd.f32 %v1484, %v1498
      %v1501 = vadd.f32 %v1485, %v1499
      %1502 = vset.pattern.permute.xlu0 2
      %1503 = vperm.xlu0 %1502, %v1470
      %v1504 = vpop.permute.xlu0 %1503
      %v1506 = vlaneseq
      %v1507 = vshrl.u32 %v1506, 7
      %v1508 = vsub.s32 2, %v1507
      %v1509 = vrot.slane %v1466, %v1508
      %v1510 = vlaneseq
      %v1511 = vshrl.u32 %v1510, 7
      %v1512 = vsub.s32 2, %v1511
      %v1513 = vrot.slane %v1467, %v1512
      %v1514 = vmul.f32 %v1504, %v1509
      %v1515 = vmul.f32 %v1504, %v1513
      %v1516 = vadd.f32 %v1500, %v1514
      %v1517 = vadd.f32 %v1501, %v1515
      %1518 = vset.pattern.permute.xlu0 3
      %1519 = vperm.xlu0 %1518, %v1470
      %v1520 = vpop.permute.xlu0 %1519
      %v1522 = vlaneseq
      %v1523 = vshrl.u32 %v1522, 7
      %v1524 = vsub.s32 3, %v1523
      %v1525 = vrot.slane %v1466, %v1524
      %v1526 = vlaneseq
      %v1527 = vshrl.u32 %v1526, 7
      %v1528 = vsub.s32 3, %v1527
      %v1529 = vrot.slane %v1467, %v1528
      %v1530 = vmul.f32 %v1520, %v1525
      %v1531 = vmul.f32 %v1520, %v1529
      %v1532 = vadd.f32 %v1516, %v1530
      %v1533 = vadd.f32 %v1517, %v1531
      %s1534 = scalar_lea.vmem %s4, 4
      %v1535 = vld [vmem:[%s1534] sm:$0xf]
      %1537 = vset.pattern.permute.xlu0 0
      %1538 = vperm.xlu0 %1537, %v1535
      %v1539 = vpop.permute.xlu0 %1538
      %v1541 = vlaneseq
      %v1542 = vshrl.u32 %v1541, 7
      %v1543 = vsub.s32 0, %v1542
      %v1544 = vrot.slane %v1450, %v1543
      %v1545 = vlaneseq
      %v1546 = vshrl.u32 %v1545, 7
      %v1547 = vsub.s32 4, %v1546
      %v1548 = vrot.slane %v1450, %v1547
      %v1549 = vlaneseq
      %v1550 = vshrl.u32 %v1549, 7
      %v1551 = vsub.s32 0, %v1550
      %v1552 = vrot.slane %v1451, %v1551
      %v1556 = vlaneseq
      %v1557 = vshrl.u32 %v1556, 7
      %v1558 = vsub.s32 0, %v1557
      %v1559 = vrot.slane %v1544, %v1558
      %v1560 = vlaneseq
      %v1561 = vshrl.u32 %v1560, 7
      %v1562 = vsub.s32 0, %v1561
      %v1563 = vrot.slane %v1548, %v1562
      %v1564 = vlaneseq
      %v1565 = vshrl.u32 %v1564, 7
      %v1566 = vsub.s32 0, %v1565
      %v1567 = vrot.slane %v1552, %v1566
      %v1568 = vmul.f32 %v1539, %v1559
      %v1569 = vmul.f32 %v1539, %v1563
      %v1570 = vmul.f32 %v1539, %v1567
      %1574 = vrot.lane.b32.xlu0 %v1568, 127
      %v1575 = vpop.permute.xlu0 %1574
      %1576 = vrot.lane.b32.xlu0 %v1569, 127
      %v1577 = vpop.permute.xlu0 %1576
      %1578 = vrot.lane.b32.xlu0 %v1570, 127
      %v1579 = vpop.permute.xlu0 %1578
      %v1580 = vsel %vm440, %v1575, %v1577
      %v1581 = vsel %vm440, %v1577, %v1579
      %v1584 = vadd.f32 %v1532, %v1580
      %v1585 = vadd.f32 %v1533, %v1581
      %1586 = vset.pattern.permute.xlu0 1
      %1587 = vperm.xlu0 %1586, %v1535
      %v1588 = vpop.permute.xlu0 %1587
      %v1590 = vlaneseq
      %v1591 = vshrl.u32 %v1590, 7
      %v1592 = vsub.s32 1, %v1591
      %v1593 = vrot.slane %v1450, %v1592
      %v1594 = vlaneseq
      %v1595 = vshrl.u32 %v1594, 7
      %v1596 = vsub.s32 5, %v1595
      %v1597 = vrot.slane %v1450, %v1596
      %v1598 = vlaneseq
      %v1599 = vshrl.u32 %v1598, 7
      %v1600 = vsub.s32 1, %v1599
      %v1601 = vrot.slane %v1451, %v1600
      %v1605 = vlaneseq
      %v1606 = vshrl.u32 %v1605, 7
      %v1607 = vsub.s32 1, %v1606
      %v1608 = vrot.slane %v1593, %v1607
      %v1609 = vlaneseq
      %v1610 = vshrl.u32 %v1609, 7
      %v1611 = vsub.s32 1, %v1610
      %v1612 = vrot.slane %v1597, %v1611
      %v1613 = vlaneseq
      %v1614 = vshrl.u32 %v1613, 7
      %v1615 = vsub.s32 1, %v1614
      %v1616 = vrot.slane %v1601, %v1615
      %v1617 = vmul.f32 %v1588, %v1608
      %v1618 = vmul.f32 %v1588, %v1612
      %v1619 = vmul.f32 %v1588, %v1616
      %1623 = vrot.lane.b32.xlu0 %v1617, 127
      %v1624 = vpop.permute.xlu0 %1623
      %1625 = vrot.lane.b32.xlu0 %v1618, 127
      %v1626 = vpop.permute.xlu0 %1625
      %1627 = vrot.lane.b32.xlu0 %v1619, 127
      %v1628 = vpop.permute.xlu0 %1627
      %v1629 = vsel %vm440, %v1624, %v1626
      %v1630 = vsel %vm440, %v1626, %v1628
      %v1633 = vadd.f32 %v1584, %v1629
      %v1634 = vadd.f32 %v1585, %v1630
      %1635 = vset.pattern.permute.xlu0 2
      %1636 = vperm.xlu0 %1635, %v1535
      %v1637 = vpop.permute.xlu0 %1636
      %v1639 = vlaneseq
      %v1640 = vshrl.u32 %v1639, 7
      %v1641 = vsub.s32 2, %v1640
      %v1642 = vrot.slane %v1450, %v1641
      %v1643 = vlaneseq
      %v1644 = vshrl.u32 %v1643, 7
      %v1645 = vsub.s32 6, %v1644
      %v1646 = vrot.slane %v1450, %v1645
      %v1647 = vlaneseq
      %v1648 = vshrl.u32 %v1647, 7
      %v1649 = vsub.s32 2, %v1648
      %v1650 = vrot.slane %v1451, %v1649
      %v1654 = vlaneseq
      %v1655 = vshrl.u32 %v1654, 7
      %v1656 = vsub.s32 2, %v1655
      %v1657 = vrot.slane %v1642, %v1656
      %v1658 = vlaneseq
      %v1659 = vshrl.u32 %v1658, 7
      %v1660 = vsub.s32 2, %v1659
      %v1661 = vrot.slane %v1646, %v1660
      %v1662 = vlaneseq
      %v1663 = vshrl.u32 %v1662, 7
      %v1664 = vsub.s32 2, %v1663
      %v1665 = vrot.slane %v1650, %v1664
      %v1666 = vmul.f32 %v1637, %v1657
      %v1667 = vmul.f32 %v1637, %v1661
      %v1668 = vmul.f32 %v1637, %v1665
      %1672 = vrot.lane.b32.xlu0 %v1666, 127
      %v1673 = vpop.permute.xlu0 %1672
      %1674 = vrot.lane.b32.xlu0 %v1667, 127
      %v1675 = vpop.permute.xlu0 %1674
      %1676 = vrot.lane.b32.xlu0 %v1668, 127
      %v1677 = vpop.permute.xlu0 %1676
      %v1678 = vsel %vm440, %v1673, %v1675
      %v1679 = vsel %vm440, %v1675, %v1677
      %v1682 = vadd.f32 %v1633, %v1678
      %v1683 = vadd.f32 %v1634, %v1679
      %1684 = vset.pattern.permute.xlu0 3
      %1685 = vperm.xlu0 %1684, %v1535
      %v1686 = vpop.permute.xlu0 %1685
      %v1688 = vlaneseq
      %v1689 = vshrl.u32 %v1688, 7
      %v1690 = vsub.s32 3, %v1689
      %v1691 = vrot.slane %v1450, %v1690
      %v1692 = vlaneseq
      %v1693 = vshrl.u32 %v1692, 7
      %v1694 = vsub.s32 7, %v1693
      %v1695 = vrot.slane %v1450, %v1694
      %v1696 = vlaneseq
      %v1697 = vshrl.u32 %v1696, 7
      %v1698 = vsub.s32 3, %v1697
      %v1699 = vrot.slane %v1451, %v1698
      %v1703 = vlaneseq
      %v1704 = vshrl.u32 %v1703, 7
      %v1705 = vsub.s32 3, %v1704
      %v1706 = vrot.slane %v1691, %v1705
      %v1707 = vlaneseq
      %v1708 = vshrl.u32 %v1707, 7
      %v1709 = vsub.s32 3, %v1708
      %v1710 = vrot.slane %v1695, %v1709
      %v1711 = vlaneseq
      %v1712 = vshrl.u32 %v1711, 7
      %v1713 = vsub.s32 3, %v1712
      %v1714 = vrot.slane %v1699, %v1713
      %v1715 = vmul.f32 %v1686, %v1706
      %v1716 = vmul.f32 %v1686, %v1710
      %v1717 = vmul.f32 %v1686, %v1714
      %1721 = vrot.lane.b32.xlu0 %v1715, 127
      %v1722 = vpop.permute.xlu0 %1721
      %1723 = vrot.lane.b32.xlu0 %v1716, 127
      %v1724 = vpop.permute.xlu0 %1723
      %1725 = vrot.lane.b32.xlu0 %v1717, 127
      %v1726 = vpop.permute.xlu0 %1725
      %v1727 = vsel %vm440, %v1722, %v1724
      %v1728 = vsel %vm440, %v1724, %v1726
      %v1731 = vadd.f32 %v1682, %v1727
      %v1732 = vadd.f32 %v1683, %v1728
      %s1733 = scalar_lea.vmem %s4, 8
      %v1734 = vld [vmem:[%s1733] sm:$0xf]
      %1736 = vset.pattern.permute.xlu0 0
      %1737 = vperm.xlu0 %1736, %v1734
      %v1738 = vpop.permute.xlu0 %1737
      %v1740 = vlaneseq
      %v1741 = vshrl.u32 %v1740, 7
      %v1742 = vsub.s32 0, %v1741
      %v1743 = vrot.slane %v1468, %v1742
      %v1744 = vlaneseq
      %v1745 = vshrl.u32 %v1744, 7
      %v1746 = vsub.s32 0, %v1745
      %v1747 = vrot.slane %v1469, %v1746
      %v1748 = vmul.f32 %v1738, %v1743
      %v1749 = vmul.f32 %v1738, %v1747
      %v1750 = vadd.f32 %v1731, %v1748
      %v1751 = vadd.f32 %v1732, %v1749
      %1752 = vset.pattern.permute.xlu0 1
      %1753 = vperm.xlu0 %1752, %v1734
      %v1754 = vpop.permute.xlu0 %1753
      %v1756 = vlaneseq
      %v1757 = vshrl.u32 %v1756, 7
      %v1758 = vsub.s32 1, %v1757
      %v1759 = vrot.slane %v1468, %v1758
      %v1760 = vlaneseq
      %v1761 = vshrl.u32 %v1760, 7
      %v1762 = vsub.s32 1, %v1761
      %v1763 = vrot.slane %v1469, %v1762
      %v1764 = vmul.f32 %v1754, %v1759
      %v1765 = vmul.f32 %v1754, %v1763
      %v1766 = vadd.f32 %v1750, %v1764
      %v1767 = vadd.f32 %v1751, %v1765
      %1768 = vset.pattern.permute.xlu0 2
      %1769 = vperm.xlu0 %1768, %v1734
      %v1770 = vpop.permute.xlu0 %1769
      %v1772 = vlaneseq
      %v1773 = vshrl.u32 %v1772, 7
      %v1774 = vsub.s32 2, %v1773
      %v1775 = vrot.slane %v1468, %v1774
      %v1776 = vlaneseq
      %v1777 = vshrl.u32 %v1776, 7
      %v1778 = vsub.s32 2, %v1777
      %v1779 = vrot.slane %v1469, %v1778
      %v1780 = vmul.f32 %v1770, %v1775
      %v1781 = vmul.f32 %v1770, %v1779
      %v1782 = vadd.f32 %v1766, %v1780
      %v1783 = vadd.f32 %v1767, %v1781
      %1784 = vset.pattern.permute.xlu0 3
      %1785 = vperm.xlu0 %1784, %v1734
      %v1786 = vpop.permute.xlu0 %1785
      %v1788 = vlaneseq
      %v1789 = vshrl.u32 %v1788, 7
      %v1790 = vsub.s32 3, %v1789
      %v1791 = vrot.slane %v1468, %v1790
      %v1792 = vlaneseq
      %v1793 = vshrl.u32 %v1792, 7
      %v1794 = vsub.s32 3, %v1793
      %v1795 = vrot.slane %v1469, %v1794
      %v1796 = vmul.f32 %v1786, %v1791
      %v1797 = vmul.f32 %v1786, %v1795
      %v1798 = vadd.f32 %v1782, %v1796
      %v1799 = vadd.f32 %v1783, %v1797
      %v1800 = vld [vmem:[#allocation2] sm:$0xff]
      %v1801 = vld [vmem:[#allocation2 + $0x8] sm:$0xf]
      %v1804 = vcombine.high %v1800, %v1800
      %1805 = vrot.lane.b32.xlu0 %v1800, 110
      %v1806 = vpop.permute.xlu0 %1805
      %1807 = vrot.lane.b32.xlu0 %v1804, 110
      %v1808 = vpop.permute.xlu0 %1807
      %1809 = vrot.lane.b32.xlu0 %v1801, 110
      %v1810 = vpop.permute.xlu0 %1809
      %v1811 = vsel %vm672, %v1806, %v1808
      %v1812 = vsel %vm672, %v1808, %v1810
      %1815 = vrot.lane.b32.xlu0 %v1800, 112
      %v1816 = vpop.permute.xlu0 %1815
      %1817 = vrot.lane.b32.xlu0 %v1804, 112
      %v1818 = vpop.permute.xlu0 %1817
      %1819 = vrot.lane.b32.xlu0 %v1801, 112
      %v1820 = vpop.permute.xlu0 %1819
      %v1821 = vsel %vm683, %v1816, %v1818
      %v1822 = vsel %vm683, %v1818, %v1820
      %v1825 = vsel %vm298, %v1811, %v1821
      %v1826 = vsel %vm299, %v1812, %v1822
      %v1827 = vsel %vm326, %v1821, %v1811
      %v1828 = vsel %vm327, %v1822, %v1812
      %s1829 = scalar_lea.vmem %s4, 12
      %v1830 = vld [vmem:[%s1829] sm:$0xf]
      %1832 = vset.pattern.permute.xlu0 0
      %1833 = vperm.xlu0 %1832, %v1830
      %v1834 = vpop.permute.xlu0 %1833
      %v1836 = vlaneseq
      %v1837 = vshrl.u32 %v1836, 7
      %v1838 = vsub.s32 0, %v1837
      %v1839 = vrot.slane %v1825, %v1838
      %v1840 = vlaneseq
      %v1841 = vshrl.u32 %v1840, 7
      %v1842 = vsub.s32 0, %v1841
      %v1843 = vrot.slane %v1826, %v1842
      %v1844 = vmul.f32 %v1834, %v1839
      %v1845 = vmul.f32 %v1834, %v1843
      %v1846 = vadd.f32 %v1798, %v1844
      %v1847 = vadd.f32 %v1799, %v1845
      %1848 = vset.pattern.permute.xlu0 1
      %1849 = vperm.xlu0 %1848, %v1830
      %v1850 = vpop.permute.xlu0 %1849
      %v1852 = vlaneseq
      %v1853 = vshrl.u32 %v1852, 7
      %v1854 = vsub.s32 1, %v1853
      %v1855 = vrot.slane %v1825, %v1854
      %v1856 = vlaneseq
      %v1857 = vshrl.u32 %v1856, 7
      %v1858 = vsub.s32 1, %v1857
      %v1859 = vrot.slane %v1826, %v1858
      %v1860 = vmul.f32 %v1850, %v1855
      %v1861 = vmul.f32 %v1850, %v1859
      %v1862 = vadd.f32 %v1846, %v1860
      %v1863 = vadd.f32 %v1847, %v1861
      %1864 = vset.pattern.permute.xlu0 2
      %1865 = vperm.xlu0 %1864, %v1830
      %v1866 = vpop.permute.xlu0 %1865
      %v1868 = vlaneseq
      %v1869 = vshrl.u32 %v1868, 7
      %v1870 = vsub.s32 2, %v1869
      %v1871 = vrot.slane %v1825, %v1870
      %v1872 = vlaneseq
      %v1873 = vshrl.u32 %v1872, 7
      %v1874 = vsub.s32 2, %v1873
      %v1875 = vrot.slane %v1826, %v1874
      %v1876 = vmul.f32 %v1866, %v1871
      %v1877 = vmul.f32 %v1866, %v1875
      %v1878 = vadd.f32 %v1862, %v1876
      %v1879 = vadd.f32 %v1863, %v1877
      %1880 = vset.pattern.permute.xlu0 3
      %1881 = vperm.xlu0 %1880, %v1830
      %v1882 = vpop.permute.xlu0 %1881
      %v1884 = vlaneseq
      %v1885 = vshrl.u32 %v1884, 7
      %v1886 = vsub.s32 3, %v1885
      %v1887 = vrot.slane %v1825, %v1886
      %v1888 = vlaneseq
      %v1889 = vshrl.u32 %v1888, 7
      %v1890 = vsub.s32 3, %v1889
      %v1891 = vrot.slane %v1826, %v1890
      %v1892 = vmul.f32 %v1882, %v1887
      %v1893 = vmul.f32 %v1882, %v1891
      %v1894 = vadd.f32 %v1878, %v1892
      %v1895 = vadd.f32 %v1879, %v1893
      %s1896 = scalar_lea.vmem %s4, 16
      %v1897 = vld [vmem:[%s1896] sm:$0xf]
      %1899 = vset.pattern.permute.xlu0 0
      %1900 = vperm.xlu0 %1899, %v1897
      %v1901 = vpop.permute.xlu0 %1900
      %v1903 = vlaneseq
      %v1904 = vshrl.u32 %v1903, 7
      %v1905 = vsub.s32 0, %v1904
      %v1906 = vrot.slane %v1800, %v1905
      %v1907 = vlaneseq
      %v1908 = vshrl.u32 %v1907, 7
      %v1909 = vsub.s32 4, %v1908
      %v1910 = vrot.slane %v1800, %v1909
      %v1911 = vlaneseq
      %v1912 = vshrl.u32 %v1911, 7
      %v1913 = vsub.s32 0, %v1912
      %v1914 = vrot.slane %v1801, %v1913
      %v1918 = vlaneseq
      %v1919 = vshrl.u32 %v1918, 7
      %v1920 = vsub.s32 0, %v1919
      %v1921 = vrot.slane %v1906, %v1920
      %v1922 = vlaneseq
      %v1923 = vshrl.u32 %v1922, 7
      %v1924 = vsub.s32 0, %v1923
      %v1925 = vrot.slane %v1910, %v1924
      %v1926 = vlaneseq
      %v1927 = vshrl.u32 %v1926, 7
      %v1928 = vsub.s32 0, %v1927
      %v1929 = vrot.slane %v1914, %v1928
      %v1930 = vmul.f32 %v1901, %v1921
      %v1931 = vmul.f32 %v1901, %v1925
      %v1932 = vmul.f32 %v1901, %v1929
      %1936 = vrot.lane.b32.xlu0 %v1930, 111
      %v1937 = vpop.permute.xlu0 %1936
      %1938 = vrot.lane.b32.xlu0 %v1931, 111
      %v1939 = vpop.permute.xlu0 %1938
      %1940 = vrot.lane.b32.xlu0 %v1932, 111
      %v1941 = vpop.permute.xlu0 %1940
      %v1942 = vsel %vm805, %v1937, %v1939
      %v1943 = vsel %vm805, %v1939, %v1941
      %v1946 = vadd.f32 %v1894, %v1942
      %v1947 = vadd.f32 %v1895, %v1943
      %1948 = vset.pattern.permute.xlu0 1
      %1949 = vperm.xlu0 %1948, %v1897
      %v1950 = vpop.permute.xlu0 %1949
      %v1952 = vlaneseq
      %v1953 = vshrl.u32 %v1952, 7
      %v1954 = vsub.s32 1, %v1953
      %v1955 = vrot.slane %v1800, %v1954
      %v1956 = vlaneseq
      %v1957 = vshrl.u32 %v1956, 7
      %v1958 = vsub.s32 5, %v1957
      %v1959 = vrot.slane %v1800, %v1958
      %v1960 = vlaneseq
      %v1961 = vshrl.u32 %v1960, 7
      %v1962 = vsub.s32 1, %v1961
      %v1963 = vrot.slane %v1801, %v1962
      %v1967 = vlaneseq
      %v1968 = vshrl.u32 %v1967, 7
      %v1969 = vsub.s32 1, %v1968
      %v1970 = vrot.slane %v1955, %v1969
      %v1971 = vlaneseq
      %v1972 = vshrl.u32 %v1971, 7
      %v1973 = vsub.s32 1, %v1972
      %v1974 = vrot.slane %v1959, %v1973
      %v1975 = vlaneseq
      %v1976 = vshrl.u32 %v1975, 7
      %v1977 = vsub.s32 1, %v1976
      %v1978 = vrot.slane %v1963, %v1977
      %v1979 = vmul.f32 %v1950, %v1970
      %v1980 = vmul.f32 %v1950, %v1974
      %v1981 = vmul.f32 %v1950, %v1978
      %1985 = vrot.lane.b32.xlu0 %v1979, 111
      %v1986 = vpop.permute.xlu0 %1985
      %1987 = vrot.lane.b32.xlu0 %v1980, 111
      %v1988 = vpop.permute.xlu0 %1987
      %1989 = vrot.lane.b32.xlu0 %v1981, 111
      %v1990 = vpop.permute.xlu0 %1989
      %v1991 = vsel %vm805, %v1986, %v1988
      %v1992 = vsel %vm805, %v1988, %v1990
      %v1995 = vadd.f32 %v1946, %v1991
      %v1996 = vadd.f32 %v1947, %v1992
      %1997 = vset.pattern.permute.xlu0 2
      %1998 = vperm.xlu0 %1997, %v1897
      %v1999 = vpop.permute.xlu0 %1998
      %v2001 = vlaneseq
      %v2002 = vshrl.u32 %v2001, 7
      %v2003 = vsub.s32 2, %v2002
      %v2004 = vrot.slane %v1800, %v2003
      %v2005 = vlaneseq
      %v2006 = vshrl.u32 %v2005, 7
      %v2007 = vsub.s32 6, %v2006
      %v2008 = vrot.slane %v1800, %v2007
      %v2009 = vlaneseq
      %v2010 = vshrl.u32 %v2009, 7
      %v2011 = vsub.s32 2, %v2010
      %v2012 = vrot.slane %v1801, %v2011
      %v2016 = vlaneseq
      %v2017 = vshrl.u32 %v2016, 7
      %v2018 = vsub.s32 2, %v2017
      %v2019 = vrot.slane %v2004, %v2018
      %v2020 = vlaneseq
      %v2021 = vshrl.u32 %v2020, 7
      %v2022 = vsub.s32 2, %v2021
      %v2023 = vrot.slane %v2008, %v2022
      %v2024 = vlaneseq
      %v2025 = vshrl.u32 %v2024, 7
      %v2026 = vsub.s32 2, %v2025
      %v2027 = vrot.slane %v2012, %v2026
      %v2028 = vmul.f32 %v1999, %v2019
      %v2029 = vmul.f32 %v1999, %v2023
      %v2030 = vmul.f32 %v1999, %v2027
      %2034 = vrot.lane.b32.xlu0 %v2028, 111
      %v2035 = vpop.permute.xlu0 %2034
      %2036 = vrot.lane.b32.xlu0 %v2029, 111
      %v2037 = vpop.permute.xlu0 %2036
      %2038 = vrot.lane.b32.xlu0 %v2030, 111
      %v2039 = vpop.permute.xlu0 %2038
      %v2040 = vsel %vm805, %v2035, %v2037
      %v2041 = vsel %vm805, %v2037, %v2039
      %v2044 = vadd.f32 %v1995, %v2040
      %v2045 = vadd.f32 %v1996, %v2041
      %2046 = vset.pattern.permute.xlu0 3
      %2047 = vperm.xlu0 %2046, %v1897
      %v2048 = vpop.permute.xlu0 %2047
      %v2050 = vlaneseq
      %v2051 = vshrl.u32 %v2050, 7
      %v2052 = vsub.s32 3, %v2051
      %v2053 = vrot.slane %v1800, %v2052
      %v2054 = vlaneseq
      %v2055 = vshrl.u32 %v2054, 7
      %v2056 = vsub.s32 7, %v2055
      %v2057 = vrot.slane %v1800, %v2056
      %v2058 = vlaneseq
      %v2059 = vshrl.u32 %v2058, 7
      %v2060 = vsub.s32 3, %v2059
      %v2061 = vrot.slane %v1801, %v2060
      %v2065 = vlaneseq
      %v2066 = vshrl.u32 %v2065, 7
      %v2067 = vsub.s32 3, %v2066
      %v2068 = vrot.slane %v2053, %v2067
      %v2069 = vlaneseq
      %v2070 = vshrl.u32 %v2069, 7
      %v2071 = vsub.s32 3, %v2070
      %v2072 = vrot.slane %v2057, %v2071
      %v2073 = vlaneseq
      %v2074 = vshrl.u32 %v2073, 7
      %v2075 = vsub.s32 3, %v2074
      %v2076 = vrot.slane %v2061, %v2075
      %v2077 = vmul.f32 %v2048, %v2068
      %v2078 = vmul.f32 %v2048, %v2072
      %v2079 = vmul.f32 %v2048, %v2076
      %2083 = vrot.lane.b32.xlu0 %v2077, 111
      %v2084 = vpop.permute.xlu0 %2083
      %2085 = vrot.lane.b32.xlu0 %v2078, 111
      %v2086 = vpop.permute.xlu0 %2085
      %2087 = vrot.lane.b32.xlu0 %v2079, 111
      %v2088 = vpop.permute.xlu0 %2087
      %v2089 = vsel %vm805, %v2084, %v2086
      %v2090 = vsel %vm805, %v2086, %v2088
      %v2093 = vadd.f32 %v2044, %v2089
      %v2094 = vadd.f32 %v2045, %v2090
      %s2095 = scalar_lea.vmem %s4, 20
      %v2096 = vld [vmem:[%s2095] sm:$0xf]
      %2098 = vset.pattern.permute.xlu0 0
      %2099 = vperm.xlu0 %2098, %v2096
      %v2100 = vpop.permute.xlu0 %2099
      %v2102 = vlaneseq
      %v2103 = vshrl.u32 %v2102, 7
      %v2104 = vsub.s32 0, %v2103
      %v2105 = vrot.slane %v1827, %v2104
      %v2106 = vlaneseq
      %v2107 = vshrl.u32 %v2106, 7
      %v2108 = vsub.s32 0, %v2107
      %v2109 = vrot.slane %v1828, %v2108
      %v2110 = vmul.f32 %v2100, %v2105
      %v2111 = vmul.f32 %v2100, %v2109
      %v2112 = vadd.f32 %v2093, %v2110
      %v2113 = vadd.f32 %v2094, %v2111
      %2114 = vset.pattern.permute.xlu0 1
      %2115 = vperm.xlu0 %2114, %v2096
      %v2116 = vpop.permute.xlu0 %2115
      %v2118 = vlaneseq
      %v2119 = vshrl.u32 %v2118, 7
      %v2120 = vsub.s32 1, %v2119
      %v2121 = vrot.slane %v1827, %v2120
      %v2122 = vlaneseq
      %v2123 = vshrl.u32 %v2122, 7
      %v2124 = vsub.s32 1, %v2123
      %v2125 = vrot.slane %v1828, %v2124
      %v2126 = vmul.f32 %v2116, %v2121
      %v2127 = vmul.f32 %v2116, %v2125
      %v2128 = vadd.f32 %v2112, %v2126
      %v2129 = vadd.f32 %v2113, %v2127
      %2130 = vset.pattern.permute.xlu0 2
      %2131 = vperm.xlu0 %2130, %v2096
      %v2132 = vpop.permute.xlu0 %2131
      %v2134 = vlaneseq
      %v2135 = vshrl.u32 %v2134, 7
      %v2136 = vsub.s32 2, %v2135
      %v2137 = vrot.slane %v1827, %v2136
      %v2138 = vlaneseq
      %v2139 = vshrl.u32 %v2138, 7
      %v2140 = vsub.s32 2, %v2139
      %v2141 = vrot.slane %v1828, %v2140
      %v2142 = vmul.f32 %v2132, %v2137
      %v2143 = vmul.f32 %v2132, %v2141
      %v2144 = vadd.f32 %v2128, %v2142
      %v2145 = vadd.f32 %v2129, %v2143
      %2146 = vset.pattern.permute.xlu0 3
      %2147 = vperm.xlu0 %2146, %v2096
      %v2148 = vpop.permute.xlu0 %2147
      %v2150 = vlaneseq
      %v2151 = vshrl.u32 %v2150, 7
      %v2152 = vsub.s32 3, %v2151
      %v2153 = vrot.slane %v1827, %v2152
      %v2154 = vlaneseq
      %v2155 = vshrl.u32 %v2154, 7
      %v2156 = vsub.s32 3, %v2155
      %v2157 = vrot.slane %v1828, %v2156
      %v2158 = vmul.f32 %v2148, %v2153
      %v2159 = vmul.f32 %v2148, %v2157
      %v2160 = vadd.f32 %v2144, %v2158
      %v2161 = vadd.f32 %v2145, %v2159
      %v2162 = vld [vmem:[#allocation2] sm:$0xff]
      %v2163 = vld [vmem:[#allocation2 + $0x8] sm:$0xf]
      %v2166 = vcombine.high %v2162, %v2162
      %2167 = vrot.lane.b32.xlu0 %v2162, 94
      %v2168 = vpop.permute.xlu0 %2167
      %2169 = vrot.lane.b32.xlu0 %v2166, 94
      %v2170 = vpop.permute.xlu0 %2169
      %2171 = vrot.lane.b32.xlu0 %v2163, 94
      %v2172 = vpop.permute.xlu0 %2171
      %v2173 = vsel %vm1037, %v2168, %v2170
      %v2174 = vsel %vm1037, %v2170, %v2172
      %2177 = vrot.lane.b32.xlu0 %v2162, 96
      %v2178 = vpop.permute.xlu0 %2177
      %2179 = vrot.lane.b32.xlu0 %v2166, 96
      %v2180 = vpop.permute.xlu0 %2179
      %2181 = vrot.lane.b32.xlu0 %v2163, 96
      %v2182 = vpop.permute.xlu0 %2181
      %v2183 = vsel %vm1048, %v2178, %v2180
      %v2184 = vsel %vm1048, %v2180, %v2182
      %v2187 = vsel %vm298, %v2173, %v2183
      %v2188 = vsel %vm299, %v2174, %v2184
      %v2189 = vsel %vm326, %v2183, %v2173
      %v2190 = vsel %vm327, %v2184, %v2174
      %s2191 = scalar_lea.vmem %s4, 24
      %v2192 = vld [vmem:[%s2191] sm:$0xf]
      %2194 = vset.pattern.permute.xlu0 0
      %2195 = vperm.xlu0 %2194, %v2192
      %v2196 = vpop.permute.xlu0 %2195
      %v2198 = vlaneseq
      %v2199 = vshrl.u32 %v2198, 7
      %v2200 = vsub.s32 0, %v2199
      %v2201 = vrot.slane %v2187, %v2200
      %v2202 = vlaneseq
      %v2203 = vshrl.u32 %v2202, 7
      %v2204 = vsub.s32 0, %v2203
      %v2205 = vrot.slane %v2188, %v2204
      %v2206 = vmul.f32 %v2196, %v2201
      %v2207 = vmul.f32 %v2196, %v2205
      %v2208 = vadd.f32 %v2160, %v2206
      %v2209 = vadd.f32 %v2161, %v2207
      %2210 = vset.pattern.permute.xlu0 1
      %2211 = vperm.xlu0 %2210, %v2192
      %v2212 = vpop.permute.xlu0 %2211
      %v2214 = vlaneseq
      %v2215 = vshrl.u32 %v2214, 7
      %v2216 = vsub.s32 1, %v2215
      %v2217 = vrot.slane %v2187, %v2216
      %v2218 = vlaneseq
      %v2219 = vshrl.u32 %v2218, 7
      %v2220 = vsub.s32 1, %v2219
      %v2221 = vrot.slane %v2188, %v2220
      %v2222 = vmul.f32 %v2212, %v2217
      %v2223 = vmul.f32 %v2212, %v2221
      %v2224 = vadd.f32 %v2208, %v2222
      %v2225 = vadd.f32 %v2209, %v2223
      %2226 = vset.pattern.permute.xlu0 2
      %2227 = vperm.xlu0 %2226, %v2192
      %v2228 = vpop.permute.xlu0 %2227
      %v2230 = vlaneseq
      %v2231 = vshrl.u32 %v2230, 7
      %v2232 = vsub.s32 2, %v2231
      %v2233 = vrot.slane %v2187, %v2232
      %v2234 = vlaneseq
      %v2235 = vshrl.u32 %v2234, 7
      %v2236 = vsub.s32 2, %v2235
      %v2237 = vrot.slane %v2188, %v2236
      %v2238 = vmul.f32 %v2228, %v2233
      %v2239 = vmul.f32 %v2228, %v2237
      %v2240 = vadd.f32 %v2224, %v2238
      %v2241 = vadd.f32 %v2225, %v2239
      %2242 = vset.pattern.permute.xlu0 3
      %2243 = vperm.xlu0 %2242, %v2192
      %v2244 = vpop.permute.xlu0 %2243
      %v2246 = vlaneseq
      %v2247 = vshrl.u32 %v2246, 7
      %v2248 = vsub.s32 3, %v2247
      %v2249 = vrot.slane %v2187, %v2248
      %v2250 = vlaneseq
      %v2251 = vshrl.u32 %v2250, 7
      %v2252 = vsub.s32 3, %v2251
      %v2253 = vrot.slane %v2188, %v2252
      %v2254 = vmul.f32 %v2244, %v2249
      %v2255 = vmul.f32 %v2244, %v2253
      %v2256 = vadd.f32 %v2240, %v2254
      %v2257 = vadd.f32 %v2241, %v2255
      %s2258 = scalar_lea.vmem %s4, 28
      %v2259 = vld [vmem:[%s2258] sm:$0xf]
      %2261 = vset.pattern.permute.xlu0 0
      %2262 = vperm.xlu0 %2261, %v2259
      %v2263 = vpop.permute.xlu0 %2262
      %v2265 = vlaneseq
      %v2266 = vshrl.u32 %v2265, 7
      %v2267 = vsub.s32 0, %v2266
      %v2268 = vrot.slane %v2162, %v2267
      %v2269 = vlaneseq
      %v2270 = vshrl.u32 %v2269, 7
      %v2271 = vsub.s32 4, %v2270
      %v2272 = vrot.slane %v2162, %v2271
      %v2273 = vlaneseq
      %v2274 = vshrl.u32 %v2273, 7
      %v2275 = vsub.s32 0, %v2274
      %v2276 = vrot.slane %v2163, %v2275
      %v2280 = vlaneseq
      %v2281 = vshrl.u32 %v2280, 7
      %v2282 = vsub.s32 0, %v2281
      %v2283 = vrot.slane %v2268, %v2282
      %v2284 = vlaneseq
      %v2285 = vshrl.u32 %v2284, 7
      %v2286 = vsub.s32 0, %v2285
      %v2287 = vrot.slane %v2272, %v2286
      %v2288 = vlaneseq
      %v2289 = vshrl.u32 %v2288, 7
      %v2290 = vsub.s32 0, %v2289
      %v2291 = vrot.slane %v2276, %v2290
      %v2292 = vmul.f32 %v2263, %v2283
      %v2293 = vmul.f32 %v2263, %v2287
      %v2294 = vmul.f32 %v2263, %v2291
      %2298 = vrot.lane.b32.xlu0 %v2292, 95
      %v2299 = vpop.permute.xlu0 %2298
      %2300 = vrot.lane.b32.xlu0 %v2293, 95
      %v2301 = vpop.permute.xlu0 %2300
      %2302 = vrot.lane.b32.xlu0 %v2294, 95
      %v2303 = vpop.permute.xlu0 %2302
      %v2304 = vsel %vm1170, %v2299, %v2301
      %v2305 = vsel %vm1170, %v2301, %v2303
      %v2308 = vadd.f32 %v2256, %v2304
      %v2309 = vadd.f32 %v2257, %v2305
      %2310 = vset.pattern.permute.xlu0 1
      %2311 = vperm.xlu0 %2310, %v2259
      %v2312 = vpop.permute.xlu0 %2311
      %v2314 = vlaneseq
      %v2315 = vshrl.u32 %v2314, 7
      %v2316 = vsub.s32 1, %v2315
      %v2317 = vrot.slane %v2162, %v2316
      %v2318 = vlaneseq
      %v2319 = vshrl.u32 %v2318, 7
      %v2320 = vsub.s32 5, %v2319
      %v2321 = vrot.slane %v2162, %v2320
      %v2322 = vlaneseq
      %v2323 = vshrl.u32 %v2322, 7
      %v2324 = vsub.s32 1, %v2323
      %v2325 = vrot.slane %v2163, %v2324
      %v2329 = vlaneseq
      %v2330 = vshrl.u32 %v2329, 7
      %v2331 = vsub.s32 1, %v2330
      %v2332 = vrot.slane %v2317, %v2331
      %v2333 = vlaneseq
      %v2334 = vshrl.u32 %v2333, 7
      %v2335 = vsub.s32 1, %v2334
      %v2336 = vrot.slane %v2321, %v2335
      %v2337 = vlaneseq
      %v2338 = vshrl.u32 %v2337, 7
      %v2339 = vsub.s32 1, %v2338
      %v2340 = vrot.slane %v2325, %v2339
      %v2341 = vmul.f32 %v2312, %v2332
      %v2342 = vmul.f32 %v2312, %v2336
      %v2343 = vmul.f32 %v2312, %v2340
      %2347 = vrot.lane.b32.xlu0 %v2341, 95
      %v2348 = vpop.permute.xlu0 %2347
      %2349 = vrot.lane.b32.xlu0 %v2342, 95
      %v2350 = vpop.permute.xlu0 %2349
      %2351 = vrot.lane.b32.xlu0 %v2343, 95
      %v2352 = vpop.permute.xlu0 %2351
      %v2353 = vsel %vm1170, %v2348, %v2350
      %v2354 = vsel %vm1170, %v2350, %v2352
      %v2357 = vadd.f32 %v2308, %v2353
      %v2358 = vadd.f32 %v2309, %v2354
      %2359 = vset.pattern.permute.xlu0 2
      %2360 = vperm.xlu0 %2359, %v2259
      %v2361 = vpop.permute.xlu0 %2360
      %v2363 = vlaneseq
      %v2364 = vshrl.u32 %v2363, 7
      %v2365 = vsub.s32 2, %v2364
      %v2366 = vrot.slane %v2162, %v2365
      %v2367 = vlaneseq
      %v2368 = vshrl.u32 %v2367, 7
      %v2369 = vsub.s32 6, %v2368
      %v2370 = vrot.slane %v2162, %v2369
      %v2371 = vlaneseq
      %v2372 = vshrl.u32 %v2371, 7
      %v2373 = vsub.s32 2, %v2372
      %v2374 = vrot.slane %v2163, %v2373
      %v2378 = vlaneseq
      %v2379 = vshrl.u32 %v2378, 7
      %v2380 = vsub.s32 2, %v2379
      %v2381 = vrot.slane %v2366, %v2380
      %v2382 = vlaneseq
      %v2383 = vshrl.u32 %v2382, 7
      %v2384 = vsub.s32 2, %v2383
      %v2385 = vrot.slane %v2370, %v2384
      %v2386 = vlaneseq
      %v2387 = vshrl.u32 %v2386, 7
      %v2388 = vsub.s32 2, %v2387
      %v2389 = vrot.slane %v2374, %v2388
      %v2390 = vmul.f32 %v2361, %v2381
      %v2391 = vmul.f32 %v2361, %v2385
      %v2392 = vmul.f32 %v2361, %v2389
      %2396 = vrot.lane.b32.xlu0 %v2390, 95
      %v2397 = vpop.permute.xlu0 %2396
      %2398 = vrot.lane.b32.xlu0 %v2391, 95
      %v2399 = vpop.permute.xlu0 %2398
      %2400 = vrot.lane.b32.xlu0 %v2392, 95
      %v2401 = vpop.permute.xlu0 %2400
      %v2402 = vsel %vm1170, %v2397, %v2399
      %v2403 = vsel %vm1170, %v2399, %v2401
      %v2406 = vadd.f32 %v2357, %v2402
      %v2407 = vadd.f32 %v2358, %v2403
      %2408 = vset.pattern.permute.xlu0 3
      %2409 = vperm.xlu0 %2408, %v2259
      %v2410 = vpop.permute.xlu0 %2409
      %v2412 = vlaneseq
      %v2413 = vshrl.u32 %v2412, 7
      %v2414 = vsub.s32 3, %v2413
      %v2415 = vrot.slane %v2162, %v2414
      %v2416 = vlaneseq
      %v2417 = vshrl.u32 %v2416, 7
      %v2418 = vsub.s32 7, %v2417
      %v2419 = vrot.slane %v2162, %v2418
      %v2420 = vlaneseq
      %v2421 = vshrl.u32 %v2420, 7
      %v2422 = vsub.s32 3, %v2421
      %v2423 = vrot.slane %v2163, %v2422
      %v2427 = vlaneseq
      %v2428 = vshrl.u32 %v2427, 7
      %v2429 = vsub.s32 3, %v2428
      %v2430 = vrot.slane %v2415, %v2429
      %v2431 = vlaneseq
      %v2432 = vshrl.u32 %v2431, 7
      %v2433 = vsub.s32 3, %v2432
      %v2434 = vrot.slane %v2419, %v2433
      %v2435 = vlaneseq
      %v2436 = vshrl.u32 %v2435, 7
      %v2437 = vsub.s32 3, %v2436
      %v2438 = vrot.slane %v2423, %v2437
      %v2439 = vmul.f32 %v2410, %v2430
      %v2440 = vmul.f32 %v2410, %v2434
      %v2441 = vmul.f32 %v2410, %v2438
      %2445 = vrot.lane.b32.xlu0 %v2439, 95
      %v2446 = vpop.permute.xlu0 %2445
      %2447 = vrot.lane.b32.xlu0 %v2440, 95
      %v2448 = vpop.permute.xlu0 %2447
      %2449 = vrot.lane.b32.xlu0 %v2441, 95
      %v2450 = vpop.permute.xlu0 %2449
      %v2451 = vsel %vm1170, %v2446, %v2448
      %v2452 = vsel %vm1170, %v2448, %v2450
      %v2455 = vadd.f32 %v2406, %v2451
      %v2456 = vadd.f32 %v2407, %v2452
      %s2457 = scalar_lea.vmem %s4, 32
      %v2458 = vld [vmem:[%s2457] sm:$0xf]
      %2460 = vset.pattern.permute.xlu0 0
      %2461 = vperm.xlu0 %2460, %v2458
      %v2462 = vpop.permute.xlu0 %2461
      %v2464 = vlaneseq
      %v2465 = vshrl.u32 %v2464, 7
      %v2466 = vsub.s32 0, %v2465
      %v2467 = vrot.slane %v2189, %v2466
      %v2468 = vlaneseq
      %v2469 = vshrl.u32 %v2468, 7
      %v2470 = vsub.s32 0, %v2469
      %v2471 = vrot.slane %v2190, %v2470
      %v2472 = vmul.f32 %v2462, %v2467
      %v2473 = vmul.f32 %v2462, %v2471
      %v2474 = vadd.f32 %v2455, %v2472
      %v2475 = vadd.f32 %v2456, %v2473
      %2476 = vset.pattern.permute.xlu0 1
      %2477 = vperm.xlu0 %2476, %v2458
      %v2478 = vpop.permute.xlu0 %2477
      %v2480 = vlaneseq
      %v2481 = vshrl.u32 %v2480, 7
      %v2482 = vsub.s32 1, %v2481
      %v2483 = vrot.slane %v2189, %v2482
      %v2484 = vlaneseq
      %v2485 = vshrl.u32 %v2484, 7
      %v2486 = vsub.s32 1, %v2485
      %v2487 = vrot.slane %v2190, %v2486
      %v2488 = vmul.f32 %v2478, %v2483
      %v2489 = vmul.f32 %v2478, %v2487
      %v2490 = vadd.f32 %v2474, %v2488
      %v2491 = vadd.f32 %v2475, %v2489
      %2492 = vset.pattern.permute.xlu0 2
      %2493 = vperm.xlu0 %2492, %v2458
      %v2494 = vpop.permute.xlu0 %2493
      %v2496 = vlaneseq
      %v2497 = vshrl.u32 %v2496, 7
      %v2498 = vsub.s32 2, %v2497
      %v2499 = vrot.slane %v2189, %v2498
      %v2500 = vlaneseq
      %v2501 = vshrl.u32 %v2500, 7
      %v2502 = vsub.s32 2, %v2501
      %v2503 = vrot.slane %v2190, %v2502
      %v2504 = vmul.f32 %v2494, %v2499
      %v2505 = vmul.f32 %v2494, %v2503
      %v2506 = vadd.f32 %v2490, %v2504
      %v2507 = vadd.f32 %v2491, %v2505
      %2508 = vset.pattern.permute.xlu0 3
      %2509 = vperm.xlu0 %2508, %v2458
      %v2510 = vpop.permute.xlu0 %2509
      %v2512 = vlaneseq
      %v2513 = vshrl.u32 %v2512, 7
      %v2514 = vsub.s32 3, %v2513
      %v2515 = vrot.slane %v2189, %v2514
      %v2516 = vlaneseq
      %v2517 = vshrl.u32 %v2516, 7
      %v2518 = vsub.s32 3, %v2517
      %v2519 = vrot.slane %v2190, %v2518
      %v2520 = vmul.f32 %v2510, %v2515
      %v2521 = vmul.f32 %v2510, %v2519
      %v2522 = vadd.f32 %v2506, %v2520
      %v2523 = vadd.f32 %v2507, %v2521
      %v2524 = vld [vmem:[%s5] sm:$0xf]
      %2526 = vset.pattern.permute.xlu0 0
      %2527 = vperm.xlu0 %2526, %v2524
      %v2528 = vpop.permute.xlu0 %2527
      %v2530 = vadd.f32 %v2522, %v2528
      %v2531 = vadd.f32 %v2523, %v2528
      %v2532 = vsel %vm1399, %v2530, 0.0
      %v2533 = vsel %vm1399, %v2531, 0.0
      %v2534 = vadd.f32 %v2532, %v2533
      %2535 = vadd.xlane.f32.xlu0 %v2534
      %v2536 = vpop.xlane.xlu0 %2535
      %v2537 = vmul.f32 %v2530, %v2530
      %v2538 = vmul.f32 %v2531, %v2531
      %v2539 = vsel %vm1399, %v2537, 0.0
      %v2540 = vsel %vm1399, %v2538, 0.0
      %v2541 = vadd.f32 %v2539, %v2540
      %2542 = vadd.xlane.f32.xlu0 %v2541
      %v2543 = vpop.xlane.xlu0 %2542
      %v2544 = vmul.f32 %v2536, 0.00390625
      %v2545 = vmul.f32 %v2543, 0.00390625
      %v2546 = vmul.f32 %v2544, %v2544
      %v2547 = vsub.f32 %v2545, %v2546
      %v2548 = vmax.f32 %v2547, 0.0
      %v2549 = vsub.f32 %v2530, %v2544
      %v2550 = vsub.f32 %v2531, %v2544
      %v2551 = vadd.f32 %v2548, 1e-05
      %v2552 = vrsqrt.pop %v2551
      %v2553 = vmul.f32 %v2549, %v2552
      %v2554 = vmul.f32 %v2550, %v2552
      %v2555 = vmax.f32 %v2553, 0.0
      %v2556 = vmax.f32 %v2554, 0.0
      %v2559 = vcombine.low %v2555, %v2556
      %v2561 = vadd.f32 %v255, %v2559
      %2562 = vst [vmem:[%s251] sm:$0xff] %v2561
      %p2563 = scmp.lt.s32.totalorder %s17, 1
      %s2564 = scalar_select %p2563, %s17, 1
      %s2565 = smul.addr %s2564, 2
      %s2566 = smul.addr %s2565, 4
      %s2567 = scalar_lea.vmem %s6, %s2566
      // Predicated region
      $region45: #{residual_block.1} parent=43 // pred_check
        %p2568 = pneg %p166
      $region46: #{residual_block.1} parent=43 // pred_check_branch
        %2570 = sbr.rel (%p2568) target = $region48
      $region47: #{residual_block.1} parent=43 // pred_region
        _
      $region48: #{residual_block.1} parent=43 // pred_fallthru
        _
    $region44: #{residual_block.1} parent=5 // pred_fallthru
      _
    %p2571 = scmp.le.s32.totalorder 2, %s12
    // Predicated region
    $region49: #{residual_block.1} parent=5 // pred_check
      %p2572 = pneg %p2571
    $region50: #{residual_block.1} parent=5 // pred_check_branch
      %2574 = sbr.rel (%p2572) target = $region52
    $region51: #{residual_block.1} parent=5 // pred_region
      %s2575 = ssub.s32 %s12, 2
      // Predicated region
      $region53: #{residual_block.1} parent=51 // pred_check
        %p2576 = pneg %p172
      $region54: #{residual_block.1} parent=51 // pred_check_branch
        %2578 = sbr.rel (%p2576) target = $region56
      $region55: #{residual_block.1} parent=51 // pred_region
        %p2579 = scmp.lt.s32.totalorder %s18, 1
        %s2580 = scalar_select %p2579, %s18, 1
        %s2581 = smul.addr %s2580, 2
        %s2582 = smul.addr %s2581, 4
        %s2583 = scalar_lea.vmem %s6, %s2582
      $region56: #{residual_block.1} parent=51 // pred_fallthru
        _
    $region52: #{residual_block.1} parent=5 // pred_fallthru
      _
  $region6: #{residual_block.1} parent=0 // loop_footer
    %s16 = sadd.s32 1, %s12
  $region7: #{residual_block.1} parent=0 // loop_footer_branch
    %11 = sbr.rel target = $region3
  $region8: #{residual_block.1} parent=0 // loop_exit
    _

</llo_original>
